<compile_context>
chip_gen: v5e
topology: v5e:2x2
jax: 0.10.0
libtpu: 0.0.40
codegen_flags: <defaults>
</compile_context>

<pallas_src>
import functools

import jax
import jax.numpy as jnp
from jax.experimental import pallas as pl
from jax.experimental.pallas import tpu as pltpu

_BN_EPS = 1e-5


# ----------------------------------------------------------------------------
# In-kernel helpers (plain Python, traced inside the kernel bodies)
# ----------------------------------------------------------------------------
def _fill_padded(xpad_ref, x, pad, length):
    """Zero the halo scratch and place `x` (length rows) at row offset `pad`."""
    xpad_ref[...] = jnp.zeros_like(xpad_ref)
    xpad_ref[pl.ds(pad, length), :] = x.astype(xpad_ref.dtype)


def _conv_same(xpad_ref, w_ref, shift_ref, length, ksize):
    """'same' Conv1d + folded-BN shift + ReLU from a zero-padded VMEM scratch.

    xpad_ref:  (length + ksize - 1, Cin) f32 scratch (halo already zeroed)
    w_ref:     (ksize, Cin, Cout) bf16 BN-folded taps
    shift_ref: (1, Cout) f32 folded bias/BN shift
    Returns a f32 (length, Cout) value.  Fused im2col: ksize shifted matmuls,
    bf16 MXU operands, f32 accumulation.
    """
    cout = w_ref.shape[-1]
    acc = jnp.zeros((length, cout), jnp.float32)
    for t in range(ksize):
        lhs = xpad_ref[pl.ds(t, length), :].astype(jnp.bfloat16)
        acc = acc + jnp.dot(lhs, w_ref[t], preferred_element_type=jnp.float32)
    return jnp.maximum(acc + shift_ref[...], 0.0)


def _maxpool2(src_ref, out_len):
    """Fused MaxPool1d(2): pairwise max of even/odd rows via stride-2 loads."""
    a = src_ref[pl.ds(0, out_len, stride=2), :]
    b = src_ref[pl.ds(1, out_len, stride=2), :]
    return jnp.maximum(a, b)


# ----------------------------------------------------------------------------
# Stage 1: conv1(1->32,k5) + BN + ReLU + conv2(32->64,k5) + BN + ReLU + MaxPool(2)
# ----------------------------------------------------------------------------
def _stage1_kernel(x_ref, w1, s1, w2, s2, o_ref, x1p, h1p, h2s, *, L):
    _fill_padded(x1p, x_ref[...], 2, L)
    h1 = _conv_same(x1p, w1, s1, L, 5)               # (L, 32)  conv1+BN+ReLU (VMEM only)
    _fill_padded(h1p, h1, 2, L)
    h2s[...] = _conv_same(h1p, w2, s2, L, 5)         # (L, 64)  conv2+BN+ReLU (VMEM only)
    o_ref[...] = _maxpool2(h2s, L // 2).astype(o_ref.dtype)   # fused MaxPool1d(2)


def _stage1(prep, x):
    """x: (N, L, 8) f32 channels-last (Cin zero-padded 1->8). -> (N, L/2, 64) bf16."""
    N, L, cin = x.shape
    return pl.pallas_call(
        functools.partial(_stage1_kernel, L=L),
        out_shape=jax.ShapeDtypeStruct((N, L // 2, 64), jnp.bfloat16),
        grid=(N,),
        in_specs=[
            pl.BlockSpec((None, L, cin), lambda b: (b, 0, 0)),   # per-batch slab
            pl.BlockSpec((5, cin, 32), lambda b: (0, 0, 0)),     # resident weights
            pl.BlockSpec((1, 32), lambda b: (0, 0)),
            pl.BlockSpec((5, 32, 64), lambda b: (0, 0, 0)),
            pl.BlockSpec((1, 64), lambda b: (0, 0)),
        ],
        out_specs=pl.BlockSpec((None, L // 2, 64), lambda b: (b, 0, 0)),
        scratch_shapes=[
            pltpu.VMEM((L + 4, cin), jnp.float32),   # padded conv1 input
            pltpu.VMEM((L + 4, 32), jnp.float32),    # padded conv2 input
            pltpu.VMEM((L, 64), jnp.float32),        # pre-pool conv2 output
        ],
        compiler_params=pltpu.CompilerParams(dimension_semantics=("parallel",)),
    )(x, prep["w1"], prep["s1"], prep["w2"], prep["s2"])


# ----------------------------------------------------------------------------
# Stage 2: conv3 + conv4 + conv5 (all k3, BN+ReLU) + MaxPool(2)
# (Dropout(0.3) after conv3 is identity in eval mode.)
# ----------------------------------------------------------------------------
def _stage2_kernel(x_ref, w3, s3, w4, s4, w5, s5, o_ref, xp, h3p, h4p, h5s, *, L2):
    _fill_padded(xp, x_ref[...], 1, L2)
    h3 = _conv_same(xp, w3, s3, L2, 3)               # (L2, 128) conv3+BN+ReLU
    _fill_padded(h3p, h3, 1, L2)
    h4 = _conv_same(h3p, w4, s4, L2, 3)              # (L2, 128) conv4+BN+ReLU
    _fill_padded(h4p, h4, 1, L2)
    h5s[...] = _conv_same(h4p, w5, s5, L2, 3)        # (L2, 128) conv5+BN+ReLU
    o_ref[...] = _maxpool2(h5s, L2 // 2).astype(o_ref.dtype)  # fused MaxPool1d(2)


def _stage2(prep, x):
    """x: (N, L/2, 64) bf16 -> (N, L/4, 128) bf16."""
    N, L2, cin = x.shape
    return pl.pallas_call(
        functools.partial(_stage2_kernel, L2=L2),
        out_shape=jax.ShapeDtypeStruct((N, L2 // 2, 128), jnp.bfloat16),
        grid=(N,),
        in_specs=[
            pl.BlockSpec((None, L2, cin), lambda b: (b, 0, 0)),
            pl.BlockSpec((3, cin, 128), lambda b: (0, 0, 0)),
            pl.BlockSpec((1, 128), lambda b: (0, 0)),
            pl.BlockSpec((3, 128, 128), lambda b: (0, 0, 0)),
            pl.BlockSpec((1, 128), lambda b: (0, 0)),
            pl.BlockSpec((3, 128, 128), lambda b: (0, 0, 0)),
            pl.BlockSpec((1, 128), lambda b: (0, 0)),
        ],
        out_specs=pl.BlockSpec((None, L2 // 2, 128), lambda b: (b, 0, 0)),
        scratch_shapes=[
            pltpu.VMEM((L2 + 2, cin), jnp.float32),
            pltpu.VMEM((L2 + 2, 128), jnp.float32),
            pltpu.VMEM((L2 + 2, 128), jnp.float32),
            pltpu.VMEM((L2, 128), jnp.float32),      # pre-pool conv5 output
        ],
        compiler_params=pltpu.CompilerParams(dimension_semantics=("parallel",)),
    )(x, prep["w3"], prep["s3"], prep["w4"], prep["s4"], prep["w5"], prep["s5"])


# ----------------------------------------------------------------------------
# Head: conv6(128->256,k3)+BN+ReLU + AdaptiveAvgPool1d(1) + Flatten
#       + fc1->ReLU->fc2->ReLU->fc3, all in one kernel per batch element.
# (Dropout(0.5)/(0.25) are identity in eval mode.)
# ----------------------------------------------------------------------------
def _head_kernel(x_ref, w6, s6, wf1, bf1, wf2, bf2, wf3, bf3, o_ref, xp, *, L4):
    _fill_padded(xp, x_ref[...], 1, L4)
    h6 = _conv_same(xp, w6, s6, L4, 3)               # (L4, 256) conv6+BN+ReLU
    pooled = jnp.mean(h6, axis=0, keepdims=True)     # (1, 256)  AdaptiveAvgPool1d(1)+Flatten
    h = jnp.dot(pooled, wf1[...], preferred_element_type=jnp.float32) + bf1[...]
    h = jnp.maximum(h, 0.0)
    h = jnp.dot(h, wf2[...], preferred_element_type=jnp.float32) + bf2[...]
    h = jnp.maximum(h, 0.0)
    y = jnp.dot(h, wf3[...], preferred_element_type=jnp.float32) + bf3[...]
    o_ref[...] = y.astype(o_ref.dtype)


def _head(prep, x):
    """x: (N, L/4, 128) bf16 -> (N, 1, 128) f32 (lane-padded logits)."""
    N, L4, cin = x.shape
    return pl.pallas_call(
        functools.partial(_head_kernel, L4=L4),
        out_shape=jax.ShapeDtypeStruct((N, 1, 128), jnp.float32),
        grid=(N,),
        in_specs=[
            pl.BlockSpec((None, L4, cin), lambda b: (b, 0, 0)),
            pl.BlockSpec((3, 128, 256), lambda b: (0, 0, 0)),
            pl.BlockSpec((1, 256), lambda b: (0, 0)),
            pl.BlockSpec((256, 128), lambda b: (0, 0)),
            pl.BlockSpec((1, 128), lambda b: (0, 0)),
            pl.BlockSpec((128, 64), lambda b: (0, 0)),
            pl.BlockSpec((1, 64), lambda b: (0, 0)),
            pl.BlockSpec((64, 128), lambda b: (0, 0)),
            pl.BlockSpec((1, 128), lambda b: (0, 0)),
        ],
        out_specs=pl.BlockSpec((None, 1, 128), lambda b: (b, 0, 0)),
        scratch_shapes=[pltpu.VMEM((L4 + 2, 128), jnp.float32)],
        compiler_params=pltpu.CompilerParams(dimension_semantics=("parallel",)),
    )(x, prep["w6"], prep["s6"], prep["wf1"], prep["bf1"],
      prep["wf2"], prep["bf2"], prep["wf3"], prep["bf3"])


# ----------------------------------------------------------------------------
# One-time weight preprocessing (hoisted out of the jitted forward)
# ----------------------------------------------------------------------------
def _fold_conv(p, cin_pad=0):
    """Fold eval-mode BatchNorm1d into the conv:  y = conv(x; w*s) + shift."""
    w, b = p["w"], p["b"]                                        # (Cout, Cin, K), (Cout,)
    s = p["bn_gamma"] * jax.lax.rsqrt(p["bn_var"] + _BN_EPS)     # (Cout,)
    shift = ((b - p["bn_mean"]) * s + p["bn_beta"]).reshape(1, -1).astype(jnp.float32)
    w_taps = jnp.transpose(w, (2, 1, 0)) * s[None, None, :]      # (K, Cin, Cout)
    if cin_pad and w_taps.shape[1] < cin_pad:                    # conv1: Cin 1 -> 8
        w_taps = jnp.pad(w_taps, ((0, 0), (0, cin_pad - w_taps.shape[1]), (0, 0)))
    return w_taps.astype(jnp.bfloat16), shift


def prepare_params(params, num_classes=3):
    w1, s1 = _fold_conv(params["conv1"], cin_pad=8)
    w2, s2 = _fold_conv(params["conv2"])
    w3, s3 = _fold_conv(params["conv3"])
    w4, s4 = _fold_conv(params["conv4"])
    w5, s5 = _fold_conv(params["conv5"])
    w6, s6 = _fold_conv(params["conv6"])
    wf1 = params["fc1"]["w"].T.astype(jnp.float32)
    bf1 = params["fc1"]["b"].reshape(1, -1).astype(jnp.float32)
    wf2 = params["fc2"]["w"].T.astype(jnp.float32)
    bf2 = params["fc2"]["b"].reshape(1, -1).astype(jnp.float32)
    npad = 128                                                   # lane-dense fc3 output
    w3t = params["fc3"]["w"].T.astype(jnp.float32)               # (64, num_classes)
    wf3 = jnp.zeros((w3t.shape[0], npad), jnp.float32).at[:, :num_classes].set(w3t)
    bf3 = jnp.zeros((1, npad), jnp.float32).at[0, :num_classes].set(
        params["fc3"]["b"].astype(jnp.float32))
    return {"w1": w1, "s1": s1, "w2": w2, "s2": s2, "w3": w3, "s3": s3,
            "w4": w4, "s4": s4, "w5": w5, "s5": s5, "w6": w6, "s6": s6,
            "wf1": wf1, "bf1": bf1, "wf2": wf2, "bf2": bf2, "wf3": wf3, "bf3": bf3}


# ----------------------------------------------------------------------------
# Synthetic parameters (deterministic)
# ----------------------------------------------------------------------------
def _conv_params(key, cin, cout, ksize):
    k1, k2, k3, k4, k5, k6 = jax.random.split(key, 6)
    return {
        "w": 0.1 * jax.random.normal(k1, (cout, cin, ksize), jnp.float32),
        "b": 0.05 * jax.random.normal(k2, (cout,), jnp.float32),
        "bn_gamma": 0.5 + jax.random.uniform(k3, (cout,), jnp.float32),
        "bn_beta": 0.05 * jax.random.normal(k4, (cout,), jnp.float32),
        "bn_mean": 0.05 * jax.random.normal(k5, (cout,), jnp.float32),
        "bn_var": 0.5 + jax.random.uniform(k6, (cout,), jnp.float32),
    }


def _linear_params(key, fin, fout):
    k1, k2 = jax.random.split(key)
    return {"w": 0.1 * jax.random.normal(k1, (fout, fin), jnp.float32),
            "b": 0.05 * jax.random.normal(k2, (fout,), jnp.float32)}


def init_params(key, num_classes=3):
    keys = jax.random.split(key, 10)
    return {
        "conv1": _conv_params(keys[0], 1, 32, 5),
        "conv2": _conv_params(keys[1], 32, 64, 5),
        "conv3": _conv_params(keys[2], 64, 128, 3),
        "conv4": _conv_params(keys[3], 128, 128, 3),
        "conv5": _conv_params(keys[4], 128, 128, 3),
        "conv6": _conv_params(keys[5], 128, 256, 3),
        "fc1": _linear_params(keys[6], 256, 128),
        "fc2": _linear_params(keys[7], 128, 64),
        "fc3": _linear_params(keys[8], 64, num_classes),
    }


# ----------------------------------------------------------------------------
# Forward pass (eval-mode semantics: Dropout == identity, BN uses running stats)
# ----------------------------------------------------------------------------
def artifacts_detection_forward(prep, x, *, num_classes=3):
    """x: (N, 1, L) channels-first, as in the PyTorch module."""
    N, C, L = x.shape
    assert C == 1 and L % 4 == 0, "length must be divisible by 4 (two MaxPool1d(2))"
    # TODO(synk): support lengths not divisible by 4 (PyTorch MaxPool1d floors).
    h = jnp.transpose(x, (0, 2, 1)).astype(jnp.float32)    # (N, L, 1) channels-last
    h = jnp.pad(h, ((0, 0), (0, 0), (0, 7)))               # Cin 1 -> 8, once, tiny
    h = _stage1(prep, h)                                   # (N, L/2, 64)  bf16
    h = _stage2(prep, h)                                   # (N, L/4, 128) bf16
    logits = _head(prep, h)                                # (N, 1, 128)   f32
    return logits[:, 0, :num_classes]


if __name__ == "__main__":
    key = jax.random.PRNGKey(0)
    pkey, xkey1, xkey2 = jax.random.split(key, 3)
    params = init_params(pkey, num_classes=3)
    prep = prepare_params(params, num_classes=3)           # hoisted, runs once

    fwd = jax.jit(functools.partial(artifacts_detection_forward, num_classes=3))

    # Small shape consistent with the module: (batch=2, channels=1, length=16).
    x_small = jax.random.normal(xkey1, (2, 1, 16), jnp.float32)
    out_small = fwd(prep, x_small)
    jax.block_until_ready(out_small)
    assert out_small.shape == (2, 3)

    # Nominal model length (input_length=180) to exercise the real-size path.
    x_nom = jax.random.normal(xkey2, (2, 1, 180), jnp.float32)
    out_nom = fwd(prep, x_nom)
    jax.block_until_ready(out_nom)
    assert out_nom.shape == (2, 3)

    print("KERNEL_OK")
</pallas_src>

<mosaic_0001>
module attributes {stable_mosaic.version = 11 : i64} {
  func.func @_stage1_kernel(%arg0: i32, %arg1: memref<1x16x8xf32, #tpu.memory_space<vmem>>, %arg2: memref<5x8x32xbf16, #tpu.memory_space<vmem>>, %arg3: memref<1x32xf32, #tpu.memory_space<vmem>>, %arg4: memref<5x32x64xbf16, #tpu.memory_space<vmem>>, %arg5: memref<1x64xf32, #tpu.memory_space<vmem>>, %arg6: memref<1x8x64xbf16, #tpu.memory_space<vmem>>, %arg7: memref<20x8xf32, #tpu.memory_space<vmem>>, %arg8: memref<20x32xf32, #tpu.memory_space<vmem>>, %arg9: memref<16x64xf32, #tpu.memory_space<vmem>>) attributes {dimension_semantics = [#tpu.dimension_semantics<parallel>], iteration_bounds = array<i64: 2>, scalar_prefetch = 0 : i64, scratch_operands = 3 : i64, tpu.core_type = #tpu.core_type<tc>, window_params = [{transform_indices = @transform_0, window_bounds = array<i64: 1, 16, 8>}, {pipeline_mode = #tpu.pipeline_mode<synchronous>, transform_indices = @transform_1, window_bounds = array<i64: 5, 8, 32>}, {pipeline_mode = #tpu.pipeline_mode<synchronous>, transform_indices = @transform_2, window_bounds = array<i64: 1, 32>}, {pipeline_mode = #tpu.pipeline_mode<synchronous>, transform_indices = @transform_3, window_bounds = array<i64: 5, 32, 64>}, {pipeline_mode = #tpu.pipeline_mode<synchronous>, transform_indices = @transform_4, window_bounds = array<i64: 1, 64>}, {transform_indices = @transform_5, window_bounds = array<i64: 1, 8, 64>}]} {
    %c0 = arith.constant 0 : index
    %c0_0 = arith.constant 0 : index
    %c0_1 = arith.constant 0 : index
    %0 = vector.load %arg1[%c0, %c0_0, %c0_1] : memref<1x16x8xf32, #tpu.memory_space<vmem>>, vector<1x16x8xf32>
    %1 = vector.shape_cast %0 : vector<1x16x8xf32> to vector<16x8xf32>
    %cst = arith.constant 0.000000e+00 : f32
    %2 = vector.broadcast %cst : f32 to vector<20x8xf32>
    %c0_2 = arith.constant 0 : index
    %c0_3 = arith.constant 0 : index
    %3 = vector.load %arg7[%c0_2, %c0_3] : memref<20x8xf32, #tpu.memory_space<vmem>>, vector<20x8xf32>
    tpu.vector_store %arg7[%c0_2, %c0_3], %2 {strides = array<i32>} : memref<20x8xf32, #tpu.memory_space<vmem>>, vector<20x8xf32>,
    %c2 = arith.constant 2 : index
    %c0_4 = arith.constant 0 : index
    %4 = vector.load %arg7[%c2, %c0_4] : memref<20x8xf32, #tpu.memory_space<vmem>>, vector<16x8xf32>
    tpu.vector_store %arg7[%c2, %c0_4], %1 {strides = array<i32>} : memref<20x8xf32, #tpu.memory_space<vmem>>, vector<16x8xf32>,
    %cst_5 = arith.constant 0.000000e+00 : f32
    %5 = vector.broadcast %cst_5 : f32 to vector<16x32xf32>
    %c0_6 = arith.constant 0 : index
    %c0_7 = arith.constant 0 : index
    %6 = vector.load %arg7[%c0_6, %c0_7] : memref<20x8xf32, #tpu.memory_space<vmem>>, vector<16x8xf32>
    %7 = arith.truncf %6 : vector<16x8xf32> to vector<16x8xbf16>
    %c0_8 = arith.constant 0 : index
    %c0_9 = arith.constant 0 : index
    %c0_10 = arith.constant 0 : index
    %8 = vector.load %arg2[%c0_8, %c0_9, %c0_10] : memref<5x8x32xbf16, #tpu.memory_space<vmem>>, vector<1x8x32xbf16>
    %9 = vector.shape_cast %8 : vector<1x8x32xbf16> to vector<8x32xbf16>
    %cst_11 = arith.constant dense<0.000000e+00> : vector<16x32xf32>
    %10 = tpu.matmul %7, %9, %cst_11 {dimension_numbers = #tpu.dot_dimension_numbers<[1], [0], [0], [1], [0, 0, 1, 1], [], []>} : vector<16x8xbf16>, vector<8x32xbf16>, vector<16x32xf32> -> vector<16x32xf32>
    %11 = arith.addf %5, %10 : vector<16x32xf32>
    %c1 = arith.constant 1 : index
    %c0_12 = arith.constant 0 : index
    %12 = vector.load %arg7[%c1, %c0_12] : memref<20x8xf32, #tpu.memory_space<vmem>>, vector<16x8xf32>
    %13 = arith.truncf %12 : vector<16x8xf32> to vector<16x8xbf16>
    %c1_13 = arith.constant 1 : index
    %c0_14 = arith.constant 0 : index
    %c0_15 = arith.constant 0 : index
    %14 = vector.load %arg2[%c1_13, %c0_14, %c0_15] : memref<5x8x32xbf16, #tpu.memory_space<vmem>>, vector<1x8x32xbf16>
    %15 = vector.shape_cast %14 : vector<1x8x32xbf16> to vector<8x32xbf16>
    %cst_16 = arith.constant dense<0.000000e+00> : vector<16x32xf32>
    %16 = tpu.matmul %13, %15, %cst_16 {dimension_numbers = #tpu.dot_dimension_numbers<[1], [0], [0], [1], [0, 0, 1, 1], [], []>} : vector<16x8xbf16>, vector<8x32xbf16>, vector<16x32xf32> -> vector<16x32xf32>
    %17 = arith.addf %11, %16 : vector<16x32xf32>
    %c2_17 = arith.constant 2 : index
    %c0_18 = arith.constant 0 : index
    %18 = vector.load %arg7[%c2_17, %c0_18] : memref<20x8xf32, #tpu.memory_space<vmem>>, vector<16x8xf32>
    %19 = arith.truncf %18 : vector<16x8xf32> to vector<16x8xbf16>
    %c2_19 = arith.constant 2 : index
    %c0_20 = arith.constant 0 : index
    %c0_21 = arith.constant 0 : index
    %20 = vector.load %arg2[%c2_19, %c0_20, %c0_21] : memref<5x8x32xbf16, #tpu.memory_space<vmem>>, vector<1x8x32xbf16>
    %21 = vector.shape_cast %20 : vector<1x8x32xbf16> to vector<8x32xbf16>
    %cst_22 = arith.constant dense<0.000000e+00> : vector<16x32xf32>
    %22 = tpu.matmul %19, %21, %cst_22 {dimension_numbers = #tpu.dot_dimension_numbers<[1], [0], [0], [1], [0, 0, 1, 1], [], []>} : vector<16x8xbf16>, vector<8x32xbf16>, vector<16x32xf32> -> vector<16x32xf32>
    %23 = arith.addf %17, %22 : vector<16x32xf32>
    %c3 = arith.constant 3 : index
    %c0_23 = arith.constant 0 : index
    %24 = vector.load %arg7[%c3, %c0_23] : memref<20x8xf32, #tpu.memory_space<vmem>>, vector<16x8xf32>
    %25 = arith.truncf %24 : vector<16x8xf32> to vector<16x8xbf16>
    %c3_24 = arith.constant 3 : index
    %c0_25 = arith.constant 0 : index
    %c0_26 = arith.constant 0 : index
    %26 = vector.load %arg2[%c3_24, %c0_25, %c0_26] : memref<5x8x32xbf16, #tpu.memory_space<vmem>>, vector<1x8x32xbf16>
    %27 = vector.shape_cast %26 : vector<1x8x32xbf16> to vector<8x32xbf16>
    %cst_27 = arith.constant dense<0.000000e+00> : vector<16x32xf32>
    %28 = tpu.matmul %25, %27, %cst_27 {dimension_numbers = #tpu.dot_dimension_numbers<[1], [0], [0], [1], [0, 0, 1, 1], [], []>} : vector<16x8xbf16>, vector<8x32xbf16>, vector<16x32xf32> -> vector<16x32xf32>
    %29 = arith.addf %23, %28 : vector<16x32xf32>
    %c4 = arith.constant 4 : index
    %c0_28 = arith.constant 0 : index
    %30 = vector.load %arg7[%c4, %c0_28] : memref<20x8xf32, #tpu.memory_space<vmem>>, vector<16x8xf32>
    %31 = arith.truncf %30 : vector<16x8xf32> to vector<16x8xbf16>
    %c4_29 = arith.constant 4 : index
    %c0_30 = arith.constant 0 : index
    %c0_31 = arith.constant 0 : index
    %32 = vector.load %arg2[%c4_29, %c0_30, %c0_31] : memref<5x8x32xbf16, #tpu.memory_space<vmem>>, vector<1x8x32xbf16>
    %33 = vector.shape_cast %32 : vector<1x8x32xbf16> to vector<8x32xbf16>
    %cst_32 = arith.constant dense<0.000000e+00> : vector<16x32xf32>
    %34 = tpu.matmul %31, %33, %cst_32 {dimension_numbers = #tpu.dot_dimension_numbers<[1], [0], [0], [1], [0, 0, 1, 1], [], []>} : vector<16x8xbf16>, vector<8x32xbf16>, vector<16x32xf32> -> vector<16x32xf32>
    %35 = arith.addf %29, %34 : vector<16x32xf32>
    %c0_33 = arith.constant 0 : index
    %c0_34 = arith.constant 0 : index
    %36 = vector.load %arg3[%c0_33, %c0_34] : memref<1x32xf32, #tpu.memory_space<vmem>>, vector<1x32xf32>
    %37 = vector.broadcast %36 : vector<1x32xf32> to vector<16x32xf32>
    %38 = arith.addf %35, %37 : vector<16x32xf32>
    %cst_35 = arith.constant 0.000000e+00 : f32
    %39 = vector.broadcast %cst_35 : f32 to vector<16x32xf32>
    %40 = arith.maximumf %38, %39 : vector<16x32xf32>
    %cst_36 = arith.constant 0.000000e+00 : f32
    %41 = vector.broadcast %cst_36 : f32 to vector<20x32xf32>
    %c0_37 = arith.constant 0 : index
    %c0_38 = arith.constant 0 : index
    %42 = vector.load %arg8[%c0_37, %c0_38] : memref<20x32xf32, #tpu.memory_space<vmem>>, vector<20x32xf32>
    tpu.vector_store %arg8[%c0_37, %c0_38], %41 {strides = array<i32>} : memref<20x32xf32, #tpu.memory_space<vmem>>, vector<20x32xf32>,
    %c2_39 = arith.constant 2 : index
    %c0_40 = arith.constant 0 : index
    %43 = vector.load %arg8[%c2_39, %c0_40] : memref<20x32xf32, #tpu.memory_space<vmem>>, vector<16x32xf32>
    tpu.vector_store %arg8[%c2_39, %c0_40], %40 {strides = array<i32>} : memref<20x32xf32, #tpu.memory_space<vmem>>, vector<16x32xf32>,
    %cst_41 = arith.constant 0.000000e+00 : f32
    %44 = vector.broadcast %cst_41 : f32 to vector<16x64xf32>
    %c0_42 = arith.constant 0 : index
    %c0_43 = arith.constant 0 : index
    %45 = vector.load %arg8[%c0_42, %c0_43] : memref<20x32xf32, #tpu.memory_space<vmem>>, vector<16x32xf32>
    %46 = arith.truncf %45 : vector<16x32xf32> to vector<16x32xbf16>
    %c0_44 = arith.constant 0 : index
    %c0_45 = arith.constant 0 : index
    %c0_46 = arith.constant 0 : index
    %47 = vector.load %arg4[%c0_44, %c0_45, %c0_46] : memref<5x32x64xbf16, #tpu.memory_space<vmem>>, vector<1x32x64xbf16>
    %48 = vector.shape_cast %47 : vector<1x32x64xbf16> to vector<32x64xbf16>
    %cst_47 = arith.constant dense<0.000000e+00> : vector<16x64xf32>
    %49 = tpu.matmul %46, %48, %cst_47 {dimension_numbers = #tpu.dot_dimension_numbers<[1], [0], [0], [1], [0, 0, 1, 1], [], []>} : vector<16x32xbf16>, vector<32x64xbf16>, vector<16x64xf32> -> vector<16x64xf32>
    %50 = arith.addf %44, %49 : vector<16x64xf32>
    %c1_48 = arith.constant 1 : index
    %c0_49 = arith.constant 0 : index
    %51 = vector.load %arg8[%c1_48, %c0_49] : memref<20x32xf32, #tpu.memory_space<vmem>>, vector<16x32xf32>
    %52 = arith.truncf %51 : vector<16x32xf32> to vector<16x32xbf16>
    %c1_50 = arith.constant 1 : index
    %c0_51 = arith.constant 0 : index
    %c0_52 = arith.constant 0 : index
    %53 = vector.load %arg4[%c1_50, %c0_51, %c0_52] : memref<5x32x64xbf16, #tpu.memory_space<vmem>>, vector<1x32x64xbf16>
    %54 = vector.shape_cast %53 : vector<1x32x64xbf16> to vector<32x64xbf16>
    %cst_53 = arith.constant dense<0.000000e+00> : vector<16x64xf32>
    %55 = tpu.matmul %52, %54, %cst_53 {dimension_numbers = #tpu.dot_dimension_numbers<[1], [0], [0], [1], [0, 0, 1, 1], [], []>} : vector<16x32xbf16>, vector<32x64xbf16>, vector<16x64xf32> -> vector<16x64xf32>
    %56 = arith.addf %50, %55 : vector<16x64xf32>
    %c2_54 = arith.constant 2 : index
    %c0_55 = arith.constant 0 : index
    %57 = vector.load %arg8[%c2_54, %c0_55] : memref<20x32xf32, #tpu.memory_space<vmem>>, vector<16x32xf32>
    %58 = arith.truncf %57 : vector<16x32xf32> to vector<16x32xbf16>
    %c2_56 = arith.constant 2 : index
    %c0_57 = arith.constant 0 : index
    %c0_58 = arith.constant 0 : index
    %59 = vector.load %arg4[%c2_56, %c0_57, %c0_58] : memref<5x32x64xbf16, #tpu.memory_space<vmem>>, vector<1x32x64xbf16>
    %60 = vector.shape_cast %59 : vector<1x32x64xbf16> to vector<32x64xbf16>
    %cst_59 = arith.constant dense<0.000000e+00> : vector<16x64xf32>
    %61 = tpu.matmul %58, %60, %cst_59 {dimension_numbers = #tpu.dot_dimension_numbers<[1], [0], [0], [1], [0, 0, 1, 1], [], []>} : vector<16x32xbf16>, vector<32x64xbf16>, vector<16x64xf32> -> vector<16x64xf32>
    %62 = arith.addf %56, %61 : vector<16x64xf32>
    %c3_60 = arith.constant 3 : index
    %c0_61 = arith.constant 0 : index
    %63 = vector.load %arg8[%c3_60, %c0_61] : memref<20x32xf32, #tpu.memory_space<vmem>>, vector<16x32xf32>
    %64 = arith.truncf %63 : vector<16x32xf32> to vector<16x32xbf16>
    %c3_62 = arith.constant 3 : index
    %c0_63 = arith.constant 0 : index
    %c0_64 = arith.constant 0 : index
    %65 = vector.load %arg4[%c3_62, %c0_63, %c0_64] : memref<5x32x64xbf16, #tpu.memory_space<vmem>>, vector<1x32x64xbf16>
    %66 = vector.shape_cast %65 : vector<1x32x64xbf16> to vector<32x64xbf16>
    %cst_65 = arith.constant dense<0.000000e+00> : vector<16x64xf32>
    %67 = tpu.matmul %64, %66, %cst_65 {dimension_numbers = #tpu.dot_dimension_numbers<[1], [0], [0], [1], [0, 0, 1, 1], [], []>} : vector<16x32xbf16>, vector<32x64xbf16>, vector<16x64xf32> -> vector<16x64xf32>
    %68 = arith.addf %62, %67 : vector<16x64xf32>
    %c4_66 = arith.constant 4 : index
    %c0_67 = arith.constant 0 : index
    %69 = vector.load %arg8[%c4_66, %c0_67] : memref<20x32xf32, #tpu.memory_space<vmem>>, vector<16x32xf32>
    %70 = arith.truncf %69 : vector<16x32xf32> to vector<16x32xbf16>
    %c4_68 = arith.constant 4 : index
    %c0_69 = arith.constant 0 : index
    %c0_70 = arith.constant 0 : index
    %71 = vector.load %arg4[%c4_68, %c0_69, %c0_70] : memref<5x32x64xbf16, #tpu.memory_space<vmem>>, vector<1x32x64xbf16>
    %72 = vector.shape_cast %71 : vector<1x32x64xbf16> to vector<32x64xbf16>
    %cst_71 = arith.constant dense<0.000000e+00> : vector<16x64xf32>
    %73 = tpu.matmul %70, %72, %cst_71 {dimension_numbers = #tpu.dot_dimension_numbers<[1], [0], [0], [1], [0, 0, 1, 1], [], []>} : vector<16x32xbf16>, vector<32x64xbf16>, vector<16x64xf32> -> vector<16x64xf32>
    %74 = arith.addf %68, %73 : vector<16x64xf32>
    %c0_72 = arith.constant 0 : index
    %c0_73 = arith.constant 0 : index
    %75 = vector.load %arg5[%c0_72, %c0_73] : memref<1x64xf32, #tpu.memory_space<vmem>>, vector<1x64xf32>
    %76 = vector.broadcast %75 : vector<1x64xf32> to vector<16x64xf32>
    %77 = arith.addf %74, %76 : vector<16x64xf32>
    %cst_74 = arith.constant 0.000000e+00 : f32
    %78 = vector.broadcast %cst_74 : f32 to vector<16x64xf32>
    %79 = arith.maximumf %77, %78 : vector<16x64xf32>
    %c0_75 = arith.constant 0 : index
    %c0_76 = arith.constant 0 : index
    %80 = vector.load %arg9[%c0_75, %c0_76] : memref<16x64xf32, #tpu.memory_space<vmem>>, vector<16x64xf32>
    tpu.vector_store %arg9[%c0_75, %c0_76], %79 {strides = array<i32>} : memref<16x64xf32, #tpu.memory_space<vmem>>, vector<16x64xf32>,
    %c0_77 = arith.constant 0 : index
    %c0_78 = arith.constant 0 : index
    %81 = tpu.strided_load %arg9[%c0_77, %c0_78] {strides = array<i32: 2, 1>} : memref<16x64xf32, #tpu.memory_space<vmem>>, vector<8x64xf32>
    %c1_79 = arith.constant 1 : index
    %c0_80 = arith.constant 0 : index
    %82 = tpu.strided_load %arg9[%c1_79, %c0_80] {strides = array<i32: 2, 1>} : memref<16x64xf32, #tpu.memory_space<vmem>>, vector<8x64xf32>
    %83 = arith.maximumf %81, %82 : vector<8x64xf32>
    %84 = arith.truncf %83 : vector<8x64xf32> to vector<8x64xbf16>
    %c0_81 = arith.constant 0 : index
    %c0_82 = arith.constant 0 : index
    %c0_83 = arith.constant 0 : index
    %85 = vector.load %arg6[%c0_81, %c0_82, %c0_83] : memref<1x8x64xbf16, #tpu.memory_space<vmem>>, vector<1x8x64xbf16>
    %86 = vector.shape_cast %85 : vector<1x8x64xbf16> to vector<8x64xbf16>
    %87 = vector.shape_cast %84 : vector<8x64xbf16> to vector<1x8x64xbf16>
    tpu.vector_store %arg6[%c0_81, %c0_82, %c0_83], %87 {strides = array<i32>} : memref<1x8x64xbf16, #tpu.memory_space<vmem>>, vector<1x8x64xbf16>,
    return
  }
  func.func @transform_0(%arg0: i32) -> (i32, i32, i32) {
    %c0_i32 = arith.constant 0 : i32
    %c0_i32_0 = arith.constant 0 : i32
    %c0_i32_1 = arith.constant 0 : i32
    return %arg0, %c0_i32, %c0_i32_0 : i32, i32, i32
  }
  func.func @transform_1(%arg0: i32) -> (i32, i32, i32) {
    %c0_i32 = arith.constant 0 : i32
    %c0_i32_0 = arith.constant 0 : i32
    %c0_i32_1 = arith.constant 0 : i32
    %c0_i32_2 = arith.constant 0 : i32
    return %c0_i32, %c0_i32_0, %c0_i32_1 : i32, i32, i32
  }
  func.func @transform_2(%arg0: i32) -> (i32, i32) {
    %c0_i32 = arith.constant 0 : i32
    %c0_i32_0 = arith.constant 0 : i32
    %c0_i32_1 = arith.constant 0 : i32
    return %c0_i32, %c0_i32_0 : i32, i32
  }
  func.func @transform_3(%arg0: i32) -> (i32, i32, i32) {
    %c0_i32 = arith.constant 0 : i32
    %c0_i32_0 = arith.constant 0 : i32
    %c0_i32_1 = arith.constant 0 : i32
    %c0_i32_2 = arith.constant 0 : i32
    return %c0_i32, %c0_i32_0, %c0_i32_1 : i32, i32, i32
  }
  func.func @transform_4(%arg0: i32) -> (i32, i32) {
    %c0_i32 = arith.constant 0 : i32
    %c0_i32_0 = arith.constant 0 : i32
    %c0_i32_1 = arith.constant 0 : i32
    return %c0_i32, %c0_i32_0 : i32, i32
  }
  func.func @transform_5(%arg0: i32) -> (i32, i32, i32) {
    %c0_i32 = arith.constant 0 : i32
    %c0_i32_0 = arith.constant 0 : i32
    %c0_i32_1 = arith.constant 0 : i32
    return %arg0, %c0_i32, %c0_i32_0 : i32, i32, i32
  }
}

module attributes {stable_mosaic.version = 11 : i64} {
  func.func @_stage2_kernel(%arg0: i32, %arg1: memref<1x8x64xbf16, #tpu.memory_space<vmem>>, %arg2: memref<3x64x128xbf16, #tpu.memory_space<vmem>>, %arg3: memref<1x128xf32, #tpu.memory_space<vmem>>, %arg4: memref<3x128x128xbf16, #tpu.memory_space<vmem>>, %arg5: memref<1x128xf32, #tpu.memory_space<vmem>>, %arg6: memref<3x128x128xbf16, #tpu.memory_space<vmem>>, %arg7: memref<1x128xf32, #tpu.memory_space<vmem>>, %arg8: memref<1x4x128xbf16, #tpu.memory_space<vmem>>, %arg9: memref<10x64xf32, #tpu.memory_space<vmem>>, %arg10: memref<10x128xf32, #tpu.memory_space<vmem>>, %arg11: memref<10x128xf32, #tpu.memory_space<vmem>>, %arg12: memref<8x128xf32, #tpu.memory_space<vmem>>) attributes {dimension_semantics = [#tpu.dimension_semantics<parallel>], iteration_bounds = array<i64: 2>, scalar_prefetch = 0 : i64, scratch_operands = 4 : i64, tpu.core_type = #tpu.core_type<tc>, window_params = [{transform_indices = @transform_0, window_bounds = array<i64: 1, 8, 64>}, {pipeline_mode = #tpu.pipeline_mode<synchronous>, transform_indices = @transform_1, window_bounds = array<i64: 3, 64, 128>}, {pipeline_mode = #tpu.pipeline_mode<synchronous>, transform_indices = @transform_2, window_bounds = array<i64: 1, 128>}, {pipeline_mode = #tpu.pipeline_mode<synchronous>, transform_indices = @transform_3, window_bounds = array<i64: 3, 128, 128>}, {pipeline_mode = #tpu.pipeline_mode<synchronous>, transform_indices = @transform_4, window_bounds = array<i64: 1, 128>}, {pipeline_mode = #tpu.pipeline_mode<synchronous>, transform_indices = @transform_5, window_bounds = array<i64: 3, 128, 128>}, {pipeline_mode = #tpu.pipeline_mode<synchronous>, transform_indices = @transform_6, window_bounds = array<i64: 1, 128>}, {transform_indices = @transform_7, window_bounds = array<i64: 1, 4, 128>}]} {
    %c0 = arith.constant 0 : index
    %c0_0 = arith.constant 0 : index
    %c0_1 = arith.constant 0 : index
    %0 = vector.load %arg1[%c0, %c0_0, %c0_1] : memref<1x8x64xbf16, #tpu.memory_space<vmem>>, vector<1x8x64xbf16>
    %1 = vector.shape_cast %0 : vector<1x8x64xbf16> to vector<8x64xbf16>
    %cst = arith.constant 0.000000e+00 : f32
    %2 = vector.broadcast %cst : f32 to vector<10x64xf32>
    %c0_2 = arith.constant 0 : index
    %c0_3 = arith.constant 0 : index
    %3 = vector.load %arg9[%c0_2, %c0_3] : memref<10x64xf32, #tpu.memory_space<vmem>>, vector<10x64xf32>
    tpu.vector_store %arg9[%c0_2, %c0_3], %2 {strides = array<i32>} : memref<10x64xf32, #tpu.memory_space<vmem>>, vector<10x64xf32>,
    %4 = arith.extf %1 : vector<8x64xbf16> to vector<8x64xf32>
    %c1 = arith.constant 1 : index
    %c0_4 = arith.constant 0 : index
    %5 = vector.load %arg9[%c1, %c0_4] : memref<10x64xf32, #tpu.memory_space<vmem>>, vector<8x64xf32>
    tpu.vector_store %arg9[%c1, %c0_4], %4 {strides = array<i32>} : memref<10x64xf32, #tpu.memory_space<vmem>>, vector<8x64xf32>,
    %cst_5 = arith.constant 0.000000e+00 : f32
    %6 = vector.broadcast %cst_5 : f32 to vector<8x128xf32>
    %c0_6 = arith.constant 0 : index
    %c0_7 = arith.constant 0 : index
    %7 = vector.load %arg9[%c0_6, %c0_7] : memref<10x64xf32, #tpu.memory_space<vmem>>, vector<8x64xf32>
    %8 = arith.truncf %7 : vector<8x64xf32> to vector<8x64xbf16>
    %c0_8 = arith.constant 0 : index
    %c0_9 = arith.constant 0 : index
    %c0_10 = arith.constant 0 : index
    %9 = vector.load %arg2[%c0_8, %c0_9, %c0_10] : memref<3x64x128xbf16, #tpu.memory_space<vmem>>, vector<1x64x128xbf16>
    %10 = vector.shape_cast %9 : vector<1x64x128xbf16> to vector<64x128xbf16>
    %cst_11 = arith.constant dense<0.000000e+00> : vector<8x128xf32>
    %11 = tpu.matmul %8, %10, %cst_11 {dimension_numbers = #tpu.dot_dimension_numbers<[1], [0], [0], [1], [0, 0, 1, 1], [], []>} : vector<8x64xbf16>, vector<64x128xbf16>, vector<8x128xf32> -> vector<8x128xf32>
    %12 = arith.addf %6, %11 : vector<8x128xf32>
    %c1_12 = arith.constant 1 : index
    %c0_13 = arith.constant 0 : index
    %13 = vector.load %arg9[%c1_12, %c0_13] : memref<10x64xf32, #tpu.memory_space<vmem>>, vector<8x64xf32>
    %14 = arith.truncf %13 : vector<8x64xf32> to vector<8x64xbf16>
    %c1_14 = arith.constant 1 : index
    %c0_15 = arith.constant 0 : index
    %c0_16 = arith.constant 0 : index
    %15 = vector.load %arg2[%c1_14, %c0_15, %c0_16] : memref<3x64x128xbf16, #tpu.memory_space<vmem>>, vector<1x64x128xbf16>
    %16 = vector.shape_cast %15 : vector<1x64x128xbf16> to vector<64x128xbf16>
    %cst_17 = arith.constant dense<0.000000e+00> : vector<8x128xf32>
    %17 = tpu.matmul %14, %16, %cst_17 {dimension_numbers = #tpu.dot_dimension_numbers<[1], [0], [0], [1], [0, 0, 1, 1], [], []>} : vector<8x64xbf16>, vector<64x128xbf16>, vector<8x128xf32> -> vector<8x128xf32>
    %18 = arith.addf %12, %17 : vector<8x128xf32>
    %c2 = arith.constant 2 : index
    %c0_18 = arith.constant 0 : index
    %19 = vector.load %arg9[%c2, %c0_18] : memref<10x64xf32, #tpu.memory_space<vmem>>, vector<8x64xf32>
    %20 = arith.truncf %19 : vector<8x64xf32> to vector<8x64xbf16>
    %c2_19 = arith.constant 2 : index
    %c0_20 = arith.constant 0 : index
    %c0_21 = arith.constant 0 : index
    %21 = vector.load %arg2[%c2_19, %c0_20, %c0_21] : memref<3x64x128xbf16, #tpu.memory_space<vmem>>, vector<1x64x128xbf16>
    %22 = vector.shape_cast %21 : vector<1x64x128xbf16> to vector<64x128xbf16>
    %cst_22 = arith.constant dense<0.000000e+00> : vector<8x128xf32>
    %23 = tpu.matmul %20, %22, %cst_22 {dimension_numbers = #tpu.dot_dimension_numbers<[1], [0], [0], [1], [0, 0, 1, 1], [], []>} : vector<8x64xbf16>, vector<64x128xbf16>, vector<8x128xf32> -> vector<8x128xf32>
    %24 = arith.addf %18, %23 : vector<8x128xf32>
    %c0_23 = arith.constant 0 : index
    %c0_24 = arith.constant 0 : index
    %25 = vector.load %arg3[%c0_23, %c0_24] : memref<1x128xf32, #tpu.memory_space<vmem>>, vector<1x128xf32>
    %26 = vector.broadcast %25 : vector<1x128xf32> to vector<8x128xf32>
    %27 = arith.addf %24, %26 : vector<8x128xf32>
    %cst_25 = arith.constant 0.000000e+00 : f32
    %28 = vector.broadcast %cst_25 : f32 to vector<8x128xf32>
    %29 = arith.maximumf %27, %28 : vector<8x128xf32>
    %cst_26 = arith.constant 0.000000e+00 : f32
    %30 = vector.broadcast %cst_26 : f32 to vector<10x128xf32>
    %c0_27 = arith.constant 0 : index
    %c0_28 = arith.constant 0 : index
    %31 = vector.load %arg10[%c0_27, %c0_28] : memref<10x128xf32, #tpu.memory_space<vmem>>, vector<10x128xf32>
    tpu.vector_store %arg10[%c0_27, %c0_28], %30 {strides = array<i32>} : memref<10x128xf32, #tpu.memory_space<vmem>>, vector<10x128xf32>,
    %c1_29 = arith.constant 1 : index
    %c0_30 = arith.constant 0 : index
    %32 = vector.load %arg10[%c1_29, %c0_30] : memref<10x128xf32, #tpu.memory_space<vmem>>, vector<8x128xf32>
    tpu.vector_store %arg10[%c1_29, %c0_30], %29 {strides = array<i32>} : memref<10x128xf32, #tpu.memory_space<vmem>>, vector<8x128xf32>,
    %cst_31 = arith.constant 0.000000e+00 : f32
    %33 = vector.broadcast %cst_31 : f32 to vector<8x128xf32>
    %c0_32 = arith.constant 0 : index
    %c0_33 = arith.constant 0 : index
    %34 = vector.load %arg10[%c0_32, %c0_33] : memref<10x128xf32, #tpu.memory_space<vmem>>, vector<8x128xf32>
    %35 = arith.truncf %34 : vector<8x128xf32> to vector<8x128xbf16>
    %c0_34 = arith.constant 0 : index
    %c0_35 = arith.constant 0 : index
    %c0_36 = arith.constant 0 : index
    %36 = vector.load %arg4[%c0_34, %c0_35, %c0_36] : memref<3x128x128xbf16, #tpu.memory_space<vmem>>, vector<1x128x128xbf16>
    %37 = vector.shape_cast %36 : vector<1x128x128xbf16> to vector<128x128xbf16>
    %cst_37 = arith.constant dense<0.000000e+00> : vector<8x128xf32>
    %38 = tpu.matmul %35, %37, %cst_37 {dimension_numbers = #tpu.dot_dimension_numbers<[1], [0], [0], [1], [0, 0, 1, 1], [], []>} : vector<8x128xbf16>, vector<128x128xbf16>, vector<8x128xf32> -> vector<8x128xf32>
    %39 = arith.addf %33, %38 : vector<8x128xf32>
    %c1_38 = arith.constant 1 : index
    %c0_39 = arith.constant 0 : index
    %40 = vector.load %arg10[%c1_38, %c0_39] : memref<10x128xf32, #tpu.memory_space<vmem>>, vector<8x128xf32>
    %41 = arith.truncf %40 : vector<8x128xf32> to vector<8x128xbf16>
    %c1_40 = arith.constant 1 : index
    %c0_41 = arith.constant 0 : index
    %c0_42 = arith.constant 0 : index
    %42 = vector.load %arg4[%c1_40, %c0_41, %c0_42] : memref<3x128x128xbf16, #tpu.memory_space<vmem>>, vector<1x128x128xbf16>
    %43 = vector.shape_cast %42 : vector<1x128x128xbf16> to vector<128x128xbf16>
    %cst_43 = arith.constant dense<0.000000e+00> : vector<8x128xf32>
    %44 = tpu.matmul %41, %43, %cst_43 {dimension_numbers = #tpu.dot_dimension_numbers<[1], [0], [0], [1], [0, 0, 1, 1], [], []>} : vector<8x128xbf16>, vector<128x128xbf16>, vector<8x128xf32> -> vector<8x128xf32>
    %45 = arith.addf %39, %44 : vector<8x128xf32>
    %c2_44 = arith.constant 2 : index
    %c0_45 = arith.constant 0 : index
    %46 = vector.load %arg10[%c2_44, %c0_45] : memref<10x128xf32, #tpu.memory_space<vmem>>, vector<8x128xf32>
    %47 = arith.truncf %46 : vector<8x128xf32> to vector<8x128xbf16>
    %c2_46 = arith.constant 2 : index
    %c0_47 = arith.constant 0 : index
    %c0_48 = arith.constant 0 : index
    %48 = vector.load %arg4[%c2_46, %c0_47, %c0_48] : memref<3x128x128xbf16, #tpu.memory_space<vmem>>, vector<1x128x128xbf16>
    %49 = vector.shape_cast %48 : vector<1x128x128xbf16> to vector<128x128xbf16>
    %cst_49 = arith.constant dense<0.000000e+00> : vector<8x128xf32>
    %50 = tpu.matmul %47, %49, %cst_49 {dimension_numbers = #tpu.dot_dimension_numbers<[1], [0], [0], [1], [0, 0, 1, 1], [], []>} : vector<8x128xbf16>, vector<128x128xbf16>, vector<8x128xf32> -> vector<8x128xf32>
    %51 = arith.addf %45, %50 : vector<8x128xf32>
    %c0_50 = arith.constant 0 : index
    %c0_51 = arith.constant 0 : index
    %52 = vector.load %arg5[%c0_50, %c0_51] : memref<1x128xf32, #tpu.memory_space<vmem>>, vector<1x128xf32>
    %53 = vector.broadcast %52 : vector<1x128xf32> to vector<8x128xf32>
    %54 = arith.addf %51, %53 : vector<8x128xf32>
    %cst_52 = arith.constant 0.000000e+00 : f32
    %55 = vector.broadcast %cst_52 : f32 to vector<8x128xf32>
    %56 = arith.maximumf %54, %55 : vector<8x128xf32>
    %cst_53 = arith.constant 0.000000e+00 : f32
    %57 = vector.broadcast %cst_53 : f32 to vector<10x128xf32>
    %c0_54 = arith.constant 0 : index
    %c0_55 = arith.constant 0 : index
    %58 = vector.load %arg11[%c0_54, %c0_55] : memref<10x128xf32, #tpu.memory_space<vmem>>, vector<10x128xf32>
    tpu.vector_store %arg11[%c0_54, %c0_55], %57 {strides = array<i32>} : memref<10x128xf32, #tpu.memory_space<vmem>>, vector<10x128xf32>,
    %c1_56 = arith.constant 1 : index
    %c0_57 = arith.constant 0 : index
    %59 = vector.load %arg11[%c1_56, %c0_57] : memref<10x128xf32, #tpu.memory_space<vmem>>, vector<8x128xf32>
    tpu.vector_store %arg11[%c1_56, %c0_57], %56 {strides = array<i32>} : memref<10x128xf32, #tpu.memory_space<vmem>>, vector<8x128xf32>,
    %cst_58 = arith.constant 0.000000e+00 : f32
    %60 = vector.broadcast %cst_58 : f32 to vector<8x128xf32>
    %c0_59 = arith.constant 0 : index
    %c0_60 = arith.constant 0 : index
    %61 = vector.load %arg11[%c0_59, %c0_60] : memref<10x128xf32, #tpu.memory_space<vmem>>, vector<8x128xf32>
    %62 = arith.truncf %61 : vector<8x128xf32> to vector<8x128xbf16>
    %c0_61 = arith.constant 0 : index
    %c0_62 = arith.constant 0 : index
    %c0_63 = arith.constant 0 : index
    %63 = vector.load %arg6[%c0_61, %c0_62, %c0_63] : memref<3x128x128xbf16, #tpu.memory_space<vmem>>, vector<1x128x128xbf16>
    %64 = vector.shape_cast %63 : vector<1x128x128xbf16> to vector<128x128xbf16>
    %cst_64 = arith.constant dense<0.000000e+00> : vector<8x128xf32>
    %65 = tpu.matmul %62, %64, %cst_64 {dimension_numbers = #tpu.dot_dimension_numbers<[1], [0], [0], [1], [0, 0, 1, 1], [], []>} : vector<8x128xbf16>, vector<128x128xbf16>, vector<8x128xf32> -> vector<8x128xf32>
    %66 = arith.addf %60, %65 : vector<8x128xf32>
    %c1_65 = arith.constant 1 : index
    %c0_66 = arith.constant 0 : index
    %67 = vector.load %arg11[%c1_65, %c0_66] : memref<10x128xf32, #tpu.memory_space<vmem>>, vector<8x128xf32>
    %68 = arith.truncf %67 : vector<8x128xf32> to vector<8x128xbf16>
    %c1_67 = arith.constant 1 : index
    %c0_68 = arith.constant 0 : index
    %c0_69 = arith.constant 0 : index
    %69 = vector.load %arg6[%c1_67, %c0_68, %c0_69] : memref<3x128x128xbf16, #tpu.memory_space<vmem>>, vector<1x128x128xbf16>
    %70 = vector.shape_cast %69 : vector<1x128x128xbf16> to vector<128x128xbf16>
    %cst_70 = arith.constant dense<0.000000e+00> : vector<8x128xf32>
    %71 = tpu.matmul %68, %70, %cst_70 {dimension_numbers = #tpu.dot_dimension_numbers<[1], [0], [0], [1], [0, 0, 1, 1], [], []>} : vector<8x128xbf16>, vector<128x128xbf16>, vector<8x128xf32> -> vector<8x128xf32>
    %72 = arith.addf %66, %71 : vector<8x128xf32>
    %c2_71 = arith.constant 2 : index
    %c0_72 = arith.constant 0 : index
    %73 = vector.load %arg11[%c2_71, %c0_72] : memref<10x128xf32, #tpu.memory_space<vmem>>, vector<8x128xf32>
    %74 = arith.truncf %73 : vector<8x128xf32> to vector<8x128xbf16>
    %c2_73 = arith.constant 2 : index
    %c0_74 = arith.constant 0 : index
    %c0_75 = arith.constant 0 : index
    %75 = vector.load %arg6[%c2_73, %c0_74, %c0_75] : memref<3x128x128xbf16, #tpu.memory_space<vmem>>, vector<1x128x128xbf16>
    %76 = vector.shape_cast %75 : vector<1x128x128xbf16> to vector<128x128xbf16>
    %cst_76 = arith.constant dense<0.000000e+00> : vector<8x128xf32>
    %77 = tpu.matmul %74, %76, %cst_76 {dimension_numbers = #tpu.dot_dimension_numbers<[1], [0], [0], [1], [0, 0, 1, 1], [], []>} : vector<8x128xbf16>, vector<128x128xbf16>, vector<8x128xf32> -> vector<8x128xf32>
    %78 = arith.addf %72, %77 : vector<8x128xf32>
    %c0_77 = arith.constant 0 : index
    %c0_78 = arith.constant 0 : index
    %79 = vector.load %arg7[%c0_77, %c0_78] : memref<1x128xf32, #tpu.memory_space<vmem>>, vector<1x128xf32>
    %80 = vector.broadcast %79 : vector<1x128xf32> to vector<8x128xf32>
    %81 = arith.addf %78, %80 : vector<8x128xf32>
    %cst_79 = arith.constant 0.000000e+00 : f32
    %82 = vector.broadcast %cst_79 : f32 to vector<8x128xf32>
    %83 = arith.maximumf %81, %82 : vector<8x128xf32>
    %c0_80 = arith.constant 0 : index
    %c0_81 = arith.constant 0 : index
    %84 = vector.load %arg12[%c0_80, %c0_81] : memref<8x128xf32, #tpu.memory_space<vmem>>, vector<8x128xf32>
    tpu.vector_store %arg12[%c0_80, %c0_81], %83 {strides = array<i32>} : memref<8x128xf32, #tpu.memory_space<vmem>>, vector<8x128xf32>,
    %c0_82 = arith.constant 0 : index
    %c0_83 = arith.constant 0 : index
    %85 = tpu.strided_load %arg12[%c0_82, %c0_83] {strides = array<i32: 2, 1>} : memref<8x128xf32, #tpu.memory_space<vmem>>, vector<4x128xf32>
    %c1_84 = arith.constant 1 : index
    %c0_85 = arith.constant 0 : index
    %86 = tpu.strided_load %arg12[%c1_84, %c0_85] {strides = array<i32: 2, 1>} : memref<8x128xf32, #tpu.memory_space<vmem>>, vector<4x128xf32>
    %87 = arith.maximumf %85, %86 : vector<4x128xf32>
    %88 = arith.truncf %87 : vector<4x128xf32> to vector<4x128xbf16>
    %c0_86 = arith.constant 0 : index
    %c0_87 = arith.constant 0 : index
    %c0_88 = arith.constant 0 : index
    %89 = vector.load %arg8[%c0_86, %c0_87, %c0_88] : memref<1x4x128xbf16, #tpu.memory_space<vmem>>, vector<1x4x128xbf16>
    %90 = vector.shape_cast %89 : vector<1x4x128xbf16> to vector<4x128xbf16>
    %91 = vector.shape_cast %88 : vector<4x128xbf16> to vector<1x4x128xbf16>
    tpu.vector_store %arg8[%c0_86, %c0_87, %c0_88], %91 {strides = array<i32>} : memref<1x4x128xbf16, #tpu.memory_space<vmem>>, vector<1x4x128xbf16>,
    return
  }
  func.func @transform_0(%arg0: i32) -> (i32, i32, i32) {
    %c0_i32 = arith.constant 0 : i32
    %c0_i32_0 = arith.constant 0 : i32
    %c0_i32_1 = arith.constant 0 : i32
    return %arg0, %c0_i32, %c0_i32_0 : i32, i32, i32
  }
  func.func @transform_1(%arg0: i32) -> (i32, i32, i32) {
    %c0_i32 = arith.constant 0 : i32
    %c0_i32_0 = arith.constant 0 : i32
    %c0_i32_1 = arith.constant 0 : i32
    %c0_i32_2 = arith.constant 0 : i32
    return %c0_i32, %c0_i32_0, %c0_i32_1 : i32, i32, i32
  }
  func.func @transform_2(%arg0: i32) -> (i32, i32) {
    %c0_i32 = arith.constant 0 : i32
    %c0_i32_0 = arith.constant 0 : i32
    %c0_i32_1 = arith.constant 0 : i32
    return %c0_i32, %c0_i32_0 : i32, i32
  }
  func.func @transform_3(%arg0: i32) -> (i32, i32, i32) {
    %c0_i32 = arith.constant 0 : i32
    %c0_i32_0 = arith.constant 0 : i32
    %c0_i32_1 = arith.constant 0 : i32
    %c0_i32_2 = arith.constant 0 : i32
    return %c0_i32, %c0_i32_0, %c0_i32_1 : i32, i32, i32
  }
  func.func @transform_4(%arg0: i32) -> (i32, i32) {
    %c0_i32 = arith.constant 0 : i32
    %c0_i32_0 = arith.constant 0 : i32
    %c0_i32_1 = arith.constant 0 : i32
    return %c0_i32, %c0_i32_0 : i32, i32
  }
  func.func @transform_5(%arg0: i32) -> (i32, i32, i32) {
    %c0_i32 = arith.constant 0 : i32
    %c0_i32_0 = arith.constant 0 : i32
    %c0_i32_1 = arith.constant 0 : i32
    %c0_i32_2 = arith.constant 0 : i32
    return %c0_i32, %c0_i32_0, %c0_i32_1 : i32, i32, i32
  }
  func.func @transform_6(%arg0: i32) -> (i32, i32) {
    %c0_i32 = arith.constant 0 : i32
    %c0_i32_0 = arith.constant 0 : i32
    %c0_i32_1 = arith.constant 0 : i32
    return %c0_i32, %c0_i32_0 : i32, i32
  }
  func.func @transform_7(%arg0: i32) -> (i32, i32, i32) {
    %c0_i32 = arith.constant 0 : i32
    %c0_i32_0 = arith.constant 0 : i32
    %c0_i32_1 = arith.constant 0 : i32
    return %arg0, %c0_i32, %c0_i32_0 : i32, i32, i32
  }
}

module attributes {stable_mosaic.version = 11 : i64} {
  func.func @_head_kernel(%arg0: i32, %arg1: memref<1x4x128xbf16, #tpu.memory_space<vmem>>, %arg2: memref<3x128x256xbf16, #tpu.memory_space<vmem>>, %arg3: memref<1x256xf32, #tpu.memory_space<vmem>>, %arg4: memref<256x128xf32, #tpu.memory_space<vmem>>, %arg5: memref<1x128xf32, #tpu.memory_space<vmem>>, %arg6: memref<128x64xf32, #tpu.memory_space<vmem>>, %arg7: memref<1x64xf32, #tpu.memory_space<vmem>>, %arg8: memref<64x128xf32, #tpu.memory_space<vmem>>, %arg9: memref<1x128xf32, #tpu.memory_space<vmem>>, %arg10: memref<1x1x128xf32, #tpu.memory_space<vmem>>, %arg11: memref<6x128xf32, #tpu.memory_space<vmem>>) attributes {dimension_semantics = [#tpu.dimension_semantics<parallel>], iteration_bounds = array<i64: 2>, scalar_prefetch = 0 : i64, scratch_operands = 1 : i64, tpu.core_type = #tpu.core_type<tc>, window_params = [{transform_indices = @transform_0, window_bounds = array<i64: 1, 4, 128>}, {pipeline_mode = #tpu.pipeline_mode<synchronous>, transform_indices = @transform_1, window_bounds = array<i64: 3, 128, 256>}, {pipeline_mode = #tpu.pipeline_mode<synchronous>, transform_indices = @transform_2, window_bounds = array<i64: 1, 256>}, {pipeline_mode = #tpu.pipeline_mode<synchronous>, transform_indices = @transform_3, window_bounds = array<i64: 256, 128>}, {pipeline_mode = #tpu.pipeline_mode<synchronous>, transform_indices = @transform_4, window_bounds = array<i64: 1, 128>}, {pipeline_mode = #tpu.pipeline_mode<synchronous>, transform_indices = @transform_5, window_bounds = array<i64: 128, 64>}, {pipeline_mode = #tpu.pipeline_mode<synchronous>, transform_indices = @transform_6, window_bounds = array<i64: 1, 64>}, {pipeline_mode = #tpu.pipeline_mode<synchronous>, transform_indices = @transform_7, window_bounds = array<i64: 64, 128>}, {pipeline_mode = #tpu.pipeline_mode<synchronous>, transform_indices = @transform_8, window_bounds = array<i64: 1, 128>}, {transform_indices = @transform_9, window_bounds = array<i64: 1, 1, 128>}]} {
    %c0 = arith.constant 0 : index
    %c0_0 = arith.constant 0 : index
    %c0_1 = arith.constant 0 : index
    %0 = vector.load %arg1[%c0, %c0_0, %c0_1] : memref<1x4x128xbf16, #tpu.memory_space<vmem>>, vector<1x4x128xbf16>
    %1 = vector.shape_cast %0 : vector<1x4x128xbf16> to vector<4x128xbf16>
    %cst = arith.constant 0.000000e+00 : f32
    %2 = vector.broadcast %cst : f32 to vector<6x128xf32>
    %c0_2 = arith.constant 0 : index
    %c0_3 = arith.constant 0 : index
    %3 = vector.load %arg11[%c0_2, %c0_3] : memref<6x128xf32, #tpu.memory_space<vmem>>, vector<6x128xf32>
    tpu.vector_store %arg11[%c0_2, %c0_3], %2 {strides = array<i32>} : memref<6x128xf32, #tpu.memory_space<vmem>>, vector<6x128xf32>,
    %4 = arith.extf %1 : vector<4x128xbf16> to vector<4x128xf32>
    %c1 = arith.constant 1 : index
    %c0_4 = arith.constant 0 : index
    %5 = vector.load %arg11[%c1, %c0_4] : memref<6x128xf32, #tpu.memory_space<vmem>>, vector<4x128xf32>
    tpu.vector_store %arg11[%c1, %c0_4], %4 {strides = array<i32>} : memref<6x128xf32, #tpu.memory_space<vmem>>, vector<4x128xf32>,
    %cst_5 = arith.constant 0.000000e+00 : f32
    %6 = vector.broadcast %cst_5 : f32 to vector<4x256xf32>
    %c0_6 = arith.constant 0 : index
    %c0_7 = arith.constant 0 : index
    %7 = vector.load %arg11[%c0_6, %c0_7] : memref<6x128xf32, #tpu.memory_space<vmem>>, vector<4x128xf32>
    %8 = arith.truncf %7 : vector<4x128xf32> to vector<4x128xbf16>
    %c0_8 = arith.constant 0 : index
    %c0_9 = arith.constant 0 : index
    %c0_10 = arith.constant 0 : index
    %9 = vector.load %arg2[%c0_8, %c0_9, %c0_10] : memref<3x128x256xbf16, #tpu.memory_space<vmem>>, vector<1x128x256xbf16>
    %10 = vector.shape_cast %9 : vector<1x128x256xbf16> to vector<128x256xbf16>
    %cst_11 = arith.constant dense<0.000000e+00> : vector<4x256xf32>
    %11 = tpu.matmul %8, %10, %cst_11 {dimension_numbers = #tpu.dot_dimension_numbers<[1], [0], [0], [1], [0, 0, 1, 1], [], []>} : vector<4x128xbf16>, vector<128x256xbf16>, vector<4x256xf32> -> vector<4x256xf32>
    %12 = arith.addf %6, %11 : vector<4x256xf32>
    %c1_12 = arith.constant 1 : index
    %c0_13 = arith.constant 0 : index
    %13 = vector.load %arg11[%c1_12, %c0_13] : memref<6x128xf32, #tpu.memory_space<vmem>>, vector<4x128xf32>
    %14 = arith.truncf %13 : vector<4x128xf32> to vector<4x128xbf16>
    %c1_14 = arith.constant 1 : index
    %c0_15 = arith.constant 0 : index
    %c0_16 = arith.constant 0 : index
    %15 = vector.load %arg2[%c1_14, %c0_15, %c0_16] : memref<3x128x256xbf16, #tpu.memory_space<vmem>>, vector<1x128x256xbf16>
    %16 = vector.shape_cast %15 : vector<1x128x256xbf16> to vector<128x256xbf16>
    %cst_17 = arith.constant dense<0.000000e+00> : vector<4x256xf32>
    %17 = tpu.matmul %14, %16, %cst_17 {dimension_numbers = #tpu.dot_dimension_numbers<[1], [0], [0], [1], [0, 0, 1, 1], [], []>} : vector<4x128xbf16>, vector<128x256xbf16>, vector<4x256xf32> -> vector<4x256xf32>
    %18 = arith.addf %12, %17 : vector<4x256xf32>
    %c2 = arith.constant 2 : index
    %c0_18 = arith.constant 0 : index
    %19 = vector.load %arg11[%c2, %c0_18] : memref<6x128xf32, #tpu.memory_space<vmem>>, vector<4x128xf32>
    %20 = arith.truncf %19 : vector<4x128xf32> to vector<4x128xbf16>
    %c2_19 = arith.constant 2 : index
    %c0_20 = arith.constant 0 : index
    %c0_21 = arith.constant 0 : index
    %21 = vector.load %arg2[%c2_19, %c0_20, %c0_21] : memref<3x128x256xbf16, #tpu.memory_space<vmem>>, vector<1x128x256xbf16>
    %22 = vector.shape_cast %21 : vector<1x128x256xbf16> to vector<128x256xbf16>
    %cst_22 = arith.constant dense<0.000000e+00> : vector<4x256xf32>
    %23 = tpu.matmul %20, %22, %cst_22 {dimension_numbers = #tpu.dot_dimension_numbers<[1], [0], [0], [1], [0, 0, 1, 1], [], []>} : vector<4x128xbf16>, vector<128x256xbf16>, vector<4x256xf32> -> vector<4x256xf32>
    %24 = arith.addf %18, %23 : vector<4x256xf32>
    %c0_23 = arith.constant 0 : index
    %c0_24 = arith.constant 0 : index
    %25 = vector.load %arg3[%c0_23, %c0_24] : memref<1x256xf32, #tpu.memory_space<vmem>>, vector<1x256xf32>
    %26 = vector.broadcast %25 : vector<1x256xf32> to vector<4x256xf32>
    %27 = arith.addf %24, %26 : vector<4x256xf32>
    %cst_25 = arith.constant 0.000000e+00 : f32
    %28 = vector.broadcast %cst_25 : f32 to vector<4x256xf32>
    %29 = arith.maximumf %27, %28 : vector<4x256xf32>
    %cst_26 = arith.constant dense<0.000000e+00> : vector<256xf32>
    %30 = vector.multi_reduction <add>, %29, %cst_26 [0] : vector<4x256xf32> to vector<256xf32>
    %31 = vector.shape_cast %30 : vector<256xf32> to vector<1x256xf32>
    %cst_27 = arith.constant 4.000000e+00 : f32
    %32 = vector.broadcast %cst_27 : f32 to vector<1x256xf32>
    %33 = arith.divf %31, %32 : vector<1x256xf32>
    %c0_28 = arith.constant 0 : index
    %c0_29 = arith.constant 0 : index
    %34 = vector.load %arg4[%c0_28, %c0_29] : memref<256x128xf32, #tpu.memory_space<vmem>>, vector<256x128xf32>
    %cst_30 = arith.constant dense<0.000000e+00> : vector<1x128xf32>
    %35 = tpu.matmul %33, %34, %cst_30 {dimension_numbers = #tpu.dot_dimension_numbers<[1], [0], [0], [1], [0, 0, 1, 1], [], []>} : vector<1x256xf32>, vector<256x128xf32>, vector<1x128xf32> -> vector<1x128xf32>
    %c0_31 = arith.constant 0 : index
    %c0_32 = arith.constant 0 : index
    %36 = vector.load %arg5[%c0_31, %c0_32] : memref<1x128xf32, #tpu.memory_space<vmem>>, vector<1x128xf32>
    %37 = arith.addf %35, %36 : vector<1x128xf32>
    %cst_33 = arith.constant 0.000000e+00 : f32
    %38 = vector.broadcast %cst_33 : f32 to vector<1x128xf32>
    %39 = arith.maximumf %37, %38 : vector<1x128xf32>
    %c0_34 = arith.constant 0 : index
    %c0_35 = arith.constant 0 : index
    %40 = vector.load %arg6[%c0_34, %c0_35] : memref<128x64xf32, #tpu.memory_space<vmem>>, vector<128x64xf32>
    %cst_36 = arith.constant dense<0.000000e+00> : vector<1x64xf32>
    %41 = tpu.matmul %39, %40, %cst_36 {dimension_numbers = #tpu.dot_dimension_numbers<[1], [0], [0], [1], [0, 0, 1, 1], [], []>} : vector<1x128xf32>, vector<128x64xf32>, vector<1x64xf32> -> vector<1x64xf32>
    %c0_37 = arith.constant 0 : index
    %c0_38 = arith.constant 0 : index
    %42 = vector.load %arg7[%c0_37, %c0_38] : memref<1x64xf32, #tpu.memory_space<vmem>>, vector<1x64xf32>
    %43 = arith.addf %41, %42 : vector<1x64xf32>
    %cst_39 = arith.constant 0.000000e+00 : f32
    %44 = vector.broadcast %cst_39 : f32 to vector<1x64xf32>
    %45 = arith.maximumf %43, %44 : vector<1x64xf32>
    %c0_40 = arith.constant 0 : index
    %c0_41 = arith.constant 0 : index
    %46 = vector.load %arg8[%c0_40, %c0_41] : memref<64x128xf32, #tpu.memory_space<vmem>>, vector<64x128xf32>
    %cst_42 = arith.constant dense<0.000000e+00> : vector<1x128xf32>
    %47 = tpu.matmul %45, %46, %cst_42 {dimension_numbers = #tpu.dot_dimension_numbers<[1], [0], [0], [1], [0, 0, 1, 1], [], []>} : vector<1x64xf32>, vector<64x128xf32>, vector<1x128xf32> -> vector<1x128xf32>
    %c0_43 = arith.constant 0 : index
    %c0_44 = arith.constant 0 : index
    %48 = vector.load %arg9[%c0_43, %c0_44] : memref<1x128xf32, #tpu.memory_space<vmem>>, vector<1x128xf32>
    %49 = arith.addf %47, %48 : vector<1x128xf32>
    %c0_45 = arith.constant 0 : index
    %c0_46 = arith.constant 0 : index
    %c0_47 = arith.constant 0 : index
    %50 = vector.load %arg10[%c0_45, %c0_46, %c0_47] : memref<1x1x128xf32, #tpu.memory_space<vmem>>, vector<1x1x128xf32>
    %51 = vector.shape_cast %50 : vector<1x1x128xf32> to vector<1x128xf32>
    %52 = vector.shape_cast %49 : vector<1x128xf32> to vector<1x1x128xf32>
    tpu.vector_store %arg10[%c0_45, %c0_46, %c0_47], %52 {strides = array<i32>} : memref<1x1x128xf32, #tpu.memory_space<vmem>>, vector<1x1x128xf32>,
    return
  }
  func.func @transform_0(%arg0: i32) -> (i32, i32, i32) {
    %c0_i32 = arith.constant 0 : i32
    %c0_i32_0 = arith.constant 0 : i32
    %c0_i32_1 = arith.constant 0 : i32
    return %arg0, %c0_i32, %c0_i32_0 : i32, i32, i32
  }
  func.func @transform_1(%arg0: i32) -> (i32, i32, i32) {
    %c0_i32 = arith.constant 0 : i32
    %c0_i32_0 = arith.constant 0 : i32
    %c0_i32_1 = arith.constant 0 : i32
    %c0_i32_2 = arith.constant 0 : i32
    return %c0_i32, %c0_i32_0, %c0_i32_1 : i32, i32, i32
  }
  func.func @transform_2(%arg0: i32) -> (i32, i32) {
    %c0_i32 = arith.constant 0 : i32
    %c0_i32_0 = arith.constant 0 : i32
    %c0_i32_1 = arith.constant 0 : i32
    return %c0_i32, %c0_i32_0 : i32, i32
  }
  func.func @transform_3(%arg0: i32) -> (i32, i32) {
    %c0_i32 = arith.constant 0 : i32
    %c0_i32_0 = arith.constant 0 : i32
    %c0_i32_1 = arith.constant 0 : i32
    return %c0_i32, %c0_i32_0 : i32, i32
  }
  func.func @transform_4(%arg0: i32) -> (i32, i32) {
    %c0_i32 = arith.constant 0 : i32
    %c0_i32_0 = arith.constant 0 : i32
    %c0_i32_1 = arith.constant 0 : i32
    return %c0_i32, %c0_i32_0 : i32, i32
  }
  func.func @transform_5(%arg0: i32) -> (i32, i32) {
    %c0_i32 = arith.constant 0 : i32
    %c0_i32_0 = arith.constant 0 : i32
    %c0_i32_1 = arith.constant 0 : i32
    return %c0_i32, %c0_i32_0 : i32, i32
  }
  func.func @transform_6(%arg0: i32) -> (i32, i32) {
    %c0_i32 = arith.constant 0 : i32
    %c0_i32_0 = arith.constant 0 : i32
    %c0_i32_1 = arith.constant 0 : i32
    return %c0_i32, %c0_i32_0 : i32, i32
  }
  func.func @transform_7(%arg0: i32) -> (i32, i32) {
    %c0_i32 = arith.constant 0 : i32
    %c0_i32_0 = arith.constant 0 : i32
    %c0_i32_1 = arith.constant 0 : i32
    return %c0_i32, %c0_i32_0 : i32, i32
  }
  func.func @transform_8(%arg0: i32) -> (i32, i32) {
    %c0_i32 = arith.constant 0 : i32
    %c0_i32_0 = arith.constant 0 : i32
    %c0_i32_1 = arith.constant 0 : i32
    return %c0_i32, %c0_i32_0 : i32, i32
  }
  func.func @transform_9(%arg0: i32) -> (i32, i32, i32) {
    %c0_i32 = arith.constant 0 : i32
    %c0_i32_0 = arith.constant 0 : i32
    %c0_i32_1 = arith.constant 0 : i32
    return %arg0, %c0_i32, %c0_i32_0 : i32, i32, i32
  }
}

</mosaic_0001>

<llo_original>
// kernel: artifacts_detection_forward.3
$region0: #{artifacts_detection_forward.3}
  #allocation0 [shape = 'u32[]', space=smem, size = 0x4, offset = 0x4, fixed_abs, tag = 'smem constant byte address 0x4 - core index']
  #allocation1 [shape = 'u32[72,128]{1,0:T(1,128)}', space=vmem, size = 0x9000, scoped, tag = 'internal scratch']
  #allocation2 [shape = 'f32[20,8]{1,0:T(8,128)}', space=vmem, size = 0x3000, scoped, tag = 'scratch operand']
  #allocation3 [shape = 'f32[20,32]{1,0:T(8,128)}', space=vmem, size = 0x3000, scoped, tag = 'scratch operand']
  #allocation4 [shape = 'f32[16,64]{1,0:T(8,128)}', space=vmem, size = 0x2000, scoped, tag = 'scratch operand']
  %s0 = inlined_call_operand.vmem [shape: f32[2,16,8], index: 0, kind: input, shape index: {}]
  %s1 = inlined_call_operand.vmem [shape: bf16[5,8,32], index: 1, kind: input, shape index: {}]
  %s2 = inlined_call_operand.vmem [shape: f32[1,32], index: 2, kind: input, shape index: {}]
  %s3 = inlined_call_operand.hbm [shape: bf16[5,32,64], index: 3, kind: input, shape index: {}]
  %s4 = inlined_call_operand.vmem [shape: f32[1,64], index: 4, kind: input, shape index: {}]
  %s5 = inlined_call_operand.vmem [shape: bf16[2,8,64], index: 5, kind: output, shape index: {}]
  %s6 = sld [smem:[#allocation0]]
  $region57: #{artifacts_detection_forward.3} parent=0
    _
  %s8 = ssub.s32 1, %s6
  %s9 = scalar_select 0, %s8, %s6
  $region1: #{artifacts_detection_forward.3} parent=0
    #allocation5 [shape = 'u8[40960]{0}', space=vmem, size = 0xa000, scoped, tag = 'input window, operand 3, single buffered']
    #allocation6 [shape = 's32[2]{0}', space=sflag, size = 0x8, scoped, tag = 'scoped memory for artifacts_detection_forward.3']
    %10 = vsyncpa [#allocation6], 0
    loop: start=0, step=1, limit=4
    $region2: #{artifacts_detection_forward.3} parent=1 // loop_pre_header
      _
    $region3: #{artifacts_detection_forward.3} parent=1 // loop_header
      %s12 = sphi 0, %s16
      %p13 = scmp.ge.s32.totalorder %s12, 4
      %s22 = sphi 0, %s24
      %s25 = sphi 0, %s22
      %s26 = sphi 0, %s25
      %s42 = sphi 0, %s26
      %s46 = sphi 0, %s46
      %s48 = sphi 0, %s46
      %s49 = sphi 0, %s48
      %s63 = sphi 0, %s49
      %s67 = sphi 0, %s67
      %s69 = sphi 0, %s67
      %s70 = sphi 0, %s69
      %s84 = sphi 0, %s70
      %s88 = sphi 0, %s88
      %s90 = sphi 0, %s88
      %s91 = sphi 0, %s90
      %s105 = sphi 0, %s91
      %s109 = sphi 0, %s109
      %s111 = sphi 0, %s109
      %s112 = sphi 0, %s111
      %s126 = sphi 0, %s112
      %s132 = sphi 0, %s134
      %s135 = sphi 0, %s132
      %s136 = sphi 0, %s135
      %s152 = sphi 0, %s136
    $region4: #{artifacts_detection_forward.3} parent=1 // loop_header_branch
      %15 = sbr.rel (%p13) target = $region8
    $region5: #{artifacts_detection_forward.3} parent=1 // loop_body
      %s17 = ssub.s32 %s12, 1
      %s18 = ssub.s32 %s12, 2
      %s19 = sadd.s32 %s12, 1
      %s20 = ssub.s32 %s12, %s19
      %p21 = scmp.eq.s32.totalorder %s20, 0
      %s23 = sadd.s32 %s22, 1
      %s24 = scalar_select %p21, %s22, %s23
      %p27 = pneg %p21
      %p28 = scmp.eq.s32.totalorder %s12, 1
      %p29 = por %p27, %p28
      %p30 = scmp.ne.s32.totalorder %s22, %s25
      %p31 = scmp.eq.s32.totalorder %s12, 0
      %p32 = por %p30, %p31
      %p33 = scmp.ne.s32.totalorder %s22, %s25
      %p34 = scmp.eq.s32.totalorder %s17, 1
      %p35 = por %p33, %p34
      %p36 = scmp.ne.s32.totalorder %s25, %s26
      %p37 = scmp.eq.s32.totalorder %s17, 0
      %p38 = por %p36, %p37
      %p39 = scmp.ne.s32.totalorder %s25, %s26
      %p40 = scmp.eq.s32.totalorder %s18, 1
      %p41 = por %p39, %p40
      %p43 = scmp.ne.s32.totalorder %s26, %s42
      %p44 = scmp.eq.s32.totalorder %s18, 0
      %p45 = por %p43, %p44
      %s47 = sadd.s32 %s46, 1
      %p50 = scmp.eq.s32.totalorder %s12, 1
      %p51 = scmp.ne.s32.totalorder %s46, %s48
      %p52 = scmp.eq.s32.totalorder %s12, 0
      %p53 = por %p51, %p52
      %p54 = scmp.ne.s32.totalorder %s46, %s48
      %p55 = scmp.eq.s32.totalorder %s17, 1
      %p56 = por %p54, %p55
      %p57 = scmp.ne.s32.totalorder %s48, %s49
      %p58 = scmp.eq.s32.totalorder %s17, 0
      %p59 = por %p57, %p58
      %p60 = scmp.ne.s32.totalorder %s48, %s49
      %p61 = scmp.eq.s32.totalorder %s18, 1
      %p62 = por %p60, %p61
      %p64 = scmp.ne.s32.totalorder %s49, %s63
      %p65 = scmp.eq.s32.totalorder %s18, 0
      %p66 = por %p64, %p65
      %s68 = sadd.s32 %s67, 1
      %p71 = scmp.eq.s32.totalorder %s12, 1
      %p72 = scmp.ne.s32.totalorder %s67, %s69
      %p73 = scmp.eq.s32.totalorder %s12, 0
      %p74 = por %p72, %p73
      %p75 = scmp.ne.s32.totalorder %s67, %s69
      %p76 = scmp.eq.s32.totalorder %s17, 1
      %p77 = por %p75, %p76
      %p78 = scmp.ne.s32.totalorder %s69, %s70
      %p79 = scmp.eq.s32.totalorder %s17, 0
      %p80 = por %p78, %p79
      %p81 = scmp.ne.s32.totalorder %s69, %s70
      %p82 = scmp.eq.s32.totalorder %s18, 1
      %p83 = por %p81, %p82
      %p85 = scmp.ne.s32.totalorder %s70, %s84
      %p86 = scmp.eq.s32.totalorder %s18, 0
      %p87 = por %p85, %p86
      %s89 = sadd.s32 %s88, 1
      %p92 = scmp.eq.s32.totalorder %s12, 1
      %p93 = scmp.ne.s32.totalorder %s88, %s90
      %p94 = scmp.eq.s32.totalorder %s12, 0
      %p95 = por %p93, %p94
      %p96 = scmp.ne.s32.totalorder %s88, %s90
      %p97 = scmp.eq.s32.totalorder %s17, 1
      %p98 = por %p96, %p97
      %p99 = scmp.ne.s32.totalorder %s90, %s91
      %p100 = scmp.eq.s32.totalorder %s17, 0
      %p101 = por %p99, %p100
      %p102 = scmp.ne.s32.totalorder %s90, %s91
      %p103 = scmp.eq.s32.totalorder %s18, 1
      %p104 = por %p102, %p103
      %p106 = scmp.ne.s32.totalorder %s91, %s105
      %p107 = scmp.eq.s32.totalorder %s18, 0
      %p108 = por %p106, %p107
      %s110 = sadd.s32 %s109, 1
      %p113 = scmp.eq.s32.totalorder %s12, 1
      %p114 = scmp.ne.s32.totalorder %s109, %s111
      %p115 = scmp.eq.s32.totalorder %s12, 0
      %p116 = por %p114, %p115
      %p117 = scmp.ne.s32.totalorder %s109, %s111
      %p118 = scmp.eq.s32.totalorder %s17, 1
      %p119 = por %p117, %p118
      %p120 = scmp.ne.s32.totalorder %s111, %s112
      %p121 = scmp.eq.s32.totalorder %s17, 0
      %p122 = por %p120, %p121
      %p123 = scmp.ne.s32.totalorder %s111, %s112
      %p124 = scmp.eq.s32.totalorder %s18, 1
      %p125 = por %p123, %p124
      %p127 = scmp.ne.s32.totalorder %s112, %s126
      %p128 = scmp.eq.s32.totalorder %s18, 0
      %p129 = por %p127, %p128
      %s130 = ssub.s32 %s12, %s19
      %p131 = scmp.eq.s32.totalorder %s130, 0
      %s133 = sadd.s32 %s132, 1
      %s134 = scalar_select %p131, %s132, %s133
      %p137 = pneg %p131
      %p138 = scmp.eq.s32.totalorder %s12, 1
      %p139 = por %p137, %p138
      %p140 = scmp.ne.s32.totalorder %s132, %s135
      %p141 = scmp.eq.s32.totalorder %s12, 0
      %p142 = por %p140, %p141
      %p143 = scmp.ne.s32.totalorder %s132, %s135
      %p144 = scmp.eq.s32.totalorder %s17, 1
      %p145 = por %p143, %p144
      %p146 = scmp.ne.s32.totalorder %s135, %s136
      %p147 = scmp.eq.s32.totalorder %s17, 0
      %p148 = por %p146, %p147
      %p149 = scmp.ne.s32.totalorder %s135, %s136
      %p150 = scmp.eq.s32.totalorder %s18, 1
      %p151 = por %p149, %p150
      %p153 = scmp.ne.s32.totalorder %s136, %s152
      %p154 = scmp.eq.s32.totalorder %s18, 0
      %p155 = por %p153, %p154
      %p156 = scmp.le.s32.totalorder 1, %s12
      %p157 = scmp.lt.s32.totalorder %s12, 3
      %p158 = pnand %p156, %p157
      %p159 = pneg %p158
      // Predicated region
      $region9: #{artifacts_detection_forward.3} parent=5 // pred_check
        _
      $region10: #{artifacts_detection_forward.3} parent=5 // pred_check_branch
        %161 = sbr.rel (%p158) target = $region12
      $region11: #{artifacts_detection_forward.3} parent=5 // pred_region
        %s162 = ssub.s32 %s12, 1
        // Predicated region
        $region13: #{artifacts_detection_forward.3} parent=11 // pred_check
          %p163 = pneg %p59
        $region14: #{artifacts_detection_forward.3} parent=11 // pred_check_branch
          %165 = sbr.rel (%p163) target = $region16
        $region15: #{artifacts_detection_forward.3} parent=11 // pred_region
          _
        $region16: #{artifacts_detection_forward.3} parent=11 // pred_fallthru
          _
        // Predicated region
        $region17: #{artifacts_detection_forward.3} parent=11 // pred_check
          %p166 = pneg %p80
        $region18: #{artifacts_detection_forward.3} parent=11 // pred_check_branch
          %168 = sbr.rel (%p166) target = $region20
        $region19: #{artifacts_detection_forward.3} parent=11 // pred_region
          _
        $region20: #{artifacts_detection_forward.3} parent=11 // pred_fallthru
          _
        // Predicated region
        $region21: #{artifacts_detection_forward.3} parent=11 // pred_check
          %p169 = pneg %p101
        $region22: #{artifacts_detection_forward.3} parent=11 // pred_check_branch
          %171 = sbr.rel (%p169) target = $region24
        $region23: #{artifacts_detection_forward.3} parent=11 // pred_region
          %173 = vsyncadd [#allocation6], 0
          %s174 = sshll.u32 %s3, 4
          %s175 = int_to_ptr.hbm [resolvable:$true] %s174
          %s176 = sshll.u32 [#allocation5], 4
          %s177 = int_to_ptr.vmem [resolvable:$true] %s176
          %182 = dma.hbm_to_vmem [thread:$0]  %s175, 1280, %s177, [#allocation6], 64, 64, 4
        $region24: #{artifacts_detection_forward.3} parent=11 // pred_fallthru
          _
        // Predicated region
        $region25: #{artifacts_detection_forward.3} parent=11 // pred_check
          %p183 = pneg %p122
        $region26: #{artifacts_detection_forward.3} parent=11 // pred_check_branch
          %185 = sbr.rel (%p183) target = $region28
        $region27: #{artifacts_detection_forward.3} parent=11 // pred_region
          _
        $region28: #{artifacts_detection_forward.3} parent=11 // pred_fallthru
          _
      $region12: #{artifacts_detection_forward.3} parent=5 // pred_fallthru
        _
      %p186 = scmp.lt.s32.totalorder %s12, 2
      // Predicated region
      $region29: #{artifacts_detection_forward.3} parent=5 // pred_check
        %p187 = pneg %p186
      $region30: #{artifacts_detection_forward.3} parent=5 // pred_check_branch
        %189 = sbr.rel (%p187) target = $region32
      $region31: #{artifacts_detection_forward.3} parent=5 // pred_region
        // Predicated region
        $region33: #{artifacts_detection_forward.3} parent=31 // pred_check
          %p190 = pneg %p32
        $region34: #{artifacts_detection_forward.3} parent=31 // pred_check_branch
          %192 = sbr.rel (%p190) target = $region36
        $region35: #{artifacts_detection_forward.3} parent=31 // pred_region
          %p193 = scmp.lt.s32.totalorder %s12, 1
          %s194 = scalar_select %p193, %s12, 1
          %s195 = smul.addr %s194, 2
          %s196 = smul.addr %s195, 8
          %s197 = scalar_lea.vmem %s0, %s196
        $region36: #{artifacts_detection_forward.3} parent=31 // pred_fallthru
          _
      $region32: #{artifacts_detection_forward.3} parent=5 // pred_fallthru
        _
      %p198 = scmp.le.s32.totalorder 1, %s12
      %p199 = scmp.lt.s32.totalorder %s12, 3
      %p200 = pnand %p198, %p199
      %p201 = pneg %p200
      // Predicated region
      $region37: #{artifacts_detection_forward.3} parent=5 // pred_check
        _
      $region38: #{artifacts_detection_forward.3} parent=5 // pred_check_branch
        %203 = sbr.rel (%p200) target = $region40
      $region39: #{artifacts_detection_forward.3} parent=5 // pred_region
        %s204 = ssub.s32 %s12, 1
        // Predicated region
        $region41: #{artifacts_detection_forward.3} parent=39 // pred_check
          %p205 = pneg %p101
        $region42: #{artifacts_detection_forward.3} parent=39 // pred_check_branch
          %207 = sbr.rel (%p205) target = $region44
        $region43: #{artifacts_detection_forward.3} parent=39 // pred_region
          %209 = dma.done [#allocation6], 1280
        $region44: #{artifacts_detection_forward.3} parent=39 // pred_fallthru
          _
        %p210 = scmp.lt.s32.totalorder %s17, 1
        %s211 = scalar_select %p210, %s17, 1
        %s212 = smul.addr %s211, 2
        %s213 = smul.addr %s212, 8
        %s214 = scalar_lea.vmem %s0, %s213
        %p215 = pneg %p38
        %p216 = pneg %p35
        %p217 = pneg %p59
        %p218 = pneg %p56
        %p219 = pneg %p80
        %p220 = pneg %p77
        %p221 = pneg %p101
        %p222 = pneg %p98
        %p223 = pneg %p122
        %p224 = pneg %p119
        %p225 = pneg %p148
        %p226 = pneg %p145
        %p227 = scmp.lt.s32.totalorder %s17, 1
        %s228 = scalar_select %p227, %s17, 1
        %s229 = smul.addr %s228, 4
        %s230 = scalar_lea.vmem %s5, %s229
        %p231 = scmp.lt.s32.totalorder %s17, 1
        %s232 = scalar_select %p231, %s17, 1
        %s233 = smul.addr %s232, 2
        %s234 = smul.addr %s233, 8
        %s235 = scalar_lea.vmem %s0, %s234
        %p236 = scmp.lt.s32.totalorder %s17, 1
        %s237 = scalar_select %p236, %s17, 1
        %s238 = smul.addr %s237, 4
        %s239 = scalar_lea.vmem %s5, %s238
        %v241 = vld [vmem:[%s235] sm:$0xff]
        %v242 = vld [vmem:[%s235 + $0x8] sm:$0xff]
        %vm243 = vcmask 64512
        %244 = vst.msk [vmem:[#allocation2] sm:$0xff] %vm243, 0.0
        %245 = vst.msk [vmem:[#allocation2 + $0x8] sm:$0xff] %vm243, 0.0
        %vm246 = vcmask 60416
        %247 = vst.msk [vmem:[#allocation2 + $0x10] sm:$0xf] %vm246, 0.0
        %248 = vst.msk [vmem:[#allocation2 + $0x2] sm:$0xff] %vm243, %v241
        %249 = vst.msk [vmem:[#allocation2 + $0xa] sm:$0xff] %vm243, %v242
        %v250 = vld [vmem:[#allocation2] sm:$0xff]
        %v251 = vld [vmem:[#allocation2 + $0x8] sm:$0xff]
        %v252 = vpack.c.bf16 %v251, %v250
        %v253 = vld [vmem:[%s1] sm:$0xf]
        %v254 = vld [vmem:[#allocation2 + $0x1] sm:$0xff]
        %v255 = vld [vmem:[#allocation2 + $0x9] sm:$0xff]
        %v256 = vpack.c.bf16 %v255, %v254
        %s257 = scalar_lea.vmem %s1, 4
        %v258 = vld [vmem:[%s257] sm:$0xf]
        %v260 = vsel %vm243, %v256, 0
        %vm262 = vcmask 1043456
        %v264 = vsel %vm262, %v258, 0
        %266 = vmatpush.bf16.msra.mxu0 0
        %267 = vmatpush.bf16.msra.mxu0 0
        %268 = vmatpush.bf16.msra.mxu0 0
        %269 = vmatpush.bf16.msra.mxu0 0
        %270 = vmatpush.bf16.msra.mxu0 0
        %271 = vmatpush.bf16.msra.mxu0 0
        %272 = vmatpush.bf16.msra.mxu0 0
        %273 = vmatpush.bf16.msra.mxu0 %v264
        %274 = vmatmul.bf16.gmra.mxu0 %v260
        %v275 = vpop.f32.mrf.mxu0
        %v276 = vadd.f32 0.0, %v275
        %v277 = vpop.f32.mrf.mxu0
        %v278 = vadd.f32 0.0, %v277
        %279 = vdwg.mxu0
        %v281 = vsel %vm243, %v252, 0
        %v284 = vsel %vm262, %v253, 0
        %286 = vmatpush.bf16.msra.mxu0 0
        %287 = vmatpush.bf16.msra.mxu0 0
        %288 = vmatpush.bf16.msra.mxu0 0
        %289 = vmatpush.bf16.msra.mxu0 0
        %290 = vmatpush.bf16.msra.mxu0 0
        %291 = vmatpush.bf16.msra.mxu0 0
        %292 = vmatpush.bf16.msra.mxu0 0
        %293 = vmatpush.bf16.msra.mxu0 %v284
        %294 = vmatmul.bf16.gmra.mxu0 %v281
        %v295 = vpop.f32.mrf.mxu0
        %v296 = vadd.f32 %v276, %v295
        %v297 = vpop.f32.mrf.mxu0
        %v298 = vadd.f32 %v278, %v297
        %299 = vdwg.mxu0
        %v300 = vld [vmem:[#allocation2 + $0x2] sm:$0xff]
        %v301 = vld [vmem:[#allocation2 + $0xa] sm:$0xff]
        %v302 = vpack.c.bf16 %v301, %v300
        %s303 = scalar_lea.vmem %s1, 8
        %v304 = vld [vmem:[%s303] sm:$0xf]
        %v306 = vsel %vm243, %v302, 0
        %v309 = vsel %vm262, %v304, 0
        %311 = vmatpush.bf16.msra.mxu0 0
        %312 = vmatpush.bf16.msra.mxu0 0
        %313 = vmatpush.bf16.msra.mxu0 0
        %314 = vmatpush.bf16.msra.mxu0 0
        %315 = vmatpush.bf16.msra.mxu0 0
        %316 = vmatpush.bf16.msra.mxu0 0
        %317 = vmatpush.bf16.msra.mxu0 0
        %318 = vmatpush.bf16.msra.mxu0 %v309
        %319 = vmatmul.bf16.gmra.mxu0 %v306
        %v320 = vpop.f32.mrf.mxu0
        %v321 = vadd.f32 0.0, %v320
        %v322 = vpop.f32.mrf.mxu0
        %v323 = vadd.f32 0.0, %v322
        %324 = vdwg.mxu0
        %v325 = vadd.f32 %v296, %v321
        %v326 = vadd.f32 %v298, %v323
        %v327 = vld [vmem:[#allocation2 + $0x3] sm:$0xff]
        %v328 = vld [vmem:[#allocation2 + $0xb] sm:$0xff]
        %v329 = vpack.c.bf16 %v328, %v327
        %s330 = scalar_lea.vmem %s1, 12
        %v331 = vld [vmem:[%s330] sm:$0xf]
        %v333 = vsel %vm243, %v329, 0
        %v336 = vsel %vm262, %v331, 0
        %338 = vmatpush.bf16.msra.mxu0 0
        %339 = vmatpush.bf16.msra.mxu0 0
        %340 = vmatpush.bf16.msra.mxu0 0
        %341 = vmatpush.bf16.msra.mxu0 0
        %342 = vmatpush.bf16.msra.mxu0 0
        %343 = vmatpush.bf16.msra.mxu0 0
        %344 = vmatpush.bf16.msra.mxu0 0
        %345 = vmatpush.bf16.msra.mxu0 %v336
        %346 = vmatmul.bf16.gmra.mxu0 %v333
        %v347 = vpop.f32.mrf.mxu0
        %v348 = vadd.f32 0.0, %v347
        %v349 = vpop.f32.mrf.mxu0
        %v350 = vadd.f32 0.0, %v349
        %351 = vdwg.mxu0
        %v352 = vadd.f32 %v325, %v348
        %v353 = vadd.f32 %v326, %v350
        %v354 = vld [vmem:[#allocation2 + $0x4] sm:$0xff]
        %v355 = vld [vmem:[#allocation2 + $0xc] sm:$0xff]
        %v356 = vpack.c.bf16 %v355, %v354
        %s357 = scalar_lea.vmem %s1, 16
        %v358 = vld [vmem:[%s357] sm:$0xf]
        %v360 = vsel %vm243, %v356, 0
        %v363 = vsel %vm262, %v358, 0
        %365 = vmatpush.bf16.msra.mxu0 0
        %366 = vmatpush.bf16.msra.mxu0 0
        %367 = vmatpush.bf16.msra.mxu0 0
        %368 = vmatpush.bf16.msra.mxu0 0
        %369 = vmatpush.bf16.msra.mxu0 0
        %370 = vmatpush.bf16.msra.mxu0 0
        %371 = vmatpush.bf16.msra.mxu0 0
        %372 = vmatpush.bf16.msra.mxu0 %v363
        %373 = vmatmul.bf16.gmra.mxu0 %v360
        %v374 = vpop.f32.mrf.mxu0
        %v375 = vadd.f32 0.0, %v374
        %v376 = vpop.f32.mrf.mxu0
        %v377 = vadd.f32 0.0, %v376
        %378 = vdwg.mxu0
        %v379 = vadd.f32 %v352, %v375
        %v380 = vadd.f32 %v353, %v377
        %v381 = vld [vmem:[%s2] sm:$0x1]
        %v383 = vperm.slane %v381, 0
        %v385 = vadd.f32 %v379, %v383
        %v386 = vadd.f32 %v380, %v383
        %v387 = vmax.f32 %v385, 0.0
        %v388 = vmax.f32 %v386, 0.0
        %vm389 = vcmask 261120
        %390 = vst.msk [vmem:[#allocation3] sm:$0xff] %vm389, 0.0
        %391 = vst.msk [vmem:[#allocation3 + $0x8] sm:$0xff] %vm389, 0.0
        %vm392 = vcmask 257024
        %393 = vst.msk [vmem:[#allocation3 + $0x10] sm:$0xf] %vm392, 0.0
        %394 = vst.msk [vmem:[#allocation3 + $0x2] sm:$0xff] %vm389, %v387
        %395 = vst.msk [vmem:[#allocation3 + $0xa] sm:$0xff] %vm389, %v388
        %v396 = vld [vmem:[#allocation3] sm:$0xff]
        %v397 = vld [vmem:[#allocation3 + $0x8] sm:$0xff]
        %v398 = vpack.c.bf16 %v397, %v396
        %v399 = vld [vmem:[#allocation5] sm:$0xf]
        %v400 = vld [vmem:[#allocation5 + $0x4] sm:$0xf]
        %v401 = vld [vmem:[#allocation5 + $0x8] sm:$0xf]
        %v402 = vld [vmem:[#allocation5 + $0xc] sm:$0xf]
        %v403 = vld [vmem:[#allocation3 + $0x1] sm:$0xff]
        %v404 = vld [vmem:[#allocation3 + $0x9] sm:$0xff]
        %v405 = vpack.c.bf16 %v404, %v403
        %s406 = scalar_lea.vmem [#allocation5], 16
        %v407 = vld [vmem:[%s406] sm:$0xf]
        %v408 = vld [vmem:[%s406 + $0x4] sm:$0xf]
        %v409 = vld [vmem:[%s406 + $0x8] sm:$0xf]
        %v410 = vld [vmem:[%s406 + $0xc] sm:$0xf]
        %v415 = vunpack.c.l.b16 %v407
        %v416 = vunpack.c.l.b16 %v408
        %v417 = vunpack.c.l.b16 %v409
        %v418 = vunpack.c.l.b16 %v410
        %v419 = vpack.c.b16 %v416, %v415
        %v420 = vpack.c.b16 %v418, %v417
        %v424 = vsel %vm389, %v405, 0
        %426 = vmatpush.bf16.msra.mxu0 0
        %427 = vmatpush.bf16.msra.mxu0 0
        %428 = vmatpush.bf16.msra.mxu0 0
        %429 = vmatpush.bf16.msra.mxu0 0
        %430 = vmatpush.bf16.msra.mxu0 0
        %431 = vmatpush.bf16.msra.mxu0 0
        %432 = vmatpush.bf16.msra.mxu0 %v420
        %433 = vmatpush.bf16.msra.mxu0 %v419
        %434 = vmatmul.bf16.gmra.mxu0 %v424
        %v435 = vpop.f32.mrf.mxu0
        %v436 = vadd.f32 0.0, %v435
        %v437 = vpop.f32.mrf.mxu0
        %v438 = vadd.f32 0.0, %v437
        %439 = vdwg.mxu0
        %v444 = vunpack.c.l.b16 %v399
        %v445 = vunpack.c.l.b16 %v400
        %v446 = vunpack.c.l.b16 %v401
        %v447 = vunpack.c.l.b16 %v402
        %v448 = vpack.c.b16 %v445, %v444
        %v449 = vpack.c.b16 %v447, %v446
        %v453 = vsel %vm389, %v398, 0
        %455 = vmatpush.bf16.msra.mxu0 0
        %456 = vmatpush.bf16.msra.mxu0 0
        %457 = vmatpush.bf16.msra.mxu0 0
        %458 = vmatpush.bf16.msra.mxu0 0
        %459 = vmatpush.bf16.msra.mxu0 0
        %460 = vmatpush.bf16.msra.mxu0 0
        %461 = vmatpush.bf16.msra.mxu0 %v449
        %462 = vmatpush.bf16.msra.mxu0 %v448
        %463 = vmatmul.bf16.gmra.mxu0 %v453
        %v464 = vpop.f32.mrf.mxu0
        %v465 = vadd.f32 %v436, %v464
        %v466 = vpop.f32.mrf.mxu0
        %v467 = vadd.f32 %v438, %v466
        %468 = vdwg.mxu0
        %v469 = vld [vmem:[#allocation3 + $0x2] sm:$0xff]
        %v470 = vld [vmem:[#allocation3 + $0xa] sm:$0xff]
        %v471 = vpack.c.bf16 %v470, %v469
        %s472 = scalar_lea.vmem [#allocation5], 32
        %v473 = vld [vmem:[%s472] sm:$0xf]
        %v474 = vld [vmem:[%s472 + $0x4] sm:$0xf]
        %v475 = vld [vmem:[%s472 + $0x8] sm:$0xf]
        %v476 = vld [vmem:[%s472 + $0xc] sm:$0xf]
        %v481 = vunpack.c.l.b16 %v473
        %v482 = vunpack.c.l.b16 %v474
        %v483 = vunpack.c.l.b16 %v475
        %v484 = vunpack.c.l.b16 %v476
        %v485 = vpack.c.b16 %v482, %v481
        %v486 = vpack.c.b16 %v484, %v483
        %v490 = vsel %vm389, %v471, 0
        %492 = vmatpush.bf16.msra.mxu0 0
        %493 = vmatpush.bf16.msra.mxu0 0
        %494 = vmatpush.bf16.msra.mxu0 0
        %495 = vmatpush.bf16.msra.mxu0 0
        %496 = vmatpush.bf16.msra.mxu0 0
        %497 = vmatpush.bf16.msra.mxu0 0
        %498 = vmatpush.bf16.msra.mxu0 %v486
        %499 = vmatpush.bf16.msra.mxu0 %v485
        %500 = vmatmul.bf16.gmra.mxu0 %v490
        %v501 = vpop.f32.mrf.mxu0
        %v502 = vadd.f32 0.0, %v501
        %v503 = vpop.f32.mrf.mxu0
        %v504 = vadd.f32 0.0, %v503
        %505 = vdwg.mxu0
        %v506 = vadd.f32 %v465, %v502
        %v507 = vadd.f32 %v467, %v504
        %v508 = vld [vmem:[#allocation3 + $0x3] sm:$0xff]
        %v509 = vld [vmem:[#allocation3 + $0xb] sm:$0xff]
        %v510 = vpack.c.bf16 %v509, %v508
        %s511 = scalar_lea.vmem [#allocation5], 48
        %v512 = vld [vmem:[%s511] sm:$0xf]
        %v513 = vld [vmem:[%s511 + $0x4] sm:$0xf]
        %v514 = vld [vmem:[%s511 + $0x8] sm:$0xf]
        %v515 = vld [vmem:[%s511 + $0xc] sm:$0xf]
        %v520 = vunpack.c.l.b16 %v512
        %v521 = vunpack.c.l.b16 %v513
        %v522 = vunpack.c.l.b16 %v514
        %v523 = vunpack.c.l.b16 %v515
        %v524 = vpack.c.b16 %v521, %v520
        %v525 = vpack.c.b16 %v523, %v522
        %v529 = vsel %vm389, %v510, 0
        %531 = vmatpush.bf16.msra.mxu0 0
        %532 = vmatpush.bf16.msra.mxu0 0
        %533 = vmatpush.bf16.msra.mxu0 0
        %534 = vmatpush.bf16.msra.mxu0 0
        %535 = vmatpush.bf16.msra.mxu0 0
        %536 = vmatpush.bf16.msra.mxu0 0
        %537 = vmatpush.bf16.msra.mxu0 %v525
        %538 = vmatpush.bf16.msra.mxu0 %v524
        %539 = vmatmul.bf16.gmra.mxu0 %v529
        %v540 = vpop.f32.mrf.mxu0
        %v541 = vadd.f32 0.0, %v540
        %v542 = vpop.f32.mrf.mxu0
        %v543 = vadd.f32 0.0, %v542
        %544 = vdwg.mxu0
        %v545 = vadd.f32 %v506, %v541
        %v546 = vadd.f32 %v507, %v543
        %v547 = vld [vmem:[#allocation3 + $0x4] sm:$0xff]
        %v548 = vld [vmem:[#allocation3 + $0xc] sm:$0xff]
        %v549 = vpack.c.bf16 %v548, %v547
        %s550 = scalar_lea.vmem [#allocation5], 64
        %v551 = vld [vmem:[%s550] sm:$0xf]
        %v552 = vld [vmem:[%s550 + $0x4] sm:$0xf]
        %v553 = vld [vmem:[%s550 + $0x8] sm:$0xf]
        %v554 = vld [vmem:[%s550 + $0xc] sm:$0xf]
        %v559 = vunpack.c.l.b16 %v551
        %v560 = vunpack.c.l.b16 %v552
        %v561 = vunpack.c.l.b16 %v553
        %v562 = vunpack.c.l.b16 %v554
        %v563 = vpack.c.b16 %v560, %v559
        %v564 = vpack.c.b16 %v562, %v561
        %v568 = vsel %vm389, %v549, 0
        %570 = vmatpush.bf16.msra.mxu0 0
        %571 = vmatpush.bf16.msra.mxu0 0
        %572 = vmatpush.bf16.msra.mxu0 0
        %573 = vmatpush.bf16.msra.mxu0 0
        %574 = vmatpush.bf16.msra.mxu0 0
        %575 = vmatpush.bf16.msra.mxu0 0
        %576 = vmatpush.bf16.msra.mxu0 %v564
        %577 = vmatpush.bf16.msra.mxu0 %v563
        %578 = vmatmul.bf16.gmra.mxu0 %v568
        %v579 = vpop.f32.mrf.mxu0
        %v580 = vadd.f32 0.0, %v579
        %v581 = vpop.f32.mrf.mxu0
        %v582 = vadd.f32 0.0, %v581
        %583 = vdwg.mxu0
        %v584 = vadd.f32 %v545, %v580
        %v585 = vadd.f32 %v546, %v582
        %v586 = vld [vmem:[%s4] sm:$0x1]
        %v588 = vperm.slane %v586, 0
        %v590 = vadd.f32 %v584, %v588
        %v591 = vadd.f32 %v585, %v588
        %v592 = vmax.f32 %v590, 0.0
        %v593 = vmax.f32 %v591, 0.0
        %vm594 = vcmask 523264
        %595 = vst.msk [vmem:[#allocation4] sm:$0xff] %vm594, %v592
        %596 = vst.msk [vmem:[#allocation4 + $0x8] sm:$0xff] %vm594, %v593
        %v597 = vld [vmem:[#allocation4] ss:$2 sm:$0xff]
        %s598 = scalar_lea.vmem [#allocation4], 1
        %v599 = vld [vmem:[%s598] ss:$2 sm:$0xff]
        %v600 = vmax.f32 %v597, %v599
        %v601 = vpack.c.bf16 %v600, %v600
        %vm602 = vcmask 519168
        %603 = vst.msk [vmem:[%s239] sm:$0xf] %vm602, %v601
        %p604 = scmp.lt.s32.totalorder %s17, 1
        %s605 = scalar_select %p604, %s17, 1
        %s606 = smul.addr %s605, 4
        %s607 = scalar_lea.vmem %s5, %s606
        // Predicated region
        $region45: #{artifacts_detection_forward.3} parent=39 // pred_check
          %p608 = pneg %p145
        $region46: #{artifacts_detection_forward.3} parent=39 // pred_check_branch
          %610 = sbr.rel (%p608) target = $region48
        $region47: #{artifacts_detection_forward.3} parent=39 // pred_region
          _
        $region48: #{artifacts_detection_forward.3} parent=39 // pred_fallthru
          _
      $region40: #{artifacts_detection_forward.3} parent=5 // pred_fallthru
        _
      %p611 = scmp.le.s32.totalorder 2, %s12
      // Predicated region
      $region49: #{artifacts_detection_forward.3} parent=5 // pred_check
        %p612 = pneg %p611
      $region50: #{artifacts_detection_forward.3} parent=5 // pred_check_branch
        %614 = sbr.rel (%p612) target = $region52
      $region51: #{artifacts_detection_forward.3} parent=5 // pred_region
        %s615 = ssub.s32 %s12, 2
        // Predicated region
        $region53: #{artifacts_detection_forward.3} parent=51 // pred_check
          %p616 = pneg %p151
        $region54: #{artifacts_detection_forward.3} parent=51 // pred_check_branch
          %618 = sbr.rel (%p616) target = $region56
        $region55: #{artifacts_detection_forward.3} parent=51 // pred_region
          %p619 = scmp.lt.s32.totalorder %s18, 1
          %s620 = scalar_select %p619, %s18, 1
          %s621 = smul.addr %s620, 4
          %s622 = scalar_lea.vmem %s5, %s621
        $region56: #{artifacts_detection_forward.3} parent=51 // pred_fallthru
          _
      $region52: #{artifacts_detection_forward.3} parent=5 // pred_fallthru
        _
    $region6: #{artifacts_detection_forward.3} parent=1 // loop_footer
      %s16 = sadd.s32 1, %s12
    $region7: #{artifacts_detection_forward.3} parent=1 // loop_footer_branch
      %11 = sbr.rel target = $region3
    $region8: #{artifacts_detection_forward.3} parent=1 // loop_exit
      _
    %623 = vsyncpa [#allocation6], 1
    %s624 = scalar_lea.sflag [#allocation6], 1
    %625 = vsyncpa %s624, 1

// kernel: artifacts_detection_forward.4
$region0: #{artifacts_detection_forward.4}
  #allocation0 [shape = 'u32[]', space=smem, size = 0x4, offset = 0x4, fixed_abs, tag = 'smem constant byte address 0x4 - core index']
  #allocation1 [shape = 'u32[72,128]{1,0:T(1,128)}', space=vmem, size = 0x9000, scoped, tag = 'internal scratch']
  #allocation2 [shape = 'f32[10,64]{1,0:T(8,128)}', space=vmem, size = 0x2000, scoped, tag = 'scratch operand']
  #allocation3 [shape = 'f32[10,128]{1,0:T(8,128)}', space=vmem, size = 0x2000, scoped, tag = 'scratch operand']
  #allocation4 [shape = 'f32[10,128]{1,0:T(8,128)}', space=vmem, size = 0x2000, scoped, tag = 'scratch operand']
  #allocation5 [shape = 'f32[8,128]{1,0:T(8,128)}', space=vmem, size = 0x1000, scoped, tag = 'scratch operand']
  %s0 = inlined_call_operand.vmem [shape: bf16[2,8,64], index: 0, kind: input, shape index: {}]
  %s1 = inlined_call_operand.hbm [shape: bf16[3,64,128], index: 1, kind: input, shape index: {}]
  %s2 = inlined_call_operand.vmem [shape: f32[1,128], index: 2, kind: input, shape index: {}]
  %s3 = inlined_call_operand.hbm [shape: bf16[3,128,128], index: 3, kind: input, shape index: {}]
  %s4 = inlined_call_operand.vmem [shape: f32[1,128], index: 4, kind: input, shape index: {}]
  %s5 = inlined_call_operand.hbm [shape: bf16[3,128,128], index: 5, kind: input, shape index: {}]
  %s6 = inlined_call_operand.vmem [shape: f32[1,128], index: 6, kind: input, shape index: {}]
  %s7 = inlined_call_operand.vmem [shape: bf16[2,4,128], index: 7, kind: output, shape index: {}]
  %s8 = sld [smem:[#allocation0]]
  $region73: #{artifacts_detection_forward.4} parent=0
    _
  %s10 = ssub.s32 1, %s8
  %s11 = scalar_select 0, %s10, %s8
  $region1: #{artifacts_detection_forward.4} parent=0
    #allocation6 [shape = 'u8[49152]{0}', space=vmem, size = 0xc000, scoped, tag = 'input window, operand 1, single buffered']
    #allocation7 [shape = 's32[2]{0}', space=sflag, size = 0x8, scoped, tag = 'scoped memory for artifacts_detection_forward.4']
    #allocation8 [shape = 'u8[98304]{0}', space=vmem, size = 0x18000, scoped, tag = 'input window, operand 3, single buffered']
    #allocation9 [shape = 's32[1]{0}', space=sflag, size = 0x4, scoped, tag = 'scoped memory for artifacts_detection_forward.4']
    #allocation10 [shape = 'u8[98304]{0}', space=vmem, size = 0x18000, scoped, tag = 'input window, operand 5, single buffered']
    %12 = vsyncpa [#allocation7], 0
    %13 = vsyncpa [#allocation9], 0
    loop: start=0, step=1, limit=4
    $region2: #{artifacts_detection_forward.4} parent=1 // loop_pre_header
      _
    $region3: #{artifacts_detection_forward.4} parent=1 // loop_header
      %s15 = sphi 0, %s19
      %p16 = scmp.ge.s32.totalorder %s15, 4
      %s25 = sphi 0, %s27
      %s28 = sphi 0, %s25
      %s29 = sphi 0, %s28
      %s45 = sphi 0, %s29
      %s49 = sphi 0, %s49
      %s51 = sphi 0, %s49
      %s52 = sphi 0, %s51
      %s66 = sphi 0, %s52
      %s70 = sphi 0, %s70
      %s72 = sphi 0, %s70
      %s73 = sphi 0, %s72
      %s87 = sphi 0, %s73
      %s91 = sphi 0, %s91
      %s93 = sphi 0, %s91
      %s94 = sphi 0, %s93
      %s108 = sphi 0, %s94
      %s112 = sphi 0, %s112
      %s114 = sphi 0, %s112
      %s115 = sphi 0, %s114
      %s129 = sphi 0, %s115
      %s133 = sphi 0, %s133
      %s135 = sphi 0, %s133
      %s136 = sphi 0, %s135
      %s150 = sphi 0, %s136
      %s154 = sphi 0, %s154
      %s156 = sphi 0, %s154
      %s157 = sphi 0, %s156
      %s171 = sphi 0, %s157
      %s177 = sphi 0, %s179
      %s180 = sphi 0, %s177
      %s181 = sphi 0, %s180
      %s197 = sphi 0, %s181
    $region4: #{artifacts_detection_forward.4} parent=1 // loop_header_branch
      %18 = sbr.rel (%p16) target = $region8
    $region5: #{artifacts_detection_forward.4} parent=1 // loop_body
      %s20 = ssub.s32 %s15, 1
      %s21 = ssub.s32 %s15, 2
      %s22 = sadd.s32 %s15, 1
      %s23 = ssub.s32 %s15, %s22
      %p24 = scmp.eq.s32.totalorder %s23, 0
      %s26 = sadd.s32 %s25, 1
      %s27 = scalar_select %p24, %s25, %s26
      %p30 = pneg %p24
      %p31 = scmp.eq.s32.totalorder %s15, 1
      %p32 = por %p30, %p31
      %p33 = scmp.ne.s32.totalorder %s25, %s28
      %p34 = scmp.eq.s32.totalorder %s15, 0
      %p35 = por %p33, %p34
      %p36 = scmp.ne.s32.totalorder %s25, %s28
      %p37 = scmp.eq.s32.totalorder %s20, 1
      %p38 = por %p36, %p37
      %p39 = scmp.ne.s32.totalorder %s28, %s29
      %p40 = scmp.eq.s32.totalorder %s20, 0
      %p41 = por %p39, %p40
      %p42 = scmp.ne.s32.totalorder %s28, %s29
      %p43 = scmp.eq.s32.totalorder %s21, 1
      %p44 = por %p42, %p43
      %p46 = scmp.ne.s32.totalorder %s29, %s45
      %p47 = scmp.eq.s32.totalorder %s21, 0
      %p48 = por %p46, %p47
      %s50 = sadd.s32 %s49, 1
      %p53 = scmp.eq.s32.totalorder %s15, 1
      %p54 = scmp.ne.s32.totalorder %s49, %s51
      %p55 = scmp.eq.s32.totalorder %s15, 0
      %p56 = por %p54, %p55
      %p57 = scmp.ne.s32.totalorder %s49, %s51
      %p58 = scmp.eq.s32.totalorder %s20, 1
      %p59 = por %p57, %p58
      %p60 = scmp.ne.s32.totalorder %s51, %s52
      %p61 = scmp.eq.s32.totalorder %s20, 0
      %p62 = por %p60, %p61
      %p63 = scmp.ne.s32.totalorder %s51, %s52
      %p64 = scmp.eq.s32.totalorder %s21, 1
      %p65 = por %p63, %p64
      %p67 = scmp.ne.s32.totalorder %s52, %s66
      %p68 = scmp.eq.s32.totalorder %s21, 0
      %p69 = por %p67, %p68
      %s71 = sadd.s32 %s70, 1
      %p74 = scmp.eq.s32.totalorder %s15, 1
      %p75 = scmp.ne.s32.totalorder %s70, %s72
      %p76 = scmp.eq.s32.totalorder %s15, 0
      %p77 = por %p75, %p76
      %p78 = scmp.ne.s32.totalorder %s70, %s72
      %p79 = scmp.eq.s32.totalorder %s20, 1
      %p80 = por %p78, %p79
      %p81 = scmp.ne.s32.totalorder %s72, %s73
      %p82 = scmp.eq.s32.totalorder %s20, 0
      %p83 = por %p81, %p82
      %p84 = scmp.ne.s32.totalorder %s72, %s73
      %p85 = scmp.eq.s32.totalorder %s21, 1
      %p86 = por %p84, %p85
      %p88 = scmp.ne.s32.totalorder %s73, %s87
      %p89 = scmp.eq.s32.totalorder %s21, 0
      %p90 = por %p88, %p89
      %s92 = sadd.s32 %s91, 1
      %p95 = scmp.eq.s32.totalorder %s15, 1
      %p96 = scmp.ne.s32.totalorder %s91, %s93
      %p97 = scmp.eq.s32.totalorder %s15, 0
      %p98 = por %p96, %p97
      %p99 = scmp.ne.s32.totalorder %s91, %s93
      %p100 = scmp.eq.s32.totalorder %s20, 1
      %p101 = por %p99, %p100
      %p102 = scmp.ne.s32.totalorder %s93, %s94
      %p103 = scmp.eq.s32.totalorder %s20, 0
      %p104 = por %p102, %p103
      %p105 = scmp.ne.s32.totalorder %s93, %s94
      %p106 = scmp.eq.s32.totalorder %s21, 1
      %p107 = por %p105, %p106
      %p109 = scmp.ne.s32.totalorder %s94, %s108
      %p110 = scmp.eq.s32.totalorder %s21, 0
      %p111 = por %p109, %p110
      %s113 = sadd.s32 %s112, 1
      %p116 = scmp.eq.s32.totalorder %s15, 1
      %p117 = scmp.ne.s32.totalorder %s112, %s114
      %p118 = scmp.eq.s32.totalorder %s15, 0
      %p119 = por %p117, %p118
      %p120 = scmp.ne.s32.totalorder %s112, %s114
      %p121 = scmp.eq.s32.totalorder %s20, 1
      %p122 = por %p120, %p121
      %p123 = scmp.ne.s32.totalorder %s114, %s115
      %p124 = scmp.eq.s32.totalorder %s20, 0
      %p125 = por %p123, %p124
      %p126 = scmp.ne.s32.totalorder %s114, %s115
      %p127 = scmp.eq.s32.totalorder %s21, 1
      %p128 = por %p126, %p127
      %p130 = scmp.ne.s32.totalorder %s115, %s129
      %p131 = scmp.eq.s32.totalorder %s21, 0
      %p132 = por %p130, %p131
      %s134 = sadd.s32 %s133, 1
      %p137 = scmp.eq.s32.totalorder %s15, 1
      %p138 = scmp.ne.s32.totalorder %s133, %s135
      %p139 = scmp.eq.s32.totalorder %s15, 0
      %p140 = por %p138, %p139
      %p141 = scmp.ne.s32.totalorder %s133, %s135
      %p142 = scmp.eq.s32.totalorder %s20, 1
      %p143 = por %p141, %p142
      %p144 = scmp.ne.s32.totalorder %s135, %s136
      %p145 = scmp.eq.s32.totalorder %s20, 0
      %p146 = por %p144, %p145
      %p147 = scmp.ne.s32.totalorder %s135, %s136
      %p148 = scmp.eq.s32.totalorder %s21, 1
      %p149 = por %p147, %p148
      %p151 = scmp.ne.s32.totalorder %s136, %s150
      %p152 = scmp.eq.s32.totalorder %s21, 0
      %p153 = por %p151, %p152
      %s155 = sadd.s32 %s154, 1
      %p158 = scmp.eq.s32.totalorder %s15, 1
      %p159 = scmp.ne.s32.totalorder %s154, %s156
      %p160 = scmp.eq.s32.totalorder %s15, 0
      %p161 = por %p159, %p160
      %p162 = scmp.ne.s32.totalorder %s154, %s156
      %p163 = scmp.eq.s32.totalorder %s20, 1
      %p164 = por %p162, %p163
      %p165 = scmp.ne.s32.totalorder %s156, %s157
      %p166 = scmp.eq.s32.totalorder %s20, 0
      %p167 = por %p165, %p166
      %p168 = scmp.ne.s32.totalorder %s156, %s157
      %p169 = scmp.eq.s32.totalorder %s21, 1
      %p170 = por %p168, %p169
      %p172 = scmp.ne.s32.totalorder %s157, %s171
      %p173 = scmp.eq.s32.totalorder %s21, 0
      %p174 = por %p172, %p173
      %s175 = ssub.s32 %s15, %s22
      %p176 = scmp.eq.s32.totalorder %s175, 0
      %s178 = sadd.s32 %s177, 1
      %s179 = scalar_select %p176, %s177, %s178
      %p182 = pneg %p176
      %p183 = scmp.eq.s32.totalorder %s15, 1
      %p184 = por %p182, %p183
      %p185 = scmp.ne.s32.totalorder %s177, %s180
      %p186 = scmp.eq.s32.totalorder %s15, 0
      %p187 = por %p185, %p186
      %p188 = scmp.ne.s32.totalorder %s177, %s180
      %p189 = scmp.eq.s32.totalorder %s20, 1
      %p190 = por %p188, %p189
      %p191 = scmp.ne.s32.totalorder %s180, %s181
      %p192 = scmp.eq.s32.totalorder %s20, 0
      %p193 = por %p191, %p192
      %p194 = scmp.ne.s32.totalorder %s180, %s181
      %p195 = scmp.eq.s32.totalorder %s21, 1
      %p196 = por %p194, %p195
      %p198 = scmp.ne.s32.totalorder %s181, %s197
      %p199 = scmp.eq.s32.totalorder %s21, 0
      %p200 = por %p198, %p199
      %p201 = scmp.le.s32.totalorder 1, %s15
      %p202 = scmp.lt.s32.totalorder %s15, 3
      %p203 = pnand %p201, %p202
      %p204 = pneg %p203
      // Predicated region
      $region9: #{artifacts_detection_forward.4} parent=5 // pred_check
        _
      $region10: #{artifacts_detection_forward.4} parent=5 // pred_check_branch
        %206 = sbr.rel (%p203) target = $region12
      $region11: #{artifacts_detection_forward.4} parent=5 // pred_region
        %s207 = ssub.s32 %s15, 1
        // Predicated region
        $region13: #{artifacts_detection_forward.4} parent=11 // pred_check
          %p208 = pneg %p62
        $region14: #{artifacts_detection_forward.4} parent=11 // pred_check_branch
          %210 = sbr.rel (%p208) target = $region16
        $region15: #{artifacts_detection_forward.4} parent=11 // pred_region
          %212 = vsyncadd [#allocation7], 0
          %s213 = sshll.u32 %s1, 4
          %s214 = int_to_ptr.hbm [resolvable:$true] %s213
          %s215 = sshll.u32 [#allocation6], 4
          %s216 = int_to_ptr.vmem [resolvable:$true] %s215
          %221 = dma.hbm_to_vmem [thread:$0]  %s214, 1536, %s216, [#allocation7], 64, 64, 4
        $region16: #{artifacts_detection_forward.4} parent=11 // pred_fallthru
          _
        // Predicated region
        $region17: #{artifacts_detection_forward.4} parent=11 // pred_check
          %p222 = pneg %p83
        $region18: #{artifacts_detection_forward.4} parent=11 // pred_check_branch
          %224 = sbr.rel (%p222) target = $region20
        $region19: #{artifacts_detection_forward.4} parent=11 // pred_region
          _
        $region20: #{artifacts_detection_forward.4} parent=11 // pred_fallthru
          _
        // Predicated region
        $region21: #{artifacts_detection_forward.4} parent=11 // pred_check
          %p225 = pneg %p104
        $region22: #{artifacts_detection_forward.4} parent=11 // pred_check_branch
          %227 = sbr.rel (%p225) target = $region24
        $region23: #{artifacts_detection_forward.4} parent=11 // pred_region
          %229 = vsyncadd [#allocation9], 0
          %s230 = sshll.u32 %s3, 4
          %s231 = int_to_ptr.hbm [resolvable:$true] %s230
          %s232 = sshll.u32 [#allocation8], 4
          %s233 = int_to_ptr.vmem [resolvable:$true] %s232
          %238 = dma.hbm_to_vmem [thread:$0]  %s231, 3072, %s233, [#allocation9], 64, 64, 4
        $region24: #{artifacts_detection_forward.4} parent=11 // pred_fallthru
          _
        // Predicated region
        $region25: #{artifacts_detection_forward.4} parent=11 // pred_check
          %p239 = pneg %p125
        $region26: #{artifacts_detection_forward.4} parent=11 // pred_check_branch
          %241 = sbr.rel (%p239) target = $region28
        $region27: #{artifacts_detection_forward.4} parent=11 // pred_region
          _
        $region28: #{artifacts_detection_forward.4} parent=11 // pred_fallthru
          _
        // Predicated region
        $region29: #{artifacts_detection_forward.4} parent=11 // pred_check
          %p242 = pneg %p146
        $region30: #{artifacts_detection_forward.4} parent=11 // pred_check_branch
          %244 = sbr.rel (%p242) target = $region32
        $region31: #{artifacts_detection_forward.4} parent=11 // pred_region
          %246 = vsyncadd [#allocation9], 0
          %s247 = sshll.u32 %s5, 4
          %s248 = int_to_ptr.hbm [resolvable:$true] %s247
          %s249 = sshll.u32 [#allocation10], 4
          %s250 = int_to_ptr.vmem [resolvable:$true] %s249
          %255 = dma.hbm_to_vmem [thread:$0]  %s248, 3072, %s250, [#allocation9], 64, 64, 4
        $region32: #{artifacts_detection_forward.4} parent=11 // pred_fallthru
          _
        // Predicated region
        $region33: #{artifacts_detection_forward.4} parent=11 // pred_check
          %p256 = pneg %p167
        $region34: #{artifacts_detection_forward.4} parent=11 // pred_check_branch
          %258 = sbr.rel (%p256) target = $region36
        $region35: #{artifacts_detection_forward.4} parent=11 // pred_region
          _
        $region36: #{artifacts_detection_forward.4} parent=11 // pred_fallthru
          _
      $region12: #{artifacts_detection_forward.4} parent=5 // pred_fallthru
        _
      %p259 = scmp.lt.s32.totalorder %s15, 2
      // Predicated region
      $region37: #{artifacts_detection_forward.4} parent=5 // pred_check
        %p260 = pneg %p259
      $region38: #{artifacts_detection_forward.4} parent=5 // pred_check_branch
        %262 = sbr.rel (%p260) target = $region40
      $region39: #{artifacts_detection_forward.4} parent=5 // pred_region
        // Predicated region
        $region41: #{artifacts_detection_forward.4} parent=39 // pred_check
          %p263 = pneg %p35
        $region42: #{artifacts_detection_forward.4} parent=39 // pred_check_branch
          %265 = sbr.rel (%p263) target = $region44
        $region43: #{artifacts_detection_forward.4} parent=39 // pred_region
          %p266 = scmp.lt.s32.totalorder %s15, 1
          %s267 = scalar_select %p266, %s15, 1
          %s268 = smul.addr %s267, 4
          %s269 = scalar_lea.vmem %s0, %s268
        $region44: #{artifacts_detection_forward.4} parent=39 // pred_fallthru
          _
      $region40: #{artifacts_detection_forward.4} parent=5 // pred_fallthru
        _
      %p270 = scmp.le.s32.totalorder 1, %s15
      %p271 = scmp.lt.s32.totalorder %s15, 3
      %p272 = pnand %p270, %p271
      %p273 = pneg %p272
      // Predicated region
      $region45: #{artifacts_detection_forward.4} parent=5 // pred_check
        _
      $region46: #{artifacts_detection_forward.4} parent=5 // pred_check_branch
        %275 = sbr.rel (%p272) target = $region48
      $region47: #{artifacts_detection_forward.4} parent=5 // pred_region
        %s276 = ssub.s32 %s15, 1
        // Predicated region
        $region49: #{artifacts_detection_forward.4} parent=47 // pred_check
          %p277 = pneg %p62
        $region50: #{artifacts_detection_forward.4} parent=47 // pred_check_branch
          %279 = sbr.rel (%p277) target = $region52
        $region51: #{artifacts_detection_forward.4} parent=47 // pred_region
          %281 = dma.done [#allocation7], 1536
        $region52: #{artifacts_detection_forward.4} parent=47 // pred_fallthru
          _
        // Predicated region
        $region53: #{artifacts_detection_forward.4} parent=47 // pred_check
          %p282 = pneg %p104
        $region54: #{artifacts_detection_forward.4} parent=47 // pred_check_branch
          %284 = sbr.rel (%p282) target = $region56
        $region55: #{artifacts_detection_forward.4} parent=47 // pred_region
          %286 = dma.done [#allocation9], 3072
        $region56: #{artifacts_detection_forward.4} parent=47 // pred_fallthru
          _
        // Predicated region
        $region57: #{artifacts_detection_forward.4} parent=47 // pred_check
          %p287 = pneg %p146
        $region58: #{artifacts_detection_forward.4} parent=47 // pred_check_branch
          %289 = sbr.rel (%p287) target = $region60
        $region59: #{artifacts_detection_forward.4} parent=47 // pred_region
          %291 = dma.done [#allocation9], 3072
        $region60: #{artifacts_detection_forward.4} parent=47 // pred_fallthru
          _
        %p292 = scmp.lt.s32.totalorder %s20, 1
        %s293 = scalar_select %p292, %s20, 1
        %s294 = smul.addr %s293, 4
        %s295 = scalar_lea.vmem %s0, %s294
        %p296 = pneg %p41
        %p297 = pneg %p38
        %p298 = pneg %p62
        %p299 = pneg %p59
        %p300 = pneg %p83
        %p301 = pneg %p80
        %p302 = pneg %p104
        %p303 = pneg %p101
        %p304 = pneg %p125
        %p305 = pneg %p122
        %p306 = pneg %p146
        %p307 = pneg %p143
        %p308 = pneg %p167
        %p309 = pneg %p164
        %p310 = pneg %p193
        %p311 = pneg %p190
        %p312 = scmp.lt.s32.totalorder %s20, 1
        %s313 = scalar_select %p312, %s20, 1
        %s314 = smul.addr %s313, 2
        %s315 = scalar_lea.vmem %s7, %s314
        %p316 = scmp.lt.s32.totalorder %s20, 1
        %s317 = scalar_select %p316, %s20, 1
        %s318 = smul.addr %s317, 4
        %s319 = scalar_lea.vmem %s0, %s318
        %p320 = scmp.lt.s32.totalorder %s20, 1
        %s321 = scalar_select %p320, %s20, 1
        %s322 = smul.addr %s321, 2
        %s323 = scalar_lea.vmem %s7, %s322
        %v325 = vld [vmem:[%s319] sm:$0xf]
        %vm326 = vcmask 523264
        %327 = vst.msk [vmem:[#allocation2] sm:$0xff] %vm326, 0.0
        %vm328 = vcmask 517120
        %329 = vst.msk [vmem:[#allocation2 + $0x8] sm:$0x3] %vm328, 0.0
        %v330 = vunpack.c.l.bf16 %v325
        %331 = vst.msk [vmem:[#allocation2 + $0x1] sm:$0xff] %vm326, %v330
        %v332 = vld [vmem:[#allocation2] sm:$0xff]
        %v333 = vpack.c.bf16 %v332, %v332
        %v334 = vld [vmem:[#allocation6] sm:$0xf]
        %v335 = vld [vmem:[#allocation6 + $0x4] sm:$0xf]
        %v336 = vld [vmem:[#allocation6 + $0x8] sm:$0xf]
        %v337 = vld [vmem:[#allocation6 + $0xc] sm:$0xf]
        %v338 = vld [vmem:[#allocation6 + $0x10] sm:$0xf]
        %v339 = vld [vmem:[#allocation6 + $0x14] sm:$0xf]
        %v340 = vld [vmem:[#allocation6 + $0x18] sm:$0xf]
        %v341 = vld [vmem:[#allocation6 + $0x1c] sm:$0xf]
        %v342 = vld [vmem:[#allocation2 + $0x1] sm:$0xff]
        %v343 = vpack.c.bf16 %v342, %v342
        %s344 = scalar_lea.vmem [#allocation6], 32
        %v345 = vld [vmem:[%s344] sm:$0xf]
        %v346 = vld [vmem:[%s344 + $0x4] sm:$0xf]
        %v347 = vld [vmem:[%s344 + $0x8] sm:$0xf]
        %v348 = vld [vmem:[%s344 + $0xc] sm:$0xf]
        %v349 = vld [vmem:[%s344 + $0x10] sm:$0xf]
        %v350 = vld [vmem:[%s344 + $0x14] sm:$0xf]
        %v351 = vld [vmem:[%s344 + $0x18] sm:$0xf]
        %v352 = vld [vmem:[%s344 + $0x1c] sm:$0xf]
        %v361 = vunpack.c.l.b16 %v345
        %v362 = vunpack.c.l.b16 %v346
        %v363 = vunpack.c.l.b16 %v347
        %v364 = vunpack.c.l.b16 %v348
        %v365 = vunpack.c.l.b16 %v349
        %v366 = vunpack.c.l.b16 %v350
        %v367 = vunpack.c.l.b16 %v351
        %v368 = vunpack.c.l.b16 %v352
        %v369 = vpack.c.b16 %v362, %v361
        %v370 = vpack.c.b16 %v364, %v363
        %v371 = vpack.c.b16 %v366, %v365
        %v372 = vpack.c.b16 %v368, %v367
        %v378 = vsel %vm326, %v343, 0
        %380 = vmatpush.bf16.msra.mxu0 0
        %381 = vmatpush.bf16.msra.mxu0 0
        %382 = vmatpush.bf16.msra.mxu0 0
        %383 = vmatpush.bf16.msra.mxu0 0
        %384 = vmatpush.bf16.msra.mxu0 %v372
        %385 = vmatpush.bf16.msra.mxu0 %v371
        %386 = vmatpush.bf16.msra.mxu0 %v370
        %387 = vmatpush.bf16.msra.mxu0 %v369
        %388 = vmatmul.bf16.gmra.mxu0 %v378
        %v389 = vpop.f32.mrf.mxu0
        %v390 = vadd.f32 0.0, %v389
        %v391 = vpop.f32.mrf.mxu0
        %392 = vdwg.mxu0
        %v401 = vunpack.c.l.b16 %v334
        %v402 = vunpack.c.l.b16 %v335
        %v403 = vunpack.c.l.b16 %v336
        %v404 = vunpack.c.l.b16 %v337
        %v405 = vunpack.c.l.b16 %v338
        %v406 = vunpack.c.l.b16 %v339
        %v407 = vunpack.c.l.b16 %v340
        %v408 = vunpack.c.l.b16 %v341
        %v409 = vpack.c.b16 %v402, %v401
        %v410 = vpack.c.b16 %v404, %v403
        %v411 = vpack.c.b16 %v406, %v405
        %v412 = vpack.c.b16 %v408, %v407
        %v418 = vsel %vm326, %v333, 0
        %420 = vmatpush.bf16.msra.mxu0 0
        %421 = vmatpush.bf16.msra.mxu0 0
        %422 = vmatpush.bf16.msra.mxu0 0
        %423 = vmatpush.bf16.msra.mxu0 0
        %424 = vmatpush.bf16.msra.mxu0 %v412
        %425 = vmatpush.bf16.msra.mxu0 %v411
        %426 = vmatpush.bf16.msra.mxu0 %v410
        %427 = vmatpush.bf16.msra.mxu0 %v409
        %428 = vmatmul.bf16.gmra.mxu0 %v418
        %v429 = vpop.f32.mrf.mxu0
        %v430 = vadd.f32 %v390, %v429
        %v431 = vpop.f32.mrf.mxu0
        %432 = vdwg.mxu0
        %v433 = vld [vmem:[#allocation2 + $0x2] sm:$0xff]
        %v434 = vpack.c.bf16 %v433, %v433
        %s435 = scalar_lea.vmem [#allocation6], 64
        %v436 = vld [vmem:[%s435] sm:$0xf]
        %v437 = vld [vmem:[%s435 + $0x4] sm:$0xf]
        %v438 = vld [vmem:[%s435 + $0x8] sm:$0xf]
        %v439 = vld [vmem:[%s435 + $0xc] sm:$0xf]
        %v440 = vld [vmem:[%s435 + $0x10] sm:$0xf]
        %v441 = vld [vmem:[%s435 + $0x14] sm:$0xf]
        %v442 = vld [vmem:[%s435 + $0x18] sm:$0xf]
        %v443 = vld [vmem:[%s435 + $0x1c] sm:$0xf]
        %v452 = vunpack.c.l.b16 %v436
        %v453 = vunpack.c.l.b16 %v437
        %v454 = vunpack.c.l.b16 %v438
        %v455 = vunpack.c.l.b16 %v439
        %v456 = vunpack.c.l.b16 %v440
        %v457 = vunpack.c.l.b16 %v441
        %v458 = vunpack.c.l.b16 %v442
        %v459 = vunpack.c.l.b16 %v443
        %v460 = vpack.c.b16 %v453, %v452
        %v461 = vpack.c.b16 %v455, %v454
        %v462 = vpack.c.b16 %v457, %v456
        %v463 = vpack.c.b16 %v459, %v458
        %v469 = vsel %vm326, %v434, 0
        %471 = vmatpush.bf16.msra.mxu0 0
        %472 = vmatpush.bf16.msra.mxu0 0
        %473 = vmatpush.bf16.msra.mxu0 0
        %474 = vmatpush.bf16.msra.mxu0 0
        %475 = vmatpush.bf16.msra.mxu0 %v463
        %476 = vmatpush.bf16.msra.mxu0 %v462
        %477 = vmatpush.bf16.msra.mxu0 %v461
        %478 = vmatpush.bf16.msra.mxu0 %v460
        %479 = vmatmul.bf16.gmra.mxu0 %v469
        %v480 = vpop.f32.mrf.mxu0
        %v481 = vadd.f32 0.0, %v480
        %v482 = vpop.f32.mrf.mxu0
        %483 = vdwg.mxu0
        %v484 = vadd.f32 %v430, %v481
        %v485 = vld [vmem:[%s2] sm:$0x1]
        %v487 = vperm.slane %v485, 0
        %v489 = vadd.f32 %v484, %v487
        %v490 = vmax.f32 %v489, 0.0
        %491 = vst [vmem:[#allocation3] sm:$0xff] 0.0
        %492 = vst [vmem:[#allocation3 + $0x8] sm:$0x3] 0.0
        %493 = vst [vmem:[#allocation3 + $0x1] sm:$0xff] %v490
        %v494 = vld [vmem:[#allocation3] sm:$0xff]
        %v495 = vpack.c.bf16 %v494, %v494
        %v496 = vld [vmem:[#allocation8] sm:$0xf]
        %v497 = vld [vmem:[#allocation8 + $0x4] sm:$0xf]
        %v498 = vld [vmem:[#allocation8 + $0x8] sm:$0xf]
        %v499 = vld [vmem:[#allocation8 + $0xc] sm:$0xf]
        %v500 = vld [vmem:[#allocation8 + $0x10] sm:$0xf]
        %v501 = vld [vmem:[#allocation8 + $0x14] sm:$0xf]
        %v502 = vld [vmem:[#allocation8 + $0x18] sm:$0xf]
        %v503 = vld [vmem:[#allocation8 + $0x1c] sm:$0xf]
        %v504 = vld [vmem:[#allocation8 + $0x20] sm:$0xf]
        %v505 = vld [vmem:[#allocation8 + $0x24] sm:$0xf]
        %v506 = vld [vmem:[#allocation8 + $0x28] sm:$0xf]
        %v507 = vld [vmem:[#allocation8 + $0x2c] sm:$0xf]
        %v508 = vld [vmem:[#allocation8 + $0x30] sm:$0xf]
        %v509 = vld [vmem:[#allocation8 + $0x34] sm:$0xf]
        %v510 = vld [vmem:[#allocation8 + $0x38] sm:$0xf]
        %v511 = vld [vmem:[#allocation8 + $0x3c] sm:$0xf]
        %v512 = vld [vmem:[#allocation3 + $0x1] sm:$0xff]
        %v513 = vpack.c.bf16 %v512, %v512
        %s514 = scalar_lea.vmem [#allocation8], 64
        %v515 = vld [vmem:[%s514] sm:$0xf]
        %v516 = vld [vmem:[%s514 + $0x4] sm:$0xf]
        %v517 = vld [vmem:[%s514 + $0x8] sm:$0xf]
        %v518 = vld [vmem:[%s514 + $0xc] sm:$0xf]
        %v519 = vld [vmem:[%s514 + $0x10] sm:$0xf]
        %v520 = vld [vmem:[%s514 + $0x14] sm:$0xf]
        %v521 = vld [vmem:[%s514 + $0x18] sm:$0xf]
        %v522 = vld [vmem:[%s514 + $0x1c] sm:$0xf]
        %v523 = vld [vmem:[%s514 + $0x20] sm:$0xf]
        %v524 = vld [vmem:[%s514 + $0x24] sm:$0xf]
        %v525 = vld [vmem:[%s514 + $0x28] sm:$0xf]
        %v526 = vld [vmem:[%s514 + $0x2c] sm:$0xf]
        %v527 = vld [vmem:[%s514 + $0x30] sm:$0xf]
        %v528 = vld [vmem:[%s514 + $0x34] sm:$0xf]
        %v529 = vld [vmem:[%s514 + $0x38] sm:$0xf]
        %v530 = vld [vmem:[%s514 + $0x3c] sm:$0xf]
        %v547 = vunpack.c.l.b16 %v515
        %v548 = vunpack.c.l.b16 %v516
        %v549 = vunpack.c.l.b16 %v517
        %v550 = vunpack.c.l.b16 %v518
        %v551 = vunpack.c.l.b16 %v519
        %v552 = vunpack.c.l.b16 %v520
        %v553 = vunpack.c.l.b16 %v521
        %v554 = vunpack.c.l.b16 %v522
        %v555 = vunpack.c.l.b16 %v523
        %v556 = vunpack.c.l.b16 %v524
        %v557 = vunpack.c.l.b16 %v525
        %v558 = vunpack.c.l.b16 %v526
        %v559 = vunpack.c.l.b16 %v527
        %v560 = vunpack.c.l.b16 %v528
        %v561 = vunpack.c.l.b16 %v529
        %v562 = vunpack.c.l.b16 %v530
        %v563 = vpack.c.b16 %v548, %v547
        %v564 = vpack.c.b16 %v550, %v549
        %v565 = vpack.c.b16 %v552, %v551
        %v566 = vpack.c.b16 %v554, %v553
        %v567 = vpack.c.b16 %v556, %v555
        %v568 = vpack.c.b16 %v558, %v557
        %v569 = vpack.c.b16 %v560, %v559
        %v570 = vpack.c.b16 %v562, %v561
        %579 = vmatpush.bf16.msra.mxu0 %v570
        %580 = vmatpush.bf16.msra.mxu0 %v569
        %581 = vmatpush.bf16.msra.mxu0 %v568
        %582 = vmatpush.bf16.msra.mxu0 %v567
        %583 = vmatpush.bf16.msra.mxu0 %v566
        %584 = vmatpush.bf16.msra.mxu0 %v565
        %585 = vmatpush.bf16.msra.mxu0 %v564
        %586 = vmatpush.bf16.msra.mxu0 %v563
        %587 = vmatmul.bf16.gmra.mxu0 %v513
        %v588 = vpop.f32.mrf.mxu0
        %v589 = vadd.f32 0.0, %v588
        %v590 = vpop.f32.mrf.mxu0
        %591 = vdwg.mxu0
        %v608 = vunpack.c.l.b16 %v496
        %v609 = vunpack.c.l.b16 %v497
        %v610 = vunpack.c.l.b16 %v498
        %v611 = vunpack.c.l.b16 %v499
        %v612 = vunpack.c.l.b16 %v500
        %v613 = vunpack.c.l.b16 %v501
        %v614 = vunpack.c.l.b16 %v502
        %v615 = vunpack.c.l.b16 %v503
        %v616 = vunpack.c.l.b16 %v504
        %v617 = vunpack.c.l.b16 %v505
        %v618 = vunpack.c.l.b16 %v506
        %v619 = vunpack.c.l.b16 %v507
        %v620 = vunpack.c.l.b16 %v508
        %v621 = vunpack.c.l.b16 %v509
        %v622 = vunpack.c.l.b16 %v510
        %v623 = vunpack.c.l.b16 %v511
        %v624 = vpack.c.b16 %v609, %v608
        %v625 = vpack.c.b16 %v611, %v610
        %v626 = vpack.c.b16 %v613, %v612
        %v627 = vpack.c.b16 %v615, %v614
        %v628 = vpack.c.b16 %v617, %v616
        %v629 = vpack.c.b16 %v619, %v618
        %v630 = vpack.c.b16 %v621, %v620
        %v631 = vpack.c.b16 %v623, %v622
        %640 = vmatpush.bf16.msra.mxu0 %v631
        %641 = vmatpush.bf16.msra.mxu0 %v630
        %642 = vmatpush.bf16.msra.mxu0 %v629
        %643 = vmatpush.bf16.msra.mxu0 %v628
        %644 = vmatpush.bf16.msra.mxu0 %v627
        %645 = vmatpush.bf16.msra.mxu0 %v626
        %646 = vmatpush.bf16.msra.mxu0 %v625
        %647 = vmatpush.bf16.msra.mxu0 %v624
        %648 = vmatmul.bf16.gmra.mxu0 %v495
        %v649 = vpop.f32.mrf.mxu0
        %v650 = vadd.f32 %v589, %v649
        %v651 = vpop.f32.mrf.mxu0
        %652 = vdwg.mxu0
        %v653 = vld [vmem:[#allocation3 + $0x2] sm:$0xff]
        %v654 = vpack.c.bf16 %v653, %v653
        %s655 = scalar_lea.vmem [#allocation8], 128
        %v656 = vld [vmem:[%s655] sm:$0xf]
        %v657 = vld [vmem:[%s655 + $0x4] sm:$0xf]
        %v658 = vld [vmem:[%s655 + $0x8] sm:$0xf]
        %v659 = vld [vmem:[%s655 + $0xc] sm:$0xf]
        %v660 = vld [vmem:[%s655 + $0x10] sm:$0xf]
        %v661 = vld [vmem:[%s655 + $0x14] sm:$0xf]
        %v662 = vld [vmem:[%s655 + $0x18] sm:$0xf]
        %v663 = vld [vmem:[%s655 + $0x1c] sm:$0xf]
        %v664 = vld [vmem:[%s655 + $0x20] sm:$0xf]
        %v665 = vld [vmem:[%s655 + $0x24] sm:$0xf]
        %v666 = vld [vmem:[%s655 + $0x28] sm:$0xf]
        %v667 = vld [vmem:[%s655 + $0x2c] sm:$0xf]
        %v668 = vld [vmem:[%s655 + $0x30] sm:$0xf]
        %v669 = vld [vmem:[%s655 + $0x34] sm:$0xf]
        %v670 = vld [vmem:[%s655 + $0x38] sm:$0xf]
        %v671 = vld [vmem:[%s655 + $0x3c] sm:$0xf]
        %v688 = vunpack.c.l.b16 %v656
        %v689 = vunpack.c.l.b16 %v657
        %v690 = vunpack.c.l.b16 %v658
        %v691 = vunpack.c.l.b16 %v659
        %v692 = vunpack.c.l.b16 %v660
        %v693 = vunpack.c.l.b16 %v661
        %v694 = vunpack.c.l.b16 %v662
        %v695 = vunpack.c.l.b16 %v663
        %v696 = vunpack.c.l.b16 %v664
        %v697 = vunpack.c.l.b16 %v665
        %v698 = vunpack.c.l.b16 %v666
        %v699 = vunpack.c.l.b16 %v667
        %v700 = vunpack.c.l.b16 %v668
        %v701 = vunpack.c.l.b16 %v669
        %v702 = vunpack.c.l.b16 %v670
        %v703 = vunpack.c.l.b16 %v671
        %v704 = vpack.c.b16 %v689, %v688
        %v705 = vpack.c.b16 %v691, %v690
        %v706 = vpack.c.b16 %v693, %v692
        %v707 = vpack.c.b16 %v695, %v694
        %v708 = vpack.c.b16 %v697, %v696
        %v709 = vpack.c.b16 %v699, %v698
        %v710 = vpack.c.b16 %v701, %v700
        %v711 = vpack.c.b16 %v703, %v702
        %720 = vmatpush.bf16.msra.mxu0 %v711
        %721 = vmatpush.bf16.msra.mxu0 %v710
        %722 = vmatpush.bf16.msra.mxu0 %v709
        %723 = vmatpush.bf16.msra.mxu0 %v708
        %724 = vmatpush.bf16.msra.mxu0 %v707
        %725 = vmatpush.bf16.msra.mxu0 %v706
        %726 = vmatpush.bf16.msra.mxu0 %v705
        %727 = vmatpush.bf16.msra.mxu0 %v704
        %728 = vmatmul.bf16.gmra.mxu0 %v654
        %v729 = vpop.f32.mrf.mxu0
        %v730 = vadd.f32 0.0, %v729
        %v731 = vpop.f32.mrf.mxu0
        %732 = vdwg.mxu0
        %v733 = vadd.f32 %v650, %v730
        %v734 = vld [vmem:[%s4] sm:$0x1]
        %v736 = vperm.slane %v734, 0
        %v738 = vadd.f32 %v733, %v736
        %v739 = vmax.f32 %v738, 0.0
        %740 = vst [vmem:[#allocation4] sm:$0xff] 0.0
        %741 = vst [vmem:[#allocation4 + $0x8] sm:$0x3] 0.0
        %742 = vst [vmem:[#allocation4 + $0x1] sm:$0xff] %v739
        %v743 = vld [vmem:[#allocation4] sm:$0xff]
        %v744 = vpack.c.bf16 %v743, %v743
        %v745 = vld [vmem:[#allocation10] sm:$0xf]
        %v746 = vld [vmem:[#allocation10 + $0x4] sm:$0xf]
        %v747 = vld [vmem:[#allocation10 + $0x8] sm:$0xf]
        %v748 = vld [vmem:[#allocation10 + $0xc] sm:$0xf]
        %v749 = vld [vmem:[#allocation10 + $0x10] sm:$0xf]
        %v750 = vld [vmem:[#allocation10 + $0x14] sm:$0xf]
        %v751 = vld [vmem:[#allocation10 + $0x18] sm:$0xf]
        %v752 = vld [vmem:[#allocation10 + $0x1c] sm:$0xf]
        %v753 = vld [vmem:[#allocation10 + $0x20] sm:$0xf]
        %v754 = vld [vmem:[#allocation10 + $0x24] sm:$0xf]
        %v755 = vld [vmem:[#allocation10 + $0x28] sm:$0xf]
        %v756 = vld [vmem:[#allocation10 + $0x2c] sm:$0xf]
        %v757 = vld [vmem:[#allocation10 + $0x30] sm:$0xf]
        %v758 = vld [vmem:[#allocation10 + $0x34] sm:$0xf]
        %v759 = vld [vmem:[#allocation10 + $0x38] sm:$0xf]
        %v760 = vld [vmem:[#allocation10 + $0x3c] sm:$0xf]
        %v761 = vld [vmem:[#allocation4 + $0x1] sm:$0xff]
        %v762 = vpack.c.bf16 %v761, %v761
        %s763 = scalar_lea.vmem [#allocation10], 64
        %v764 = vld [vmem:[%s763] sm:$0xf]
        %v765 = vld [vmem:[%s763 + $0x4] sm:$0xf]
        %v766 = vld [vmem:[%s763 + $0x8] sm:$0xf]
        %v767 = vld [vmem:[%s763 + $0xc] sm:$0xf]
        %v768 = vld [vmem:[%s763 + $0x10] sm:$0xf]
        %v769 = vld [vmem:[%s763 + $0x14] sm:$0xf]
        %v770 = vld [vmem:[%s763 + $0x18] sm:$0xf]
        %v771 = vld [vmem:[%s763 + $0x1c] sm:$0xf]
        %v772 = vld [vmem:[%s763 + $0x20] sm:$0xf]
        %v773 = vld [vmem:[%s763 + $0x24] sm:$0xf]
        %v774 = vld [vmem:[%s763 + $0x28] sm:$0xf]
        %v775 = vld [vmem:[%s763 + $0x2c] sm:$0xf]
        %v776 = vld [vmem:[%s763 + $0x30] sm:$0xf]
        %v777 = vld [vmem:[%s763 + $0x34] sm:$0xf]
        %v778 = vld [vmem:[%s763 + $0x38] sm:$0xf]
        %v779 = vld [vmem:[%s763 + $0x3c] sm:$0xf]
        %v796 = vunpack.c.l.b16 %v764
        %v797 = vunpack.c.l.b16 %v765
        %v798 = vunpack.c.l.b16 %v766
        %v799 = vunpack.c.l.b16 %v767
        %v800 = vunpack.c.l.b16 %v768
        %v801 = vunpack.c.l.b16 %v769
        %v802 = vunpack.c.l.b16 %v770
        %v803 = vunpack.c.l.b16 %v771
        %v804 = vunpack.c.l.b16 %v772
        %v805 = vunpack.c.l.b16 %v773
        %v806 = vunpack.c.l.b16 %v774
        %v807 = vunpack.c.l.b16 %v775
        %v808 = vunpack.c.l.b16 %v776
        %v809 = vunpack.c.l.b16 %v777
        %v810 = vunpack.c.l.b16 %v778
        %v811 = vunpack.c.l.b16 %v779
        %v812 = vpack.c.b16 %v797, %v796
        %v813 = vpack.c.b16 %v799, %v798
        %v814 = vpack.c.b16 %v801, %v800
        %v815 = vpack.c.b16 %v803, %v802
        %v816 = vpack.c.b16 %v805, %v804
        %v817 = vpack.c.b16 %v807, %v806
        %v818 = vpack.c.b16 %v809, %v808
        %v819 = vpack.c.b16 %v811, %v810
        %828 = vmatpush.bf16.msra.mxu0 %v819
        %829 = vmatpush.bf16.msra.mxu0 %v818
        %830 = vmatpush.bf16.msra.mxu0 %v817
        %831 = vmatpush.bf16.msra.mxu0 %v816
        %832 = vmatpush.bf16.msra.mxu0 %v815
        %833 = vmatpush.bf16.msra.mxu0 %v814
        %834 = vmatpush.bf16.msra.mxu0 %v813
        %835 = vmatpush.bf16.msra.mxu0 %v812
        %836 = vmatmul.bf16.gmra.mxu0 %v762
        %v837 = vpop.f32.mrf.mxu0
        %v838 = vadd.f32 0.0, %v837
        %v839 = vpop.f32.mrf.mxu0
        %840 = vdwg.mxu0
        %v857 = vunpack.c.l.b16 %v745
        %v858 = vunpack.c.l.b16 %v746
        %v859 = vunpack.c.l.b16 %v747
        %v860 = vunpack.c.l.b16 %v748
        %v861 = vunpack.c.l.b16 %v749
        %v862 = vunpack.c.l.b16 %v750
        %v863 = vunpack.c.l.b16 %v751
        %v864 = vunpack.c.l.b16 %v752
        %v865 = vunpack.c.l.b16 %v753
        %v866 = vunpack.c.l.b16 %v754
        %v867 = vunpack.c.l.b16 %v755
        %v868 = vunpack.c.l.b16 %v756
        %v869 = vunpack.c.l.b16 %v757
        %v870 = vunpack.c.l.b16 %v758
        %v871 = vunpack.c.l.b16 %v759
        %v872 = vunpack.c.l.b16 %v760
        %v873 = vpack.c.b16 %v858, %v857
        %v874 = vpack.c.b16 %v860, %v859
        %v875 = vpack.c.b16 %v862, %v861
        %v876 = vpack.c.b16 %v864, %v863
        %v877 = vpack.c.b16 %v866, %v865
        %v878 = vpack.c.b16 %v868, %v867
        %v879 = vpack.c.b16 %v870, %v869
        %v880 = vpack.c.b16 %v872, %v871
        %889 = vmatpush.bf16.msra.mxu0 %v880
        %890 = vmatpush.bf16.msra.mxu0 %v879
        %891 = vmatpush.bf16.msra.mxu0 %v878
        %892 = vmatpush.bf16.msra.mxu0 %v877
        %893 = vmatpush.bf16.msra.mxu0 %v876
        %894 = vmatpush.bf16.msra.mxu0 %v875
        %895 = vmatpush.bf16.msra.mxu0 %v874
        %896 = vmatpush.bf16.msra.mxu0 %v873
        %897 = vmatmul.bf16.gmra.mxu0 %v744
        %v898 = vpop.f32.mrf.mxu0
        %v899 = vadd.f32 %v838, %v898
        %v900 = vpop.f32.mrf.mxu0
        %901 = vdwg.mxu0
        %v902 = vld [vmem:[#allocation4 + $0x2] sm:$0xff]
        %v903 = vpack.c.bf16 %v902, %v902
        %s904 = scalar_lea.vmem [#allocation10], 128
        %v905 = vld [vmem:[%s904] sm:$0xf]
        %v906 = vld [vmem:[%s904 + $0x4] sm:$0xf]
        %v907 = vld [vmem:[%s904 + $0x8] sm:$0xf]
        %v908 = vld [vmem:[%s904 + $0xc] sm:$0xf]
        %v909 = vld [vmem:[%s904 + $0x10] sm:$0xf]
        %v910 = vld [vmem:[%s904 + $0x14] sm:$0xf]
        %v911 = vld [vmem:[%s904 + $0x18] sm:$0xf]
        %v912 = vld [vmem:[%s904 + $0x1c] sm:$0xf]
        %v913 = vld [vmem:[%s904 + $0x20] sm:$0xf]
        %v914 = vld [vmem:[%s904 + $0x24] sm:$0xf]
        %v915 = vld [vmem:[%s904 + $0x28] sm:$0xf]
        %v916 = vld [vmem:[%s904 + $0x2c] sm:$0xf]
        %v917 = vld [vmem:[%s904 + $0x30] sm:$0xf]
        %v918 = vld [vmem:[%s904 + $0x34] sm:$0xf]
        %v919 = vld [vmem:[%s904 + $0x38] sm:$0xf]
        %v920 = vld [vmem:[%s904 + $0x3c] sm:$0xf]
        %v937 = vunpack.c.l.b16 %v905
        %v938 = vunpack.c.l.b16 %v906
        %v939 = vunpack.c.l.b16 %v907
        %v940 = vunpack.c.l.b16 %v908
        %v941 = vunpack.c.l.b16 %v909
        %v942 = vunpack.c.l.b16 %v910
        %v943 = vunpack.c.l.b16 %v911
        %v944 = vunpack.c.l.b16 %v912
        %v945 = vunpack.c.l.b16 %v913
        %v946 = vunpack.c.l.b16 %v914
        %v947 = vunpack.c.l.b16 %v915
        %v948 = vunpack.c.l.b16 %v916
        %v949 = vunpack.c.l.b16 %v917
        %v950 = vunpack.c.l.b16 %v918
        %v951 = vunpack.c.l.b16 %v919
        %v952 = vunpack.c.l.b16 %v920
        %v953 = vpack.c.b16 %v938, %v937
        %v954 = vpack.c.b16 %v940, %v939
        %v955 = vpack.c.b16 %v942, %v941
        %v956 = vpack.c.b16 %v944, %v943
        %v957 = vpack.c.b16 %v946, %v945
        %v958 = vpack.c.b16 %v948, %v947
        %v959 = vpack.c.b16 %v950, %v949
        %v960 = vpack.c.b16 %v952, %v951
        %969 = vmatpush.bf16.msra.mxu0 %v960
        %970 = vmatpush.bf16.msra.mxu0 %v959
        %971 = vmatpush.bf16.msra.mxu0 %v958
        %972 = vmatpush.bf16.msra.mxu0 %v957
        %973 = vmatpush.bf16.msra.mxu0 %v956
        %974 = vmatpush.bf16.msra.mxu0 %v955
        %975 = vmatpush.bf16.msra.mxu0 %v954
        %976 = vmatpush.bf16.msra.mxu0 %v953
        %977 = vmatmul.bf16.gmra.mxu0 %v903
        %v978 = vpop.f32.mrf.mxu0
        %v979 = vadd.f32 0.0, %v978
        %v980 = vpop.f32.mrf.mxu0
        %981 = vdwg.mxu0
        %v982 = vadd.f32 %v899, %v979
        %v983 = vld [vmem:[%s6] sm:$0x1]
        %v985 = vperm.slane %v983, 0
        %v987 = vadd.f32 %v982, %v985
        %v988 = vmax.f32 %v987, 0.0
        %989 = vst [vmem:[#allocation5] sm:$0xff] %v988
        %v990 = vld [vmem:[#allocation5] ss:$2 sm:$0xf]
        %s991 = scalar_lea.vmem [#allocation5], 1
        %v992 = vld [vmem:[%s991] ss:$2 sm:$0xf]
        %v993 = vmax.f32 %v990, %v992
        %v994 = vpack.c.bf16 %v993, %v993
        %995 = vst [vmem:[%s323] sm:$0x3] %v994
        %p996 = scmp.lt.s32.totalorder %s20, 1
        %s997 = scalar_select %p996, %s20, 1
        %s998 = smul.addr %s997, 2
        %s999 = scalar_lea.vmem %s7, %s998
        // Predicated region
        $region61: #{artifacts_detection_forward.4} parent=47 // pred_check
          %p1000 = pneg %p190
        $region62: #{artifacts_detection_forward.4} parent=47 // pred_check_branch
          %1002 = sbr.rel (%p1000) target = $region64
        $region63: #{artifacts_detection_forward.4} parent=47 // pred_region
          _
        $region64: #{artifacts_detection_forward.4} parent=47 // pred_fallthru
          _
      $region48: #{artifacts_detection_forward.4} parent=5 // pred_fallthru
        _
      %p1003 = scmp.le.s32.totalorder 2, %s15
      // Predicated region
      $region65: #{artifacts_detection_forward.4} parent=5 // pred_check
        %p1004 = pneg %p1003
      $region66: #{artifacts_detection_forward.4} parent=5 // pred_check_branch
        %1006 = sbr.rel (%p1004) target = $region68
      $region67: #{artifacts_detection_forward.4} parent=5 // pred_region
        %s1007 = ssub.s32 %s15, 2
        // Predicated region
        $region69: #{artifacts_detection_forward.4} parent=67 // pred_check
          %p1008 = pneg %p196
        $region70: #{artifacts_detection_forward.4} parent=67 // pred_check_branch
          %1010 = sbr.rel (%p1008) target = $region72
        $region71: #{artifacts_detection_forward.4} parent=67 // pred_region
          %p1011 = scmp.lt.s32.totalorder %s21, 1
          %s1012 = scalar_select %p1011, %s21, 1
          %s1013 = smul.addr %s1012, 2
          %s1014 = scalar_lea.vmem %s7, %s1013
        $region72: #{artifacts_detection_forward.4} parent=67 // pred_fallthru
          _
      $region68: #{artifacts_detection_forward.4} parent=5 // pred_fallthru
        _
    $region6: #{artifacts_detection_forward.4} parent=1 // loop_footer
      %s19 = sadd.s32 1, %s15
    $region7: #{artifacts_detection_forward.4} parent=1 // loop_footer_branch
      %14 = sbr.rel target = $region3
    $region8: #{artifacts_detection_forward.4} parent=1 // loop_exit
      _
    %1015 = vsyncpa [#allocation7], 1
    %s1016 = scalar_lea.sflag [#allocation7], 1
    %1017 = vsyncpa %s1016, 1
    %1018 = vsyncpa [#allocation9], 1

// kernel: artifacts_detection_forward.5
$region0: #{artifacts_detection_forward.5}
  #allocation0 [shape = 'u32[]', space=smem, size = 0x4, offset = 0x4, fixed_abs, tag = 'smem constant byte address 0x4 - core index']
  #allocation1 [shape = 'u32[72,128]{1,0:T(1,128)}', space=vmem, size = 0x9000, scoped, tag = 'internal scratch']
  #allocation2 [shape = 'f32[6,128]{1,0:T(8,128)}', space=vmem, size = 0x1000, scoped, tag = 'scratch operand']
  %s0 = inlined_call_operand.vmem [shape: bf16[2,4,128], index: 0, kind: input, shape index: {}]
  %s1 = inlined_call_operand.hbm [shape: bf16[3,128,256], index: 1, kind: input, shape index: {}]
  %s2 = inlined_call_operand.vmem [shape: f32[1,256], index: 2, kind: input, shape index: {}]
  %s3 = inlined_call_operand.hbm [shape: f32[256,128], index: 3, kind: input, shape index: {}]
  %s4 = inlined_call_operand.vmem [shape: f32[1,128], index: 4, kind: input, shape index: {}]
  %s5 = inlined_call_operand.vmem [shape: f32[128,64], index: 5, kind: input, shape index: {}]
  %s6 = inlined_call_operand.vmem [shape: f32[1,64], index: 6, kind: input, shape index: {}]
  %s7 = inlined_call_operand.vmem [shape: f32[64,128], index: 7, kind: input, shape index: {}]
  %s8 = inlined_call_operand.vmem [shape: f32[1,128], index: 8, kind: input, shape index: {}]
  %s9 = inlined_call_operand.hbm [shape: f32[2,1,128], index: 9, kind: output, shape index: {}]
  %s10 = sld [smem:[#allocation0]]
  $region77: #{artifacts_detection_forward.5} parent=0
    _
  %s12 = ssub.s32 1, %s10
  %s13 = scalar_select 0, %s12, %s10
  $region1: #{artifacts_detection_forward.5} parent=0
    #allocation3 [shape = 'u8[196608]{0}', space=vmem, size = 0x30000, scoped, tag = 'input window, operand 1, single buffered']
    #allocation4 [shape = 's32[2]{0}', space=sflag, size = 0x8, scoped, tag = 'scoped memory for artifacts_detection_forward.5']
    #allocation5 [shape = 's32[2]{0}', space=sflag, size = 0x8, scoped, tag = 'scoped memory for artifacts_detection_forward.5']
    #allocation6 [shape = 'u8[131072]{0}', space=vmem, size = 0x20000, scoped, tag = 'input window, operand 3, single buffered']
    #allocation7 [shape = 's32[1]{0}', space=sflag, size = 0x4, scoped, tag = 'scoped memory for artifacts_detection_forward.5']
    #allocation8 [shape = 'u8[1024]{0}', space=vmem, size = 0x400, scoped, tag = 'output window, operand 0']
    %14 = vsyncpa [#allocation4], 0
    %15 = vsyncpa [#allocation7], 0
    %16 = vsyncpa [#allocation5], 0
    %s17 = scalar_lea.sflag [#allocation5], 1
    %18 = vsyncpa %s17, 0
    loop: start=0, step=1, limit=4
    $region2: #{artifacts_detection_forward.5} parent=1 // loop_pre_header
      _
    $region3: #{artifacts_detection_forward.5} parent=1 // loop_header
      %s20 = sphi 0, %s24
      %p21 = scmp.ge.s32.totalorder %s20, 4
      %s30 = sphi 0, %s32
      %s33 = sphi 0, %s30
      %s34 = sphi 0, %s33
      %s50 = sphi 0, %s34
      %s54 = sphi 0, %s54
      %s56 = sphi 0, %s54
      %s57 = sphi 0, %s56
      %s71 = sphi 0, %s57
      %s75 = sphi 0, %s75
      %s77 = sphi 0, %s75
      %s78 = sphi 0, %s77
      %s92 = sphi 0, %s78
      %s96 = sphi 0, %s96
      %s98 = sphi 0, %s96
      %s99 = sphi 0, %s98
      %s113 = sphi 0, %s99
      %s117 = sphi 0, %s117
      %s119 = sphi 0, %s117
      %s120 = sphi 0, %s119
      %s134 = sphi 0, %s120
      %s138 = sphi 0, %s138
      %s140 = sphi 0, %s138
      %s141 = sphi 0, %s140
      %s155 = sphi 0, %s141
      %s159 = sphi 0, %s159
      %s161 = sphi 0, %s159
      %s162 = sphi 0, %s161
      %s176 = sphi 0, %s162
      %s180 = sphi 0, %s180
      %s182 = sphi 0, %s180
      %s183 = sphi 0, %s182
      %s197 = sphi 0, %s183
      %s201 = sphi 0, %s201
      %s203 = sphi 0, %s201
      %s204 = sphi 0, %s203
      %s218 = sphi 0, %s204
      %s224 = sphi 0, %s226
      %s227 = sphi 0, %s224
      %s228 = sphi 0, %s227
      %s244 = sphi 0, %s228
    $region4: #{artifacts_detection_forward.5} parent=1 // loop_header_branch
      %23 = sbr.rel (%p21) target = $region8
    $region5: #{artifacts_detection_forward.5} parent=1 // loop_body
      %s25 = ssub.s32 %s20, 1
      %s26 = ssub.s32 %s20, 2
      %s27 = sadd.s32 %s20, 1
      %s28 = ssub.s32 %s20, %s27
      %p29 = scmp.eq.s32.totalorder %s28, 0
      %s31 = sadd.s32 %s30, 1
      %s32 = scalar_select %p29, %s30, %s31
      %p35 = pneg %p29
      %p36 = scmp.eq.s32.totalorder %s20, 1
      %p37 = por %p35, %p36
      %p38 = scmp.ne.s32.totalorder %s30, %s33
      %p39 = scmp.eq.s32.totalorder %s20, 0
      %p40 = por %p38, %p39
      %p41 = scmp.ne.s32.totalorder %s30, %s33
      %p42 = scmp.eq.s32.totalorder %s25, 1
      %p43 = por %p41, %p42
      %p44 = scmp.ne.s32.totalorder %s33, %s34
      %p45 = scmp.eq.s32.totalorder %s25, 0
      %p46 = por %p44, %p45
      %p47 = scmp.ne.s32.totalorder %s33, %s34
      %p48 = scmp.eq.s32.totalorder %s26, 1
      %p49 = por %p47, %p48
      %p51 = scmp.ne.s32.totalorder %s34, %s50
      %p52 = scmp.eq.s32.totalorder %s26, 0
      %p53 = por %p51, %p52
      %s55 = sadd.s32 %s54, 1
      %p58 = scmp.eq.s32.totalorder %s20, 1
      %p59 = scmp.ne.s32.totalorder %s54, %s56
      %p60 = scmp.eq.s32.totalorder %s20, 0
      %p61 = por %p59, %p60
      %p62 = scmp.ne.s32.totalorder %s54, %s56
      %p63 = scmp.eq.s32.totalorder %s25, 1
      %p64 = por %p62, %p63
      %p65 = scmp.ne.s32.totalorder %s56, %s57
      %p66 = scmp.eq.s32.totalorder %s25, 0
      %p67 = por %p65, %p66
      %p68 = scmp.ne.s32.totalorder %s56, %s57
      %p69 = scmp.eq.s32.totalorder %s26, 1
      %p70 = por %p68, %p69
      %p72 = scmp.ne.s32.totalorder %s57, %s71
      %p73 = scmp.eq.s32.totalorder %s26, 0
      %p74 = por %p72, %p73
      %s76 = sadd.s32 %s75, 1
      %p79 = scmp.eq.s32.totalorder %s20, 1
      %p80 = scmp.ne.s32.totalorder %s75, %s77
      %p81 = scmp.eq.s32.totalorder %s20, 0
      %p82 = por %p80, %p81
      %p83 = scmp.ne.s32.totalorder %s75, %s77
      %p84 = scmp.eq.s32.totalorder %s25, 1
      %p85 = por %p83, %p84
      %p86 = scmp.ne.s32.totalorder %s77, %s78
      %p87 = scmp.eq.s32.totalorder %s25, 0
      %p88 = por %p86, %p87
      %p89 = scmp.ne.s32.totalorder %s77, %s78
      %p90 = scmp.eq.s32.totalorder %s26, 1
      %p91 = por %p89, %p90
      %p93 = scmp.ne.s32.totalorder %s78, %s92
      %p94 = scmp.eq.s32.totalorder %s26, 0
      %p95 = por %p93, %p94
      %s97 = sadd.s32 %s96, 1
      %p100 = scmp.eq.s32.totalorder %s20, 1
      %p101 = scmp.ne.s32.totalorder %s96, %s98
      %p102 = scmp.eq.s32.totalorder %s20, 0
      %p103 = por %p101, %p102
      %p104 = scmp.ne.s32.totalorder %s96, %s98
      %p105 = scmp.eq.s32.totalorder %s25, 1
      %p106 = por %p104, %p105
      %p107 = scmp.ne.s32.totalorder %s98, %s99
      %p108 = scmp.eq.s32.totalorder %s25, 0
      %p109 = por %p107, %p108
      %p110 = scmp.ne.s32.totalorder %s98, %s99
      %p111 = scmp.eq.s32.totalorder %s26, 1
      %p112 = por %p110, %p111
      %p114 = scmp.ne.s32.totalorder %s99, %s113
      %p115 = scmp.eq.s32.totalorder %s26, 0
      %p116 = por %p114, %p115
      %s118 = sadd.s32 %s117, 1
      %p121 = scmp.eq.s32.totalorder %s20, 1
      %p122 = scmp.ne.s32.totalorder %s117, %s119
      %p123 = scmp.eq.s32.totalorder %s20, 0
      %p124 = por %p122, %p123
      %p125 = scmp.ne.s32.totalorder %s117, %s119
      %p126 = scmp.eq.s32.totalorder %s25, 1
      %p127 = por %p125, %p126
      %p128 = scmp.ne.s32.totalorder %s119, %s120
      %p129 = scmp.eq.s32.totalorder %s25, 0
      %p130 = por %p128, %p129
      %p131 = scmp.ne.s32.totalorder %s119, %s120
      %p132 = scmp.eq.s32.totalorder %s26, 1
      %p133 = por %p131, %p132
      %p135 = scmp.ne.s32.totalorder %s120, %s134
      %p136 = scmp.eq.s32.totalorder %s26, 0
      %p137 = por %p135, %p136
      %s139 = sadd.s32 %s138, 1
      %p142 = scmp.eq.s32.totalorder %s20, 1
      %p143 = scmp.ne.s32.totalorder %s138, %s140
      %p144 = scmp.eq.s32.totalorder %s20, 0
      %p145 = por %p143, %p144
      %p146 = scmp.ne.s32.totalorder %s138, %s140
      %p147 = scmp.eq.s32.totalorder %s25, 1
      %p148 = por %p146, %p147
      %p149 = scmp.ne.s32.totalorder %s140, %s141
      %p150 = scmp.eq.s32.totalorder %s25, 0
      %p151 = por %p149, %p150
      %p152 = scmp.ne.s32.totalorder %s140, %s141
      %p153 = scmp.eq.s32.totalorder %s26, 1
      %p154 = por %p152, %p153
      %p156 = scmp.ne.s32.totalorder %s141, %s155
      %p157 = scmp.eq.s32.totalorder %s26, 0
      %p158 = por %p156, %p157
      %s160 = sadd.s32 %s159, 1
      %p163 = scmp.eq.s32.totalorder %s20, 1
      %p164 = scmp.ne.s32.totalorder %s159, %s161
      %p165 = scmp.eq.s32.totalorder %s20, 0
      %p166 = por %p164, %p165
      %p167 = scmp.ne.s32.totalorder %s159, %s161
      %p168 = scmp.eq.s32.totalorder %s25, 1
      %p169 = por %p167, %p168
      %p170 = scmp.ne.s32.totalorder %s161, %s162
      %p171 = scmp.eq.s32.totalorder %s25, 0
      %p172 = por %p170, %p171
      %p173 = scmp.ne.s32.totalorder %s161, %s162
      %p174 = scmp.eq.s32.totalorder %s26, 1
      %p175 = por %p173, %p174
      %p177 = scmp.ne.s32.totalorder %s162, %s176
      %p178 = scmp.eq.s32.totalorder %s26, 0
      %p179 = por %p177, %p178
      %s181 = sadd.s32 %s180, 1
      %p184 = scmp.eq.s32.totalorder %s20, 1
      %p185 = scmp.ne.s32.totalorder %s180, %s182
      %p186 = scmp.eq.s32.totalorder %s20, 0
      %p187 = por %p185, %p186
      %p188 = scmp.ne.s32.totalorder %s180, %s182
      %p189 = scmp.eq.s32.totalorder %s25, 1
      %p190 = por %p188, %p189
      %p191 = scmp.ne.s32.totalorder %s182, %s183
      %p192 = scmp.eq.s32.totalorder %s25, 0
      %p193 = por %p191, %p192
      %p194 = scmp.ne.s32.totalorder %s182, %s183
      %p195 = scmp.eq.s32.totalorder %s26, 1
      %p196 = por %p194, %p195
      %p198 = scmp.ne.s32.totalorder %s183, %s197
      %p199 = scmp.eq.s32.totalorder %s26, 0
      %p200 = por %p198, %p199
      %s202 = sadd.s32 %s201, 1
      %p205 = scmp.eq.s32.totalorder %s20, 1
      %p206 = scmp.ne.s32.totalorder %s201, %s203
      %p207 = scmp.eq.s32.totalorder %s20, 0
      %p208 = por %p206, %p207
      %p209 = scmp.ne.s32.totalorder %s201, %s203
      %p210 = scmp.eq.s32.totalorder %s25, 1
      %p211 = por %p209, %p210
      %p212 = scmp.ne.s32.totalorder %s203, %s204
      %p213 = scmp.eq.s32.totalorder %s25, 0
      %p214 = por %p212, %p213
      %p215 = scmp.ne.s32.totalorder %s203, %s204
      %p216 = scmp.eq.s32.totalorder %s26, 1
      %p217 = por %p215, %p216
      %p219 = scmp.ne.s32.totalorder %s204, %s218
      %p220 = scmp.eq.s32.totalorder %s26, 0
      %p221 = por %p219, %p220
      %s222 = ssub.s32 %s20, %s27
      %p223 = scmp.eq.s32.totalorder %s222, 0
      %s225 = sadd.s32 %s224, 1
      %s226 = scalar_select %p223, %s224, %s225
      %p229 = pneg %p223
      %p230 = scmp.eq.s32.totalorder %s20, 1
      %p231 = por %p229, %p230
      %p232 = scmp.ne.s32.totalorder %s224, %s227
      %p233 = scmp.eq.s32.totalorder %s20, 0
      %p234 = por %p232, %p233
      %p235 = scmp.ne.s32.totalorder %s224, %s227
      %p236 = scmp.eq.s32.totalorder %s25, 1
      %p237 = por %p235, %p236
      %p238 = scmp.ne.s32.totalorder %s227, %s228
      %p239 = scmp.eq.s32.totalorder %s25, 0
      %p240 = por %p238, %p239
      %p241 = scmp.ne.s32.totalorder %s227, %s228
      %p242 = scmp.eq.s32.totalorder %s26, 1
      %p243 = por %p241, %p242
      %p245 = scmp.ne.s32.totalorder %s228, %s244
      %p246 = scmp.eq.s32.totalorder %s26, 0
      %p247 = por %p245, %p246
      %p248 = scmp.le.s32.totalorder 1, %s20
      %p249 = scmp.lt.s32.totalorder %s20, 3
      %p250 = pnand %p248, %p249
      %p251 = pneg %p250
      // Predicated region
      $region9: #{artifacts_detection_forward.5} parent=5 // pred_check
        _
      $region10: #{artifacts_detection_forward.5} parent=5 // pred_check_branch
        %253 = sbr.rel (%p250) target = $region12
      $region11: #{artifacts_detection_forward.5} parent=5 // pred_region
        %s254 = ssub.s32 %s20, 1
        // Predicated region
        $region13: #{artifacts_detection_forward.5} parent=11 // pred_check
          %p255 = pneg %p67
        $region14: #{artifacts_detection_forward.5} parent=11 // pred_check_branch
          %257 = sbr.rel (%p255) target = $region16
        $region15: #{artifacts_detection_forward.5} parent=11 // pred_region
          %259 = vsyncadd [#allocation4], 0
          %s260 = sshll.u32 %s1, 4
          %s261 = int_to_ptr.hbm [resolvable:$true] %s260
          %s262 = sshll.u32 [#allocation3], 4
          %s263 = int_to_ptr.vmem [resolvable:$true] %s262
          %268 = dma.hbm_to_vmem [thread:$0]  %s261, 6144, %s263, [#allocation4], 128, 128, 8
        $region16: #{artifacts_detection_forward.5} parent=11 // pred_fallthru
          _
        // Predicated region
        $region17: #{artifacts_detection_forward.5} parent=11 // pred_check
          %p269 = pneg %p88
        $region18: #{artifacts_detection_forward.5} parent=11 // pred_check_branch
          %271 = sbr.rel (%p269) target = $region20
        $region19: #{artifacts_detection_forward.5} parent=11 // pred_region
          _
        $region20: #{artifacts_detection_forward.5} parent=11 // pred_fallthru
          _
        // Predicated region
        $region21: #{artifacts_detection_forward.5} parent=11 // pred_check
          %p272 = pneg %p109
        $region22: #{artifacts_detection_forward.5} parent=11 // pred_check_branch
          %274 = sbr.rel (%p272) target = $region24
        $region23: #{artifacts_detection_forward.5} parent=11 // pred_region
          %276 = vsyncadd [#allocation7], 0
          %s277 = sshll.u32 %s3, 4
          %s278 = int_to_ptr.hbm [resolvable:$true] %s277
          %s279 = sshll.u32 [#allocation6], 4
          %s280 = int_to_ptr.vmem [resolvable:$true] %s279
          %285 = dma.hbm_to_vmem [thread:$0]  %s278, 4096, %s280, [#allocation7], 128, 128, 8
        $region24: #{artifacts_detection_forward.5} parent=11 // pred_fallthru
          _
        // Predicated region
        $region25: #{artifacts_detection_forward.5} parent=11 // pred_check
          %p286 = pneg %p130
        $region26: #{artifacts_detection_forward.5} parent=11 // pred_check_branch
          %288 = sbr.rel (%p286) target = $region28
        $region27: #{artifacts_detection_forward.5} parent=11 // pred_region
          _
        $region28: #{artifacts_detection_forward.5} parent=11 // pred_fallthru
          _
        // Predicated region
        $region29: #{artifacts_detection_forward.5} parent=11 // pred_check
          %p289 = pneg %p151
        $region30: #{artifacts_detection_forward.5} parent=11 // pred_check_branch
          %291 = sbr.rel (%p289) target = $region32
        $region31: #{artifacts_detection_forward.5} parent=11 // pred_region
          _
        $region32: #{artifacts_detection_forward.5} parent=11 // pred_fallthru
          _
        // Predicated region
        $region33: #{artifacts_detection_forward.5} parent=11 // pred_check
          %p292 = pneg %p172
        $region34: #{artifacts_detection_forward.5} parent=11 // pred_check_branch
          %294 = sbr.rel (%p292) target = $region36
        $region35: #{artifacts_detection_forward.5} parent=11 // pred_region
          _
        $region36: #{artifacts_detection_forward.5} parent=11 // pred_fallthru
          _
        // Predicated region
        $region37: #{artifacts_detection_forward.5} parent=11 // pred_check
          %p295 = pneg %p193
        $region38: #{artifacts_detection_forward.5} parent=11 // pred_check_branch
          %297 = sbr.rel (%p295) target = $region40
        $region39: #{artifacts_detection_forward.5} parent=11 // pred_region
          _
        $region40: #{artifacts_detection_forward.5} parent=11 // pred_fallthru
          _
        // Predicated region
        $region41: #{artifacts_detection_forward.5} parent=11 // pred_check
          %p298 = pneg %p214
        $region42: #{artifacts_detection_forward.5} parent=11 // pred_check_branch
          %300 = sbr.rel (%p298) target = $region44
        $region43: #{artifacts_detection_forward.5} parent=11 // pred_region
          _
        $region44: #{artifacts_detection_forward.5} parent=11 // pred_fallthru
          _
      $region12: #{artifacts_detection_forward.5} parent=5 // pred_fallthru
        _
      %p301 = scmp.lt.s32.totalorder %s20, 2
      // Predicated region
      $region45: #{artifacts_detection_forward.5} parent=5 // pred_check
        %p302 = pneg %p301
      $region46: #{artifacts_detection_forward.5} parent=5 // pred_check_branch
        %304 = sbr.rel (%p302) target = $region48
      $region47: #{artifacts_detection_forward.5} parent=5 // pred_region
        // Predicated region
        $region49: #{artifacts_detection_forward.5} parent=47 // pred_check
          %p305 = pneg %p40
        $region50: #{artifacts_detection_forward.5} parent=47 // pred_check_branch
          %307 = sbr.rel (%p305) target = $region52
        $region51: #{artifacts_detection_forward.5} parent=47 // pred_region
          %p308 = scmp.lt.s32.totalorder %s20, 1
          %s309 = scalar_select %p308, %s20, 1
          %s310 = smul.addr %s309, 2
          %s311 = scalar_lea.vmem %s0, %s310
        $region52: #{artifacts_detection_forward.5} parent=47 // pred_fallthru
          _
      $region48: #{artifacts_detection_forward.5} parent=5 // pred_fallthru
        _
      %p312 = scmp.le.s32.totalorder 1, %s20
      %p313 = scmp.lt.s32.totalorder %s20, 3
      %p314 = pnand %p312, %p313
      %p315 = pneg %p314
      // Predicated region
      $region53: #{artifacts_detection_forward.5} parent=5 // pred_check
        _
      $region54: #{artifacts_detection_forward.5} parent=5 // pred_check_branch
        %317 = sbr.rel (%p314) target = $region56
      $region55: #{artifacts_detection_forward.5} parent=5 // pred_region
        %s318 = ssub.s32 %s20, 1
        // Predicated region
        $region57: #{artifacts_detection_forward.5} parent=55 // pred_check
          %p319 = pneg %p67
        $region58: #{artifacts_detection_forward.5} parent=55 // pred_check_branch
          %321 = sbr.rel (%p319) target = $region60
        $region59: #{artifacts_detection_forward.5} parent=55 // pred_region
          %323 = dma.done [#allocation4], 6144
        $region60: #{artifacts_detection_forward.5} parent=55 // pred_fallthru
          _
        // Predicated region
        $region61: #{artifacts_detection_forward.5} parent=55 // pred_check
          %p324 = pneg %p109
        $region62: #{artifacts_detection_forward.5} parent=55 // pred_check_branch
          %326 = sbr.rel (%p324) target = $region64
        $region63: #{artifacts_detection_forward.5} parent=55 // pred_region
          %328 = dma.done [#allocation7], 4096
        $region64: #{artifacts_detection_forward.5} parent=55 // pred_fallthru
          _
        %p329 = scmp.lt.s32.totalorder %s25, 1
        %s330 = scalar_select %p329, %s25, 1
        %s331 = smul.addr %s330, 2
        %s332 = scalar_lea.vmem %s0, %s331
        %p333 = pneg %p46
        %p334 = pneg %p43
        %p335 = pneg %p67
        %p336 = pneg %p64
        %p337 = pneg %p88
        %p338 = pneg %p85
        %p339 = pneg %p109
        %p340 = pneg %p106
        %p341 = pneg %p130
        %p342 = pneg %p127
        %p343 = pneg %p151
        %p344 = pneg %p148
        %p345 = pneg %p172
        %p346 = pneg %p169
        %p347 = pneg %p193
        %p348 = pneg %p190
        %p349 = pneg %p214
        %p350 = pneg %p211
        %p351 = pneg %p240
        %p352 = pneg %p237
        %s353 = sand.u32 %s227, 1
        %s354 = scalar_lea.sflag [#allocation5], %s353
        %s355 = sand.u32 %s227, 1
        %s356 = scalar_lea.vmem [#allocation8], %s355
        %p357 = scmp.lt.s32.totalorder %s25, 1
        %s358 = scalar_select %p357, %s25, 1
        %s359 = smul.addr %s358, 2
        %s360 = scalar_lea.vmem %s0, %s359
        %v361 = vld [vmem:[%s360] sm:$0x3]
        %362 = vst [vmem:[#allocation2] sm:$0x3f] 0.0
        %v363 = vunpack.c.l.bf16 %v361
        %364 = vst [vmem:[#allocation2 + $0x1] sm:$0xf] %v363
        %v365 = vld [vmem:[#allocation2] sm:$0xf]
        %v366 = vpack.c.bf16 %v365, %v365
        %v367 = vld [vmem:[#allocation3] sm:$0xff]
        %v368 = vld [vmem:[#allocation3 + $0x8] sm:$0xff]
        %v369 = vld [vmem:[#allocation3 + $0x10] sm:$0xff]
        %v370 = vld [vmem:[#allocation3 + $0x18] sm:$0xff]
        %v371 = vld [vmem:[#allocation3 + $0x20] sm:$0xff]
        %v372 = vld [vmem:[#allocation3 + $0x28] sm:$0xff]
        %v373 = vld [vmem:[#allocation3 + $0x30] sm:$0xff]
        %v374 = vld [vmem:[#allocation3 + $0x38] sm:$0xff]
        %v375 = vld [vmem:[#allocation3 + $0x40] sm:$0xff]
        %v376 = vld [vmem:[#allocation3 + $0x48] sm:$0xff]
        %v377 = vld [vmem:[#allocation3 + $0x50] sm:$0xff]
        %v378 = vld [vmem:[#allocation3 + $0x58] sm:$0xff]
        %v379 = vld [vmem:[#allocation3 + $0x60] sm:$0xff]
        %v380 = vld [vmem:[#allocation3 + $0x68] sm:$0xff]
        %v381 = vld [vmem:[#allocation3 + $0x70] sm:$0xff]
        %v382 = vld [vmem:[#allocation3 + $0x78] sm:$0xff]
        %v383 = vld [vmem:[#allocation2 + $0x1] sm:$0xf]
        %v384 = vpack.c.bf16 %v383, %v383
        %s385 = scalar_lea.vmem [#allocation3], 128
        %v386 = vld [vmem:[%s385] sm:$0xff]
        %v387 = vld [vmem:[%s385 + $0x8] sm:$0xff]
        %v388 = vld [vmem:[%s385 + $0x10] sm:$0xff]
        %v389 = vld [vmem:[%s385 + $0x18] sm:$0xff]
        %v390 = vld [vmem:[%s385 + $0x20] sm:$0xff]
        %v391 = vld [vmem:[%s385 + $0x28] sm:$0xff]
        %v392 = vld [vmem:[%s385 + $0x30] sm:$0xff]
        %v393 = vld [vmem:[%s385 + $0x38] sm:$0xff]
        %v394 = vld [vmem:[%s385 + $0x40] sm:$0xff]
        %v395 = vld [vmem:[%s385 + $0x48] sm:$0xff]
        %v396 = vld [vmem:[%s385 + $0x50] sm:$0xff]
        %v397 = vld [vmem:[%s385 + $0x58] sm:$0xff]
        %v398 = vld [vmem:[%s385 + $0x60] sm:$0xff]
        %v399 = vld [vmem:[%s385 + $0x68] sm:$0xff]
        %v400 = vld [vmem:[%s385 + $0x70] sm:$0xff]
        %v401 = vld [vmem:[%s385 + $0x78] sm:$0xff]
        %v418 = vunpack.c.l.b16 %v386
        %v419 = vunpack.c.h.b16 %v386
        %v420 = vunpack.c.l.b16 %v387
        %v421 = vunpack.c.h.b16 %v387
        %v422 = vunpack.c.l.b16 %v388
        %v423 = vunpack.c.h.b16 %v388
        %v424 = vunpack.c.l.b16 %v389
        %v425 = vunpack.c.h.b16 %v389
        %v426 = vunpack.c.l.b16 %v390
        %v427 = vunpack.c.h.b16 %v390
        %v428 = vunpack.c.l.b16 %v391
        %v429 = vunpack.c.h.b16 %v391
        %v430 = vunpack.c.l.b16 %v392
        %v431 = vunpack.c.h.b16 %v392
        %v432 = vunpack.c.l.b16 %v393
        %v433 = vunpack.c.h.b16 %v393
        %v434 = vunpack.c.l.b16 %v394
        %v435 = vunpack.c.h.b16 %v394
        %v436 = vunpack.c.l.b16 %v395
        %v437 = vunpack.c.h.b16 %v395
        %v438 = vunpack.c.l.b16 %v396
        %v439 = vunpack.c.h.b16 %v396
        %v440 = vunpack.c.l.b16 %v397
        %v441 = vunpack.c.h.b16 %v397
        %v442 = vunpack.c.l.b16 %v398
        %v443 = vunpack.c.h.b16 %v398
        %v444 = vunpack.c.l.b16 %v399
        %v445 = vunpack.c.h.b16 %v399
        %v446 = vunpack.c.l.b16 %v400
        %v447 = vunpack.c.h.b16 %v400
        %v448 = vunpack.c.l.b16 %v401
        %v449 = vunpack.c.h.b16 %v401
        %v450 = vpack.c.b16 %v420, %v418
        %v451 = vpack.c.b16 %v421, %v419
        %v452 = vpack.c.b16 %v424, %v422
        %v453 = vpack.c.b16 %v425, %v423
        %v454 = vpack.c.b16 %v428, %v426
        %v455 = vpack.c.b16 %v429, %v427
        %v456 = vpack.c.b16 %v432, %v430
        %v457 = vpack.c.b16 %v433, %v431
        %v458 = vpack.c.b16 %v436, %v434
        %v459 = vpack.c.b16 %v437, %v435
        %v460 = vpack.c.b16 %v440, %v438
        %v461 = vpack.c.b16 %v441, %v439
        %v462 = vpack.c.b16 %v444, %v442
        %v463 = vpack.c.b16 %v445, %v443
        %v464 = vpack.c.b16 %v448, %v446
        %v465 = vpack.c.b16 %v449, %v447
        %482 = vmatpush.bf16.msra.mxu0 %v464
        %483 = vmatpush.bf16.msra.mxu0 %v462
        %484 = vmatpush.bf16.msra.mxu0 %v460
        %485 = vmatpush.bf16.msra.mxu0 %v458
        %486 = vmatpush.bf16.msra.mxu0 %v456
        %487 = vmatpush.bf16.msra.mxu0 %v454
        %488 = vmatpush.bf16.msra.mxu0 %v452
        %489 = vmatpush.bf16.msra.mxu0 %v450
        %490 = vmatmul.bf16.gmra.mxu0 %v384
        %v491 = vpop.f32.mrf.mxu0
        %v492 = vadd.f32 0.0, %v491
        %v493 = vpop.f32.mrf.mxu0
        %494 = vdwg.mxu0
        %495 = vmatpush.bf16.msra.mxu0 %v465
        %496 = vmatpush.bf16.msra.mxu0 %v463
        %497 = vmatpush.bf16.msra.mxu0 %v461
        %498 = vmatpush.bf16.msra.mxu0 %v459
        %499 = vmatpush.bf16.msra.mxu0 %v457
        %500 = vmatpush.bf16.msra.mxu0 %v455
        %501 = vmatpush.bf16.msra.mxu0 %v453
        %502 = vmatpush.bf16.msra.mxu0 %v451
        %503 = vmatmul.bf16.gmra.mxu0 %v384
        %v504 = vpop.f32.mrf.mxu0
        %v505 = vadd.f32 0.0, %v504
        %v506 = vpop.f32.mrf.mxu0
        %507 = vdwg.mxu0
        %v524 = vunpack.c.l.b16 %v367
        %v525 = vunpack.c.h.b16 %v367
        %v526 = vunpack.c.l.b16 %v368
        %v527 = vunpack.c.h.b16 %v368
        %v528 = vunpack.c.l.b16 %v369
        %v529 = vunpack.c.h.b16 %v369
        %v530 = vunpack.c.l.b16 %v370
        %v531 = vunpack.c.h.b16 %v370
        %v532 = vunpack.c.l.b16 %v371
        %v533 = vunpack.c.h.b16 %v371
        %v534 = vunpack.c.l.b16 %v372
        %v535 = vunpack.c.h.b16 %v372
        %v536 = vunpack.c.l.b16 %v373
        %v537 = vunpack.c.h.b16 %v373
        %v538 = vunpack.c.l.b16 %v374
        %v539 = vunpack.c.h.b16 %v374
        %v540 = vunpack.c.l.b16 %v375
        %v541 = vunpack.c.h.b16 %v375
        %v542 = vunpack.c.l.b16 %v376
        %v543 = vunpack.c.h.b16 %v376
        %v544 = vunpack.c.l.b16 %v377
        %v545 = vunpack.c.h.b16 %v377
        %v546 = vunpack.c.l.b16 %v378
        %v547 = vunpack.c.h.b16 %v378
        %v548 = vunpack.c.l.b16 %v379
        %v549 = vunpack.c.h.b16 %v379
        %v550 = vunpack.c.l.b16 %v380
        %v551 = vunpack.c.h.b16 %v380
        %v552 = vunpack.c.l.b16 %v381
        %v553 = vunpack.c.h.b16 %v381
        %v554 = vunpack.c.l.b16 %v382
        %v555 = vunpack.c.h.b16 %v382
        %v556 = vpack.c.b16 %v526, %v524
        %v557 = vpack.c.b16 %v527, %v525
        %v558 = vpack.c.b16 %v530, %v528
        %v559 = vpack.c.b16 %v531, %v529
        %v560 = vpack.c.b16 %v534, %v532
        %v561 = vpack.c.b16 %v535, %v533
        %v562 = vpack.c.b16 %v538, %v536
        %v563 = vpack.c.b16 %v539, %v537
        %v564 = vpack.c.b16 %v542, %v540
        %v565 = vpack.c.b16 %v543, %v541
        %v566 = vpack.c.b16 %v546, %v544
        %v567 = vpack.c.b16 %v547, %v545
        %v568 = vpack.c.b16 %v550, %v548
        %v569 = vpack.c.b16 %v551, %v549
        %v570 = vpack.c.b16 %v554, %v552
        %v571 = vpack.c.b16 %v555, %v553
        %588 = vmatpush.bf16.msra.mxu0 %v570
        %589 = vmatpush.bf16.msra.mxu0 %v568
        %590 = vmatpush.bf16.msra.mxu0 %v566
        %591 = vmatpush.bf16.msra.mxu0 %v564
        %592 = vmatpush.bf16.msra.mxu0 %v562
        %593 = vmatpush.bf16.msra.mxu0 %v560
        %594 = vmatpush.bf16.msra.mxu0 %v558
        %595 = vmatpush.bf16.msra.mxu0 %v556
        %596 = vmatmul.bf16.gmra.mxu0 %v366
        %v597 = vpop.f32.mrf.mxu0
        %v598 = vadd.f32 %v492, %v597
        %v599 = vpop.f32.mrf.mxu0
        %600 = vdwg.mxu0
        %601 = vmatpush.bf16.msra.mxu0 %v571
        %602 = vmatpush.bf16.msra.mxu0 %v569
        %603 = vmatpush.bf16.msra.mxu0 %v567
        %604 = vmatpush.bf16.msra.mxu0 %v565
        %605 = vmatpush.bf16.msra.mxu0 %v563
        %606 = vmatpush.bf16.msra.mxu0 %v561
        %607 = vmatpush.bf16.msra.mxu0 %v559
        %608 = vmatpush.bf16.msra.mxu0 %v557
        %609 = vmatmul.bf16.gmra.mxu0 %v366
        %v610 = vpop.f32.mrf.mxu0
        %v611 = vadd.f32 %v505, %v610
        %v612 = vpop.f32.mrf.mxu0
        %613 = vdwg.mxu0
        %v614 = vld [vmem:[#allocation2 + $0x2] sm:$0xf]
        %v615 = vpack.c.bf16 %v614, %v614
        %s616 = scalar_lea.vmem [#allocation3], 256
        %v617 = vld [vmem:[%s616] sm:$0xff]
        %v618 = vld [vmem:[%s616 + $0x8] sm:$0xff]
        %v619 = vld [vmem:[%s616 + $0x10] sm:$0xff]
        %v620 = vld [vmem:[%s616 + $0x18] sm:$0xff]
        %v621 = vld [vmem:[%s616 + $0x20] sm:$0xff]
        %v622 = vld [vmem:[%s616 + $0x28] sm:$0xff]
        %v623 = vld [vmem:[%s616 + $0x30] sm:$0xff]
        %v624 = vld [vmem:[%s616 + $0x38] sm:$0xff]
        %v625 = vld [vmem:[%s616 + $0x40] sm:$0xff]
        %v626 = vld [vmem:[%s616 + $0x48] sm:$0xff]
        %v627 = vld [vmem:[%s616 + $0x50] sm:$0xff]
        %v628 = vld [vmem:[%s616 + $0x58] sm:$0xff]
        %v629 = vld [vmem:[%s616 + $0x60] sm:$0xff]
        %v630 = vld [vmem:[%s616 + $0x68] sm:$0xff]
        %v631 = vld [vmem:[%s616 + $0x70] sm:$0xff]
        %v632 = vld [vmem:[%s616 + $0x78] sm:$0xff]
        %v649 = vunpack.c.l.b16 %v617
        %v650 = vunpack.c.h.b16 %v617
        %v651 = vunpack.c.l.b16 %v618
        %v652 = vunpack.c.h.b16 %v618
        %v653 = vunpack.c.l.b16 %v619
        %v654 = vunpack.c.h.b16 %v619
        %v655 = vunpack.c.l.b16 %v620
        %v656 = vunpack.c.h.b16 %v620
        %v657 = vunpack.c.l.b16 %v621
        %v658 = vunpack.c.h.b16 %v621
        %v659 = vunpack.c.l.b16 %v622
        %v660 = vunpack.c.h.b16 %v622
        %v661 = vunpack.c.l.b16 %v623
        %v662 = vunpack.c.h.b16 %v623
        %v663 = vunpack.c.l.b16 %v624
        %v664 = vunpack.c.h.b16 %v624
        %v665 = vunpack.c.l.b16 %v625
        %v666 = vunpack.c.h.b16 %v625
        %v667 = vunpack.c.l.b16 %v626
        %v668 = vunpack.c.h.b16 %v626
        %v669 = vunpack.c.l.b16 %v627
        %v670 = vunpack.c.h.b16 %v627
        %v671 = vunpack.c.l.b16 %v628
        %v672 = vunpack.c.h.b16 %v628
        %v673 = vunpack.c.l.b16 %v629
        %v674 = vunpack.c.h.b16 %v629
        %v675 = vunpack.c.l.b16 %v630
        %v676 = vunpack.c.h.b16 %v630
        %v677 = vunpack.c.l.b16 %v631
        %v678 = vunpack.c.h.b16 %v631
        %v679 = vunpack.c.l.b16 %v632
        %v680 = vunpack.c.h.b16 %v632
        %v681 = vpack.c.b16 %v651, %v649
        %v682 = vpack.c.b16 %v652, %v650
        %v683 = vpack.c.b16 %v655, %v653
        %v684 = vpack.c.b16 %v656, %v654
        %v685 = vpack.c.b16 %v659, %v657
        %v686 = vpack.c.b16 %v660, %v658
        %v687 = vpack.c.b16 %v663, %v661
        %v688 = vpack.c.b16 %v664, %v662
        %v689 = vpack.c.b16 %v667, %v665
        %v690 = vpack.c.b16 %v668, %v666
        %v691 = vpack.c.b16 %v671, %v669
        %v692 = vpack.c.b16 %v672, %v670
        %v693 = vpack.c.b16 %v675, %v673
        %v694 = vpack.c.b16 %v676, %v674
        %v695 = vpack.c.b16 %v679, %v677
        %v696 = vpack.c.b16 %v680, %v678
        %713 = vmatpush.bf16.msra.mxu0 %v695
        %714 = vmatpush.bf16.msra.mxu0 %v693
        %715 = vmatpush.bf16.msra.mxu0 %v691
        %716 = vmatpush.bf16.msra.mxu0 %v689
        %717 = vmatpush.bf16.msra.mxu0 %v687
        %718 = vmatpush.bf16.msra.mxu0 %v685
        %719 = vmatpush.bf16.msra.mxu0 %v683
        %720 = vmatpush.bf16.msra.mxu0 %v681
        %721 = vmatmul.bf16.gmra.mxu0 %v615
        %v722 = vpop.f32.mrf.mxu0
        %v723 = vadd.f32 0.0, %v722
        %v724 = vpop.f32.mrf.mxu0
        %725 = vdwg.mxu0
        %726 = vmatpush.bf16.msra.mxu0 %v696
        %727 = vmatpush.bf16.msra.mxu0 %v694
        %728 = vmatpush.bf16.msra.mxu0 %v692
        %729 = vmatpush.bf16.msra.mxu0 %v690
        %730 = vmatpush.bf16.msra.mxu0 %v688
        %731 = vmatpush.bf16.msra.mxu0 %v686
        %732 = vmatpush.bf16.msra.mxu0 %v684
        %733 = vmatpush.bf16.msra.mxu0 %v682
        %734 = vmatmul.bf16.gmra.mxu0 %v615
        %v735 = vpop.f32.mrf.mxu0
        %v736 = vadd.f32 0.0, %v735
        %v737 = vpop.f32.mrf.mxu0
        %738 = vdwg.mxu0
        %v739 = vadd.f32 %v598, %v723
        %v740 = vadd.f32 %v611, %v736
        %v741 = vld [vmem:[%s2] sm:$0x3]
        %v743 = vperm.slane %v741, 0
        %v744 = vperm.slane %v741, 1
        %v747 = vadd.f32 %v739, %v743
        %v748 = vadd.f32 %v740, %v744
        %v749 = vmax.f32 %v747, 0.0
        %v750 = vmax.f32 %v748, 0.0
        %vm751 = vcmask 1043456
        %v752 = vsel %vm751, %v749, 0.0
        %v753 = vrot.slane %v752, 4
        %v754 = vadd.f32 %v752, %v753
        %v755 = vrot.slane %v754, 2
        %v756 = vadd.f32 %v754, %v755
        %v757 = vrot.slane %v756, 1
        %v758 = vadd.f32 %v756, %v757
        %v759 = vsel %vm751, %v750, 0.0
        %v760 = vrot.slane %v759, 4
        %v761 = vadd.f32 %v759, %v760
        %v762 = vrot.slane %v761, 2
        %v763 = vadd.f32 %v761, %v762
        %v764 = vrot.slane %v763, 1
        %v765 = vadd.f32 %v763, %v764
        %v766 = vrcp.pop 4.0
        %v767 = vmul.f32 4.0, %v766
        %v768 = vsub.f32 1.0, %v767
        %v769 = vmul.f32 %v766, %v768
        %v770 = vadd.f32 %v766, %v769
        %vm771 = vweird.f32 %v766
        %v772 = vsel %vm771, %v766, %v770
        %v773 = vmul.f32 %v758, %v772
        %v774 = vmul.f32 %v765, %v772
        %v775 = vld [vmem:[#allocation6] sm:$0xff]
        %v776 = vld [vmem:[#allocation6 + $0x8] sm:$0xff]
        %v777 = vld [vmem:[#allocation6 + $0x10] sm:$0xff]
        %v778 = vld [vmem:[#allocation6 + $0x18] sm:$0xff]
        %v779 = vld [vmem:[#allocation6 + $0x20] sm:$0xff]
        %v780 = vld [vmem:[#allocation6 + $0x28] sm:$0xff]
        %v781 = vld [vmem:[#allocation6 + $0x30] sm:$0xff]
        %v782 = vld [vmem:[#allocation6 + $0x38] sm:$0xff]
        %v783 = vld [vmem:[#allocation6 + $0x40] sm:$0xff]
        %v784 = vld [vmem:[#allocation6 + $0x48] sm:$0xff]
        %v785 = vld [vmem:[#allocation6 + $0x50] sm:$0xff]
        %v786 = vld [vmem:[#allocation6 + $0x58] sm:$0xff]
        %v787 = vld [vmem:[#allocation6 + $0x60] sm:$0xff]
        %v788 = vld [vmem:[#allocation6 + $0x68] sm:$0xff]
        %v789 = vld [vmem:[#allocation6 + $0x70] sm:$0xff]
        %v790 = vld [vmem:[#allocation6 + $0x78] sm:$0xff]
        %v791 = vld [vmem:[#allocation6 + $0x80] sm:$0xff]
        %v792 = vld [vmem:[#allocation6 + $0x88] sm:$0xff]
        %v793 = vld [vmem:[#allocation6 + $0x90] sm:$0xff]
        %v794 = vld [vmem:[#allocation6 + $0x98] sm:$0xff]
        %v795 = vld [vmem:[#allocation6 + $0xa0] sm:$0xff]
        %v796 = vld [vmem:[#allocation6 + $0xa8] sm:$0xff]
        %v797 = vld [vmem:[#allocation6 + $0xb0] sm:$0xff]
        %v798 = vld [vmem:[#allocation6 + $0xb8] sm:$0xff]
        %v799 = vld [vmem:[#allocation6 + $0xc0] sm:$0xff]
        %v800 = vld [vmem:[#allocation6 + $0xc8] sm:$0xff]
        %v801 = vld [vmem:[#allocation6 + $0xd0] sm:$0xff]
        %v802 = vld [vmem:[#allocation6 + $0xd8] sm:$0xff]
        %v803 = vld [vmem:[#allocation6 + $0xe0] sm:$0xff]
        %v804 = vld [vmem:[#allocation6 + $0xe8] sm:$0xff]
        %v805 = vld [vmem:[#allocation6 + $0xf0] sm:$0xff]
        %v806 = vld [vmem:[#allocation6 + $0xf8] sm:$0xff]
        %v807 = vld [vmem:[%s4] sm:$0x1]
        %808 = vmatpush.msra.mxu0 %v790
        %809 = vmatpush.msra.mxu0 %v789
        %810 = vmatpush.msra.mxu0 %v788
        %811 = vmatpush.msra.mxu0 %v787
        %812 = vmatpush.msra.mxu0 %v786
        %813 = vmatpush.msra.mxu0 %v785
        %814 = vmatpush.msra.mxu0 %v784
        %815 = vmatpush.msra.mxu0 %v783
        %816 = vmatpush.msra.mxu0 %v782
        %817 = vmatpush.msra.mxu0 %v781
        %818 = vmatpush.msra.mxu0 %v780
        %819 = vmatpush.msra.mxu0 %v779
        %820 = vmatpush.msra.mxu0 %v778
        %821 = vmatpush.msra.mxu0 %v777
        %822 = vmatpush.msra.mxu0 %v776
        %823 = vmatpush.msra.mxu0 %v775
        %824 = vmatmul.f32.gmra.mxu0 %v773
        %v825 = vpop.f32.mrf.mxu0
        %v826 = vadd.f32 %v807, %v825
        %827 = vdwg.mxu0
        %828 = vmatpush.msra.mxu0 %v806
        %829 = vmatpush.msra.mxu0 %v805
        %830 = vmatpush.msra.mxu0 %v804
        %831 = vmatpush.msra.mxu0 %v803
        %832 = vmatpush.msra.mxu0 %v802
        %833 = vmatpush.msra.mxu0 %v801
        %834 = vmatpush.msra.mxu0 %v800
        %835 = vmatpush.msra.mxu0 %v799
        %836 = vmatpush.msra.mxu0 %v798
        %837 = vmatpush.msra.mxu0 %v797
        %838 = vmatpush.msra.mxu0 %v796
        %839 = vmatpush.msra.mxu0 %v795
        %840 = vmatpush.msra.mxu0 %v794
        %841 = vmatpush.msra.mxu0 %v793
        %842 = vmatpush.msra.mxu0 %v792
        %843 = vmatpush.msra.mxu0 %v791
        %844 = vmatmul.f32.gmra.mxu0 %v774
        %v845 = vpop.f32.mrf.mxu0
        %v846 = vadd.f32 %v826, %v845
        %847 = vdwg.mxu0
        %v848 = vmax.f32 %v846, 0.0
        %v849 = vld [vmem:[%s5] sm:$0xff]
        %v850 = vld [vmem:[%s5 + $0x8] sm:$0xff]
        %v851 = vld [vmem:[%s5 + $0x10] sm:$0xff]
        %v852 = vld [vmem:[%s5 + $0x18] sm:$0xff]
        %v853 = vld [vmem:[%s5 + $0x20] sm:$0xff]
        %v854 = vld [vmem:[%s5 + $0x28] sm:$0xff]
        %v855 = vld [vmem:[%s5 + $0x30] sm:$0xff]
        %v856 = vld [vmem:[%s5 + $0x38] sm:$0xff]
        %v857 = vld [vmem:[%s5 + $0x40] sm:$0xff]
        %v858 = vld [vmem:[%s5 + $0x48] sm:$0xff]
        %v859 = vld [vmem:[%s5 + $0x50] sm:$0xff]
        %v860 = vld [vmem:[%s5 + $0x58] sm:$0xff]
        %v861 = vld [vmem:[%s5 + $0x60] sm:$0xff]
        %v862 = vld [vmem:[%s5 + $0x68] sm:$0xff]
        %v863 = vld [vmem:[%s5 + $0x70] sm:$0xff]
        %v864 = vld [vmem:[%s5 + $0x78] sm:$0xff]
        %v865 = vld [vmem:[%s6] sm:$0x1]
        %866 = vmatpush.msra.mxu0 %v864
        %867 = vmatpush.msra.mxu0 %v863
        %868 = vmatpush.msra.mxu0 %v862
        %869 = vmatpush.msra.mxu0 %v861
        %870 = vmatpush.msra.mxu0 %v860
        %871 = vmatpush.msra.mxu0 %v859
        %872 = vmatpush.msra.mxu0 %v858
        %873 = vmatpush.msra.mxu0 %v857
        %874 = vmatpush.msra.mxu0 %v856
        %875 = vmatpush.msra.mxu0 %v855
        %876 = vmatpush.msra.mxu0 %v854
        %877 = vmatpush.msra.mxu0 %v853
        %878 = vmatpush.msra.mxu0 %v852
        %879 = vmatpush.msra.mxu0 %v851
        %880 = vmatpush.msra.mxu0 %v850
        %881 = vmatpush.msra.mxu0 %v849
        %882 = vmatmul.f32.gmra.mxu0 %v848
        %v883 = vpop.f32.mrf.mxu0
        %v884 = vadd.f32 %v865, %v883
        %885 = vdwg.mxu0
        %v886 = vmax.f32 %v884, 0.0
        %v887 = vld [vmem:[%s7] sm:$0xff]
        %v888 = vld [vmem:[%s7 + $0x8] sm:$0xff]
        %v889 = vld [vmem:[%s7 + $0x10] sm:$0xff]
        %v890 = vld [vmem:[%s7 + $0x18] sm:$0xff]
        %v891 = vld [vmem:[%s7 + $0x20] sm:$0xff]
        %v892 = vld [vmem:[%s7 + $0x28] sm:$0xff]
        %v893 = vld [vmem:[%s7 + $0x30] sm:$0xff]
        %v894 = vld [vmem:[%s7 + $0x38] sm:$0xff]
        %v895 = vld [vmem:[%s8] sm:$0x1]
        %vm896 = vcmask 523264
        %v898 = vsel %vm896, %v886, 0
        %900 = vmatpush.msra.mxu0 0.0
        %901 = vmatpush.msra.mxu0 0.0
        %902 = vmatpush.msra.mxu0 0.0
        %903 = vmatpush.msra.mxu0 0.0
        %904 = vmatpush.msra.mxu0 0.0
        %905 = vmatpush.msra.mxu0 0.0
        %906 = vmatpush.msra.mxu0 0.0
        %907 = vmatpush.msra.mxu0 0.0
        %908 = vmatpush.msra.mxu0 %v894
        %909 = vmatpush.msra.mxu0 %v893
        %910 = vmatpush.msra.mxu0 %v892
        %911 = vmatpush.msra.mxu0 %v891
        %912 = vmatpush.msra.mxu0 %v890
        %913 = vmatpush.msra.mxu0 %v889
        %914 = vmatpush.msra.mxu0 %v888
        %915 = vmatpush.msra.mxu0 %v887
        %916 = vmatmul.f32.gmra.mxu0 %v898
        %v917 = vpop.f32.mrf.mxu0
        %v918 = vadd.f32 %v895, %v917
        %919 = vdwg.mxu0
        %920 = vst [vmem:[%s356] sm:$0x1] %v918
        %s921 = sand.u32 %s227, 1
        %s922 = scalar_lea.sflag [#allocation5], %s921
        %s923 = sand.u32 %s227, 1
        %s924 = scalar_lea.vmem [#allocation8], %s923
        // Predicated region
        $region65: #{artifacts_detection_forward.5} parent=55 // pred_check
          %p925 = pneg %p237
        $region66: #{artifacts_detection_forward.5} parent=55 // pred_check_branch
          %927 = sbr.rel (%p925) target = $region68
        $region67: #{artifacts_detection_forward.5} parent=55 // pred_region
          %929 = vsyncadd %s922, 0
          %s930 = scalar_lea.hbm %s9, %s25
          %s932 = sshll.u32 %s924, 4
          %s933 = int_to_ptr.vmem [resolvable:$true] %s932
          %s934 = sshll.u32 %s930, 4
          %s935 = int_to_ptr.hbm [resolvable:$true] %s934
          %937 = dma.vmem_to_hbm [thread:$0]  %s933, 16, %s935, %s922
        $region68: #{artifacts_detection_forward.5} parent=55 // pred_fallthru
          _
      $region56: #{artifacts_detection_forward.5} parent=5 // pred_fallthru
        _
      %p938 = scmp.le.s32.totalorder 2, %s20
      // Predicated region
      $region69: #{artifacts_detection_forward.5} parent=5 // pred_check
        %p939 = pneg %p938
      $region70: #{artifacts_detection_forward.5} parent=5 // pred_check_branch
        %941 = sbr.rel (%p939) target = $region72
      $region71: #{artifacts_detection_forward.5} parent=5 // pred_region
        %s942 = ssub.s32 %s20, 2
        // Predicated region
        $region73: #{artifacts_detection_forward.5} parent=71 // pred_check
          %p943 = pneg %p243
        $region74: #{artifacts_detection_forward.5} parent=71 // pred_check_branch
          %945 = sbr.rel (%p943) target = $region76
        $region75: #{artifacts_detection_forward.5} parent=71 // pred_region
          %s946 = sand.u32 %s228, 1
          %s947 = scalar_lea.sflag [#allocation5], %s946
          %s948 = sand.u32 %s228, 1
          %s949 = scalar_lea.vmem [#allocation8], %s948
          %951 = dma.done %s947, 16
        $region76: #{artifacts_detection_forward.5} parent=71 // pred_fallthru
          _
      $region72: #{artifacts_detection_forward.5} parent=5 // pred_fallthru
        _
    $region6: #{artifacts_detection_forward.5} parent=1 // loop_footer
      %s24 = sadd.s32 1, %s20
    $region7: #{artifacts_detection_forward.5} parent=1 // loop_footer_branch
      %19 = sbr.rel target = $region3
    $region8: #{artifacts_detection_forward.5} parent=1 // loop_exit
      _
    %952 = vsyncpa [#allocation4], 1
    %s953 = scalar_lea.sflag [#allocation4], 1
    %954 = vsyncpa %s953, 1
    %955 = vsyncpa [#allocation7], 1
    %956 = vsyncpa [#allocation5], 1
    %s957 = scalar_lea.sflag [#allocation5], 1
    %958 = vsyncpa %s957, 1

</llo_original>
